<compile_context>
chip_gen: v7x
topology: tpu7x:2x2x1
jax: 0.10.0
libtpu: 0.0.40
codegen_flags: <defaults>
</compile_context>

<pallas_src>
import functools

import jax
import jax.numpy as jnp
from jax.experimental import pallas as pl
from jax.experimental.pallas import tpu as pltpu


# ----------------------------------------------------------------------------
# Fused Pallas kernel (one grid step == one batch element)
# ----------------------------------------------------------------------------
def fused_cspa_kernel(x_ref,
                      cv_w_ref, cv_s_ref, cv_b_ref,
                      sa_w_ref, sa_b_ref,
                      ca_w1_ref, ca_w2_ref, ca_b2_ref,
                      o_ref,
                      tpad_ref, patch_ref,
                      *, H, W, C, num_scales, pad):
    HW = H * W
    f32 = jnp.float32
    bf16 = jnp.bfloat16

    # --- fused cv1|cv2: 1x1 conv (channel matmul) + folded BN + SiLU ---------
    x_bf = x_ref[...].astype(bf16)                                   # (C, HW)
    z = jnp.dot(cv_w_ref[...], x_bf, preferred_element_type=f32)     # (2C, HW)
    z = z * cv_s_ref[...] + cv_b_ref[...]
    z = z * jax.nn.sigmoid(z)                                        # SiLU
    y1 = z[:C]                                                       # (C, HW)
    o_ref[...] = z[C:]            # y2 -> output now (less live state in loop)

    # --- channel attention: one MLP pass over the stacked avg|max pools ------
    avg = jnp.mean(y1, axis=1, keepdims=True)                        # (C, 1)
    mx = jnp.max(y1, axis=1, keepdims=True)                          # (C, 1)
    lane = jax.lax.broadcasted_iota(jnp.int32, (C, 2), 1)
    pools = jnp.where(lane == 0, avg, mx).astype(bf16)               # (C, 2)
    hid = jnp.maximum(
        jnp.dot(ca_w1_ref[...], pools, preferred_element_type=f32), 0.0)
    co = jnp.dot(ca_w2_ref[...], hid.astype(bf16),
                 preferred_element_type=f32) + ca_b2_ref[...]        # (C, 2)
    # fc2 bias is counted once per branch (avg and max), exactly like PyTorch.
    ch = jax.nn.sigmoid(jnp.sum(co, axis=1, keepdims=True))          # (C, 1)

    # --- spatial multi-scale attention ----------------------------------------
    # tpad_ref is a flat zero-padded copy of temp: [ 0..0 | temp(C,HW) | 0..0 ].
    # The tap (kh, kw) at dilation d is a lane-offset read at pad + dh*W + dw;
    # rows that leave the image vertically land in the zero pads, horizontal
    # overruns (row wrap) are zeroed with a column-validity mask.  Only the two
    # pad strips are cleared (the interior is fully rewritten every scale).
    tpad_ref[:, :pad] = jnp.zeros((C, pad), f32)
    tpad_ref[:, pad + HW:] = jnp.zeros((C, pad), f32)

    col = jax.lax.broadcasted_iota(jnp.int32, (C, HW), 1) % W        # column id

    att = jnp.zeros((C, HW), f32)
    temp = y1
    for i in range(num_scales):
        d = i + 1
        tpad_ref[:, pad:pad + HW] = temp                   # lane-aligned store
        # Build the (9C, HW) tap-stacked patch matrix (taps folded into K).
        for kh in range(3):
            for kw in range(3):
                dh, dw = (kh - 1) * d, (kw - 1) * d
                start = pad + dh * W + dw                  # static python int
                tap = tpad_ref[:, start:start + HW]        # (C, HW)
                if dw != 0:
                    valid = jnp.logical_and(col + dw >= 0, col + dw < W)
                    tap = jnp.where(valid, tap, 0.0)
                t = kh * 3 + kw
                patch_ref[t * C:(t + 1) * C, :] = tap.astype(bf16)
        # One MXU matmul per scale: M=C, K=9C, N=HW (bf16 operands, f32 acc).
        a = jnp.dot(sa_w_ref[i], patch_ref[...],
                    preferred_element_type=f32) + sa_b_ref[i]        # (C, HW)
        att = att + jax.nn.sigmoid(a)
        temp = a                                    # chained pre-sigmoid value

    # --- fused combine: out = y1*att + y1*ch + y2 -----------------------------
    o_ref[...] = o_ref[...] + y1 * (att + ch)


# ----------------------------------------------------------------------------
# Wrapper (no transposes: NCHW is kept, only free reshapes around the call)
# ----------------------------------------------------------------------------
def multiscale_attention_cspa_forward(x_nchw, params, num_scales):
    B, C, H, W = x_nchw.shape
    HW = H * W
    CM = params["ca_w1"].shape[0]
    # Largest |tap offset| is num_scales*(W+1); round the halo up to a lane
    # multiple so the interior store of the padded scratch stays lane-aligned.
    pad = max(128, ((num_scales * (W + 1) + 127) // 128) * 128)

    x = x_nchw.reshape(B, C, HW).astype(jnp.float32)       # free reshape only

    kern = functools.partial(fused_cspa_kernel, H=H, W=W, C=C,
                             num_scales=num_scales, pad=pad)
    w2 = lambda b: (0, 0)
    w3 = lambda b: (0, 0, 0)

    # Per-step VMEM working set (x/out double-buffered blocks, the two scratch
    # buffers, weights x2, plus f32 temporaries) with headroom, capped < 64 MiB.
    est_vmem = (4 * C * HW * 4
                + C * (2 * pad + HW) * 4
                + 9 * C * HW * 2
                + 2 * (2 * C * C + num_scales * 9 * C * C + 2 * C * CM) * 2
                + 10 * C * HW * 4)
    vmem_limit = int(min(48 * 1024 * 1024, max(16 * 1024 * 1024, 4 * est_vmem)))

    out = pl.pallas_call(
        kern,
        out_shape=jax.ShapeDtypeStruct((B, C, HW), jnp.float32),
        grid=(B,),
        in_specs=[
            pl.BlockSpec((None, C, HW), lambda b: (b, 0, 0)),       # x
            pl.BlockSpec((2 * C, C), w2),                           # cv1|cv2 w (bf16)
            pl.BlockSpec((2 * C, 1), w2),                           # folded BN scale
            pl.BlockSpec((2 * C, 1), w2),                           # folded BN bias
            pl.BlockSpec((num_scales, C, 9 * C), w3),               # sa w, taps in K (bf16)
            pl.BlockSpec((num_scales, C, 1), w3),                   # sa bias
            pl.BlockSpec((CM, C), w2),                              # ca fc1 (bf16)
            pl.BlockSpec((C, CM), w2),                              # ca fc2 (bf16)
            pl.BlockSpec((C, 1), w2),                               # ca fc2 bias
        ],
        out_specs=pl.BlockSpec((None, C, HW), lambda b: (b, 0, 0)),
        scratch_shapes=[
            pltpu.VMEM((C, 2 * pad + HW), jnp.float32),   # flat zero-padded temp
            pltpu.VMEM((9 * C, HW), jnp.bfloat16),        # tap-stacked patch (K=9C)
        ],
        compiler_params=pltpu.CompilerParams(
            dimension_semantics=("parallel",),
            vmem_limit_bytes=vmem_limit),
    )(x,
      params["cv_w"], params["cv_scale"], params["cv_bias"],
      params["sa_w"], params["sa_b"],
      params["ca_w1"], params["ca_w2"], params["ca_b2"])

    return out.reshape(B, C, H, W)


# ----------------------------------------------------------------------------
# Parameter preparation (glue)
# ----------------------------------------------------------------------------
def grouped_conv_to_dense_k(wt, g):
    """(Cout, Cin/g, 3, 3) grouped-conv weight -> (Cout, 9*Cin) dense weight with
    the 3x3 taps folded into the contraction dim: column (kh*3+kw)*Cin + ci."""
    Cout, Cpg, K, _ = wt.shape
    Cin, Copg = Cpg * g, Cout // g
    dense = jnp.zeros((Cout, K * K, Cin), wt.dtype)
    for gi in range(g):
        blk = wt[gi * Copg:(gi + 1) * Copg]                      # (Copg, Cpg, 3, 3)
        blk = jnp.transpose(blk, (0, 2, 3, 1)).reshape(Copg, K * K, Cpg)
        dense = dense.at[gi * Copg:(gi + 1) * Copg, :,
                         gi * Cpg:(gi + 1) * Cpg].set(blk)
    return dense.reshape(Cout, K * K * Cin)


# ----------------------------------------------------------------------------
# Pure-JAX reference (correctness check, f32 highest precision)
# ----------------------------------------------------------------------------
def reference_forward(x, ref):
    P = jax.lax.Precision.HIGHEST

    def conv1x1_bn_silu(w, s, b):
        z = jnp.einsum("bchw,oc->bohw", x, w, precision=P)
        z = z * s[None, :, None, None] + b[None, :, None, None]
        return z * jax.nn.sigmoid(z)

    y1 = conv1x1_bn_silu(ref["cv1_w"], ref["cv1_scale"], ref["cv1_bias"])
    y2 = conv1x1_bn_silu(ref["cv2_w"], ref["cv2_scale"], ref["cv2_bias"])

    temp, att = y1, jnp.zeros_like(y1)
    for i in range(ref["num_scales"]):
        d = i + 1
        a = jax.lax.conv_general_dilated(
            temp, ref["sa_w_torch"][i], window_strides=(1, 1),
            padding=[(d, d), (d, d)], rhs_dilation=(d, d),
            dimension_numbers=("NCHW", "OIHW", "NCHW"),
            feature_group_count=ref["groups"][i], precision=P)
        a = a + ref["sa_b_vec"][i][None, :, None, None]
        att = att + jax.nn.sigmoid(a)
        temp = a

    avg = jnp.mean(y1, axis=(2, 3))
    mx = jnp.max(y1, axis=(2, 3))

    def mlp(v):
        h = jnp.maximum(jnp.dot(v, ref["ca_w1"].T, precision=P), 0.0)
        return jnp.dot(h, ref["ca_w2"].T, precision=P) + ref["ca_b2"][None, :]

    ch = jax.nn.sigmoid(mlp(avg) + mlp(mx))[:, :, None, None]
    return y1 * att + y1 * ch + y2


# ----------------------------------------------------------------------------
if __name__ == "__main__":
    B, C, H, W = 2, 32, 16, 16           # C must be divisible by 16 (groups / MLP)
    NUM_SCALES = 3
    GROUPS = [4, 8, 16]
    CM = C // 16
    EPS = 1e-5

    key = jax.random.PRNGKey(0)
    ks = jax.random.split(key, 32)

    def folded_bn(k0):
        gamma = 1.0 + 0.1 * jax.random.normal(ks[k0], (C,))
        beta = 0.1 * jax.random.normal(ks[k0 + 1], (C,))
        mean = 0.1 * jax.random.normal(ks[k0 + 2], (C,))
        var = 1.0 + 0.1 * jnp.abs(jax.random.normal(ks[k0 + 3], (C,)))
        scale = gamma / jnp.sqrt(var + EPS)
        return scale, beta - mean * scale

    # cv1 / cv2: Conv2d(C, C, 1, bias=False) + BatchNorm2d (eval, folded) + SiLU
    cv1_w = 0.1 * jax.random.normal(ks[0], (C, C))           # (Cout, Cin)
    cv1_scale, cv1_bias = folded_bn(1)
    cv2_w = 0.1 * jax.random.normal(ks[5], (C, C))
    cv2_scale, cv2_bias = folded_bn(6)

    # SpatialMultiScaleAttention: grouped dilated 3x3 convs (with bias)
    sa_w_torch, sa_w_dense, sa_b = [], [], []
    for i in range(NUM_SCALES):
        g = GROUPS[i]
        wt = 0.05 * jax.random.normal(ks[10 + i], (C, C // g, 3, 3))
        sa_w_torch.append(wt)
        sa_w_dense.append(grouped_conv_to_dense_k(wt, g))     # (C, 9C)
        sa_b.append(0.05 * jax.random.normal(ks[13 + i], (C,)))

    # ChannelAttentionModified: Linear(C, C//16, no bias) -> ReLU -> Linear(C//16, C)
    ca_w1 = 0.2 * jax.random.normal(ks[20], (CM, C))          # (CM, C)
    ca_w2 = 0.2 * jax.random.normal(ks[21], (C, CM))          # (C, CM)
    ca_b2 = 0.05 * jax.random.normal(ks[22], (C,))

    params = dict(
        cv_w=jnp.concatenate([cv1_w, cv2_w], 0).astype(jnp.bfloat16),   # (2C, C)
        cv_scale=jnp.concatenate([cv1_scale, cv2_scale]).reshape(2 * C, 1),
        cv_bias=jnp.concatenate([cv1_bias, cv2_bias]).reshape(2 * C, 1),
        sa_w=jnp.stack(sa_w_dense).astype(jnp.bfloat16),                # (NS, C, 9C)
        sa_b=jnp.stack(sa_b).reshape(NUM_SCALES, C, 1),
        ca_w1=ca_w1.astype(jnp.bfloat16),
        ca_w2=ca_w2.astype(jnp.bfloat16),
        ca_b2=ca_b2.reshape(C, 1),
    )

    x = jax.random.normal(ks[30], (B, C, H, W), dtype=jnp.float32)

    fwd = jax.jit(functools.partial(multiscale_attention_cspa_forward,
                                    num_scales=NUM_SCALES))
    out = jax.block_until_ready(fwd(x, params))

    ref = dict(cv1_w=cv1_w, cv1_scale=cv1_scale, cv1_bias=cv1_bias,
               cv2_w=cv2_w, cv2_scale=cv2_scale, cv2_bias=cv2_bias,
               sa_w_torch=sa_w_torch, sa_b_vec=sa_b, groups=GROUPS,
               num_scales=NUM_SCALES, ca_w1=ca_w1, ca_w2=ca_w2, ca_b2=ca_b2)
    expected = reference_forward(x, ref)

    err = float(jnp.max(jnp.abs(out - expected)))
    assert out.shape == (B, C, H, W), out.shape
    # bf16 matmul operands (f32 accumulation) => looser tolerance than pure f32.
    assert err < 5e-2, f"max abs diff vs reference too large: {err}"
    print("KERNEL_OK")
</pallas_src>

<mosaic_0001>
module attributes {stable_mosaic.version = 11 : i64} {
  func.func @fused_cspa_kernel(%arg0: i32, %arg1: memref<1x32x256xf32, #tpu.memory_space<vmem>>, %arg2: memref<64x32xbf16, #tpu.memory_space<vmem>>, %arg3: memref<64x1xf32, #tpu.memory_space<vmem>>, %arg4: memref<64x1xf32, #tpu.memory_space<vmem>>, %arg5: memref<3x32x288xbf16, #tpu.memory_space<vmem>>, %arg6: memref<3x32x1xf32, #tpu.memory_space<vmem>>, %arg7: memref<2x32xbf16, #tpu.memory_space<vmem>>, %arg8: memref<32x2xbf16, #tpu.memory_space<vmem>>, %arg9: memref<32x1xf32, #tpu.memory_space<vmem>>, %arg10: memref<1x32x256xf32, #tpu.memory_space<vmem>>, %arg11: memref<32x512xf32, #tpu.memory_space<vmem>>, %arg12: memref<288x256xbf16, #tpu.memory_space<vmem>>) attributes {dimension_semantics = [#tpu.dimension_semantics<parallel>], iteration_bounds = array<i64: 2>, scalar_prefetch = 0 : i64, scratch_operands = 2 : i64, tpu.core_type = #tpu.core_type<tc>, window_params = [{transform_indices = @transform_0, window_bounds = array<i64: 1, 32, 256>}, {pipeline_mode = #tpu.pipeline_mode<synchronous>, transform_indices = @transform_1, window_bounds = array<i64: 64, 32>}, {pipeline_mode = #tpu.pipeline_mode<synchronous>, transform_indices = @transform_2, window_bounds = array<i64: 64, 1>}, {pipeline_mode = #tpu.pipeline_mode<synchronous>, transform_indices = @transform_3, window_bounds = array<i64: 64, 1>}, {pipeline_mode = #tpu.pipeline_mode<synchronous>, transform_indices = @transform_4, window_bounds = array<i64: 3, 32, 288>}, {pipeline_mode = #tpu.pipeline_mode<synchronous>, transform_indices = @transform_5, window_bounds = array<i64: 3, 32, 1>}, {pipeline_mode = #tpu.pipeline_mode<synchronous>, transform_indices = @transform_6, window_bounds = array<i64: 2, 32>}, {pipeline_mode = #tpu.pipeline_mode<synchronous>, transform_indices = @transform_7, window_bounds = array<i64: 32, 2>}, {pipeline_mode = #tpu.pipeline_mode<synchronous>, transform_indices = @transform_8, window_bounds = array<i64: 32, 1>}, {transform_indices = @transform_9, window_bounds = array<i64: 1, 32, 256>}]} {
    %c0 = arith.constant 0 : index
    %c0_0 = arith.constant 0 : index
    %c0_1 = arith.constant 0 : index
    %0 = vector.load %arg1[%c0, %c0_0, %c0_1] : memref<1x32x256xf32, #tpu.memory_space<vmem>>, vector<1x32x256xf32>
    %1 = vector.shape_cast %0 : vector<1x32x256xf32> to vector<32x256xf32>
    %2 = arith.truncf %1 : vector<32x256xf32> to vector<32x256xbf16>
    %c0_2 = arith.constant 0 : index
    %c0_3 = arith.constant 0 : index
    %3 = vector.load %arg2[%c0_2, %c0_3] : memref<64x32xbf16, #tpu.memory_space<vmem>>, vector<64x32xbf16>
    %cst = arith.constant dense<0.000000e+00> : vector<64x256xf32>
    %4 = tpu.matmul %3, %2, %cst {dimension_numbers = #tpu.dot_dimension_numbers<[1], [0], [0], [1], [0, 0, 1, 1], [], []>} : vector<64x32xbf16>, vector<32x256xbf16>, vector<64x256xf32> -> vector<64x256xf32>
    %c0_4 = arith.constant 0 : index
    %c0_5 = arith.constant 0 : index
    %5 = vector.load %arg3[%c0_4, %c0_5] : memref<64x1xf32, #tpu.memory_space<vmem>>, vector<64x1xf32>
    %6 = vector.broadcast %5 : vector<64x1xf32> to vector<64x256xf32>
    %7 = arith.mulf %4, %6 : vector<64x256xf32>
    %c0_6 = arith.constant 0 : index
    %c0_7 = arith.constant 0 : index
    %8 = vector.load %arg4[%c0_6, %c0_7] : memref<64x1xf32, #tpu.memory_space<vmem>>, vector<64x1xf32>
    %9 = vector.broadcast %8 : vector<64x1xf32> to vector<64x256xf32>
    %10 = arith.addf %7, %9 : vector<64x256xf32>
    %11 = arith.negf %10 : vector<64x256xf32>
    %12 = math.exp %11 : vector<64x256xf32>
    %cst_8 = arith.constant 1.000000e+00 : f32
    %13 = vector.broadcast %cst_8 : f32 to vector<64x256xf32>
    %14 = arith.addf %13, %12 : vector<64x256xf32>
    %15 = arith.divf %13, %14 : vector<64x256xf32>
    %16 = arith.mulf %10, %15 : vector<64x256xf32>
    %17 = vector.extract_strided_slice %16 {offsets = [0, 0], sizes = [32, 256], strides = [1, 1]} : vector<64x256xf32> to vector<32x256xf32>
    %18 = vector.extract_strided_slice %16 {offsets = [32, 0], sizes = [32, 256], strides = [1, 1]} : vector<64x256xf32> to vector<32x256xf32>
    %c0_9 = arith.constant 0 : index
    %c0_10 = arith.constant 0 : index
    %c0_11 = arith.constant 0 : index
    %19 = vector.load %arg10[%c0_9, %c0_10, %c0_11] : memref<1x32x256xf32, #tpu.memory_space<vmem>>, vector<1x32x256xf32>
    %20 = vector.shape_cast %19 : vector<1x32x256xf32> to vector<32x256xf32>
    %21 = vector.shape_cast %18 : vector<32x256xf32> to vector<1x32x256xf32>
    tpu.vector_store %arg10[%c0_9, %c0_10, %c0_11], %21 {strides = array<i32>} : memref<1x32x256xf32, #tpu.memory_space<vmem>>, vector<1x32x256xf32>,
    %cst_12 = arith.constant dense<0.000000e+00> : vector<32xf32>
    %22 = vector.multi_reduction <add>, %17, %cst_12 [1] : vector<32x256xf32> to vector<32xf32>
    %23 = vector.shape_cast %22 : vector<32xf32> to vector<32x1xf32>
    %cst_13 = arith.constant 2.560000e+02 : f32
    %24 = vector.broadcast %cst_13 : f32 to vector<32x1xf32>
    %25 = arith.divf %23, %24 : vector<32x1xf32>
    %cst_14 = arith.constant dense<0xFF800000> : vector<32xf32>
    %26 = vector.multi_reduction <maximumf>, %17, %cst_14 [1] : vector<32x256xf32> to vector<32xf32>
    %27 = vector.shape_cast %26 : vector<32xf32> to vector<32x1xf32>
    %28 = tpu.iota {dimensions = array<i32: 1>} : vector<32x2xi32>
    %c0_i32 = arith.constant 0 : i32
    %29 = vector.broadcast %c0_i32 : i32 to vector<32x2xi32>
    %30 = arith.cmpi eq, %28, %29 : vector<32x2xi32>
    %31 = vector.shape_cast %25 : vector<32x1xf32> to vector<32x1xf32>
    %32 = vector.broadcast %31 : vector<32x1xf32> to vector<32x2xf32>
    %33 = vector.shape_cast %27 : vector<32x1xf32> to vector<32x1xf32>
    %34 = vector.broadcast %33 : vector<32x1xf32> to vector<32x2xf32>
    %35 = arith.select %30, %32, %34 : vector<32x2xi1>, vector<32x2xf32>
    %36 = arith.truncf %35 : vector<32x2xf32> to vector<32x2xbf16>
    %c0_15 = arith.constant 0 : index
    %c0_16 = arith.constant 0 : index
    %37 = vector.load %arg7[%c0_15, %c0_16] : memref<2x32xbf16, #tpu.memory_space<vmem>>, vector<2x32xbf16>
    %cst_17 = arith.constant dense<0.000000e+00> : vector<2x2xf32>
    %38 = tpu.matmul %37, %36, %cst_17 {dimension_numbers = #tpu.dot_dimension_numbers<[1], [0], [0], [1], [0, 0, 1, 1], [], []>} : vector<2x32xbf16>, vector<32x2xbf16>, vector<2x2xf32> -> vector<2x2xf32>
    %cst_18 = arith.constant 0.000000e+00 : f32
    %39 = vector.broadcast %cst_18 : f32 to vector<2x2xf32>
    %40 = arith.maximumf %38, %39 : vector<2x2xf32>
    %c0_19 = arith.constant 0 : index
    %c0_20 = arith.constant 0 : index
    %41 = vector.load %arg8[%c0_19, %c0_20] : memref<32x2xbf16, #tpu.memory_space<vmem>>, vector<32x2xbf16>
    %42 = arith.truncf %40 : vector<2x2xf32> to vector<2x2xbf16>
    %cst_21 = arith.constant dense<0.000000e+00> : vector<32x2xf32>
    %43 = tpu.matmul %41, %42, %cst_21 {dimension_numbers = #tpu.dot_dimension_numbers<[1], [0], [0], [1], [0, 0, 1, 1], [], []>} : vector<32x2xbf16>, vector<2x2xbf16>, vector<32x2xf32> -> vector<32x2xf32>
    %c0_22 = arith.constant 0 : index
    %c0_23 = arith.constant 0 : index
    %44 = vector.load %arg9[%c0_22, %c0_23] : memref<32x1xf32, #tpu.memory_space<vmem>>, vector<32x1xf32>
    %45 = vector.broadcast %44 : vector<32x1xf32> to vector<32x2xf32>
    %46 = arith.addf %43, %45 : vector<32x2xf32>
    %cst_24 = arith.constant dense<0.000000e+00> : vector<32xf32>
    %47 = vector.multi_reduction <add>, %46, %cst_24 [1] : vector<32x2xf32> to vector<32xf32>
    %48 = vector.shape_cast %47 : vector<32xf32> to vector<32x1xf32>
    %49 = arith.negf %48 : vector<32x1xf32>
    %50 = math.exp %49 : vector<32x1xf32>
    %cst_25 = arith.constant 1.000000e+00 : f32
    %51 = vector.broadcast %cst_25 : f32 to vector<32x1xf32>
    %52 = arith.addf %51, %50 : vector<32x1xf32>
    %53 = arith.divf %51, %52 : vector<32x1xf32>
    %cst_26 = arith.constant 0.000000e+00 : f32
    %54 = vector.broadcast %cst_26 : f32 to vector<32x128xf32>
    %c0_27 = arith.constant 0 : index
    %c0_28 = arith.constant 0 : index
    %55 = vector.load %arg11[%c0_27, %c0_28] : memref<32x512xf32, #tpu.memory_space<vmem>>, vector<32x128xf32>
    tpu.vector_store %arg11[%c0_27, %c0_28], %54 {strides = array<i32>} : memref<32x512xf32, #tpu.memory_space<vmem>>, vector<32x128xf32>,
    %cst_29 = arith.constant 0.000000e+00 : f32
    %56 = vector.broadcast %cst_29 : f32 to vector<32x128xf32>
    %c0_30 = arith.constant 0 : index
    %c384 = arith.constant 384 : index
    %57 = vector.load %arg11[%c0_30, %c384] : memref<32x512xf32, #tpu.memory_space<vmem>>, vector<32x128xf32>
    tpu.vector_store %arg11[%c0_30, %c384], %56 {strides = array<i32>} : memref<32x512xf32, #tpu.memory_space<vmem>>, vector<32x128xf32>,
    %58 = tpu.iota {dimensions = array<i32: 1>} : vector<32x256xi32>
    %c16_i32 = arith.constant 16 : i32
    %c0_i32_31 = arith.constant 0 : i32
    %59 = arith.cmpi eq, %c16_i32, %c0_i32_31 : i32
    %c1_i32 = arith.constant 1 : i32
    %60 = arith.select %59, %c1_i32, %c16_i32 : i32
    %61 = vector.broadcast %60 : i32 to vector<32x256xi32>
    %62 = arith.remsi %58, %61 : vector<32x256xi32>
    %c0_i32_32 = arith.constant 0 : i32
    %63 = vector.broadcast %c0_i32_32 : i32 to vector<32x256xi32>
    %64 = arith.cmpi ne, %62, %63 : vector<32x256xi32>
    %c0_i32_33 = arith.constant 0 : i32
    %65 = vector.broadcast %c0_i32_33 : i32 to vector<32x256xi32>
    %66 = arith.cmpi slt, %62, %65 : vector<32x256xi32>
    %c0_i32_34 = arith.constant 0 : i32
    %67 = arith.cmpi slt, %60, %c0_i32_34 : i32
    %68 = vector.broadcast %67 : i1 to vector<32x256xi1>
    %69 = vector.broadcast %68 : vector<32x256xi1> to vector<32x256xi1>
    %70 = arith.xori %66, %69 : vector<32x256xi1>
    %71 = arith.andi %70, %64 : vector<32x256xi1>
    %72 = vector.broadcast %60 : i32 to vector<32x256xi32>
    %73 = arith.addi %62, %72 : vector<32x256xi32>
    %74 = arith.select %71, %73, %62 : vector<32x256xi1>, vector<32x256xi32>
    %cst_35 = arith.constant 0.000000e+00 : f32
    %75 = vector.broadcast %cst_35 : f32 to vector<32x256xf32>
    %c0_36 = arith.constant 0 : index
    %c128 = arith.constant 128 : index
    %76 = vector.load %arg11[%c0_36, %c128] : memref<32x512xf32, #tpu.memory_space<vmem>>, vector<32x256xf32>
    tpu.vector_store %arg11[%c0_36, %c128], %17 {strides = array<i32>} : memref<32x512xf32, #tpu.memory_space<vmem>>, vector<32x256xf32>,
    %c0_37 = arith.constant 0 : index
    %c111 = arith.constant 111 : index
    %77 = vector.load %arg11[%c0_37, %c111] : memref<32x512xf32, #tpu.memory_space<vmem>>, vector<32x256xf32>
    %c-1_i32 = arith.constant -1 : i32
    %78 = vector.broadcast %c-1_i32 : i32 to vector<32x256xi32>
    %79 = arith.addi %74, %78 : vector<32x256xi32>
    %c0_i32_38 = arith.constant 0 : i32
    %80 = vector.broadcast %c0_i32_38 : i32 to vector<32x256xi32>
    %81 = arith.cmpi sge, %79, %80 : vector<32x256xi32>
    %c-1_i32_39 = arith.constant -1 : i32
    %82 = vector.broadcast %c-1_i32_39 : i32 to vector<32x256xi32>
    %83 = arith.addi %74, %82 : vector<32x256xi32>
    %c16_i32_40 = arith.constant 16 : i32
    %84 = vector.broadcast %c16_i32_40 : i32 to vector<32x256xi32>
    %85 = arith.cmpi slt, %83, %84 : vector<32x256xi32>
    %86 = arith.andi %81, %85 : vector<32x256xi1>
    %cst_41 = arith.constant 0.000000e+00 : f32
    %87 = vector.broadcast %cst_41 : f32 to vector<32x256xf32>
    %88 = arith.select %86, %77, %87 : vector<32x256xi1>, vector<32x256xf32>
    %89 = arith.truncf %88 : vector<32x256xf32> to vector<32x256xbf16>
    %c0_42 = arith.constant 0 : index
    %c0_43 = arith.constant 0 : index
    %90 = vector.load %arg12[%c0_42, %c0_43] : memref<288x256xbf16, #tpu.memory_space<vmem>>, vector<32x256xbf16>
    tpu.vector_store %arg12[%c0_42, %c0_43], %89 {strides = array<i32>} : memref<288x256xbf16, #tpu.memory_space<vmem>>, vector<32x256xbf16>,
    %c0_44 = arith.constant 0 : index
    %c112 = arith.constant 112 : index
    %91 = vector.load %arg11[%c0_44, %c112] : memref<32x512xf32, #tpu.memory_space<vmem>>, vector<32x256xf32>
    %92 = arith.truncf %91 : vector<32x256xf32> to vector<32x256xbf16>
    %c32 = arith.constant 32 : index
    %c0_45 = arith.constant 0 : index
    %93 = vector.load %arg12[%c32, %c0_45] : memref<288x256xbf16, #tpu.memory_space<vmem>>, vector<32x256xbf16>
    tpu.vector_store %arg12[%c32, %c0_45], %92 {strides = array<i32>} : memref<288x256xbf16, #tpu.memory_space<vmem>>, vector<32x256xbf16>,
    %c0_46 = arith.constant 0 : index
    %c113 = arith.constant 113 : index
    %94 = vector.load %arg11[%c0_46, %c113] : memref<32x512xf32, #tpu.memory_space<vmem>>, vector<32x256xf32>
    %c1_i32_47 = arith.constant 1 : i32
    %95 = vector.broadcast %c1_i32_47 : i32 to vector<32x256xi32>
    %96 = arith.addi %74, %95 : vector<32x256xi32>
    %c0_i32_48 = arith.constant 0 : i32
    %97 = vector.broadcast %c0_i32_48 : i32 to vector<32x256xi32>
    %98 = arith.cmpi sge, %96, %97 : vector<32x256xi32>
    %c1_i32_49 = arith.constant 1 : i32
    %99 = vector.broadcast %c1_i32_49 : i32 to vector<32x256xi32>
    %100 = arith.addi %74, %99 : vector<32x256xi32>
    %c16_i32_50 = arith.constant 16 : i32
    %101 = vector.broadcast %c16_i32_50 : i32 to vector<32x256xi32>
    %102 = arith.cmpi slt, %100, %101 : vector<32x256xi32>
    %103 = arith.andi %98, %102 : vector<32x256xi1>
    %cst_51 = arith.constant 0.000000e+00 : f32
    %104 = vector.broadcast %cst_51 : f32 to vector<32x256xf32>
    %105 = arith.select %103, %94, %104 : vector<32x256xi1>, vector<32x256xf32>
    %106 = arith.truncf %105 : vector<32x256xf32> to vector<32x256xbf16>
    %c64 = arith.constant 64 : index
    %c0_52 = arith.constant 0 : index
    %107 = vector.load %arg12[%c64, %c0_52] : memref<288x256xbf16, #tpu.memory_space<vmem>>, vector<32x256xbf16>
    tpu.vector_store %arg12[%c64, %c0_52], %106 {strides = array<i32>} : memref<288x256xbf16, #tpu.memory_space<vmem>>, vector<32x256xbf16>,
    %c0_53 = arith.constant 0 : index
    %c127 = arith.constant 127 : index
    %108 = vector.load %arg11[%c0_53, %c127] : memref<32x512xf32, #tpu.memory_space<vmem>>, vector<32x256xf32>
    %c-1_i32_54 = arith.constant -1 : i32
    %109 = vector.broadcast %c-1_i32_54 : i32 to vector<32x256xi32>
    %110 = arith.addi %74, %109 : vector<32x256xi32>
    %c0_i32_55 = arith.constant 0 : i32
    %111 = vector.broadcast %c0_i32_55 : i32 to vector<32x256xi32>
    %112 = arith.cmpi sge, %110, %111 : vector<32x256xi32>
    %c-1_i32_56 = arith.constant -1 : i32
    %113 = vector.broadcast %c-1_i32_56 : i32 to vector<32x256xi32>
    %114 = arith.addi %74, %113 : vector<32x256xi32>
    %c16_i32_57 = arith.constant 16 : i32
    %115 = vector.broadcast %c16_i32_57 : i32 to vector<32x256xi32>
    %116 = arith.cmpi slt, %114, %115 : vector<32x256xi32>
    %117 = arith.andi %112, %116 : vector<32x256xi1>
    %cst_58 = arith.constant 0.000000e+00 : f32
    %118 = vector.broadcast %cst_58 : f32 to vector<32x256xf32>
    %119 = arith.select %117, %108, %118 : vector<32x256xi1>, vector<32x256xf32>
    %120 = arith.truncf %119 : vector<32x256xf32> to vector<32x256xbf16>
    %c96 = arith.constant 96 : index
    %c0_59 = arith.constant 0 : index
    %121 = vector.load %arg12[%c96, %c0_59] : memref<288x256xbf16, #tpu.memory_space<vmem>>, vector<32x256xbf16>
    tpu.vector_store %arg12[%c96, %c0_59], %120 {strides = array<i32>} : memref<288x256xbf16, #tpu.memory_space<vmem>>, vector<32x256xbf16>,
    %c0_60 = arith.constant 0 : index
    %c128_61 = arith.constant 128 : index
    %122 = vector.load %arg11[%c0_60, %c128_61] : memref<32x512xf32, #tpu.memory_space<vmem>>, vector<32x256xf32>
    %123 = arith.truncf %122 : vector<32x256xf32> to vector<32x256xbf16>
    %c128_62 = arith.constant 128 : index
    %c0_63 = arith.constant 0 : index
    %124 = vector.load %arg12[%c128_62, %c0_63] : memref<288x256xbf16, #tpu.memory_space<vmem>>, vector<32x256xbf16>
    tpu.vector_store %arg12[%c128_62, %c0_63], %123 {strides = array<i32>} : memref<288x256xbf16, #tpu.memory_space<vmem>>, vector<32x256xbf16>,
    %c0_64 = arith.constant 0 : index
    %c129 = arith.constant 129 : index
    %125 = vector.load %arg11[%c0_64, %c129] : memref<32x512xf32, #tpu.memory_space<vmem>>, vector<32x256xf32>
    %c1_i32_65 = arith.constant 1 : i32
    %126 = vector.broadcast %c1_i32_65 : i32 to vector<32x256xi32>
    %127 = arith.addi %74, %126 : vector<32x256xi32>
    %c0_i32_66 = arith.constant 0 : i32
    %128 = vector.broadcast %c0_i32_66 : i32 to vector<32x256xi32>
    %129 = arith.cmpi sge, %127, %128 : vector<32x256xi32>
    %c1_i32_67 = arith.constant 1 : i32
    %130 = vector.broadcast %c1_i32_67 : i32 to vector<32x256xi32>
    %131 = arith.addi %74, %130 : vector<32x256xi32>
    %c16_i32_68 = arith.constant 16 : i32
    %132 = vector.broadcast %c16_i32_68 : i32 to vector<32x256xi32>
    %133 = arith.cmpi slt, %131, %132 : vector<32x256xi32>
    %134 = arith.andi %129, %133 : vector<32x256xi1>
    %cst_69 = arith.constant 0.000000e+00 : f32
    %135 = vector.broadcast %cst_69 : f32 to vector<32x256xf32>
    %136 = arith.select %134, %125, %135 : vector<32x256xi1>, vector<32x256xf32>
    %137 = arith.truncf %136 : vector<32x256xf32> to vector<32x256xbf16>
    %c160 = arith.constant 160 : index
    %c0_70 = arith.constant 0 : index
    %138 = vector.load %arg12[%c160, %c0_70] : memref<288x256xbf16, #tpu.memory_space<vmem>>, vector<32x256xbf16>
    tpu.vector_store %arg12[%c160, %c0_70], %137 {strides = array<i32>} : memref<288x256xbf16, #tpu.memory_space<vmem>>, vector<32x256xbf16>,
    %c0_71 = arith.constant 0 : index
    %c143 = arith.constant 143 : index
    %139 = vector.load %arg11[%c0_71, %c143] : memref<32x512xf32, #tpu.memory_space<vmem>>, vector<32x256xf32>
    %c-1_i32_72 = arith.constant -1 : i32
    %140 = vector.broadcast %c-1_i32_72 : i32 to vector<32x256xi32>
    %141 = arith.addi %74, %140 : vector<32x256xi32>
    %c0_i32_73 = arith.constant 0 : i32
    %142 = vector.broadcast %c0_i32_73 : i32 to vector<32x256xi32>
    %143 = arith.cmpi sge, %141, %142 : vector<32x256xi32>
    %c-1_i32_74 = arith.constant -1 : i32
    %144 = vector.broadcast %c-1_i32_74 : i32 to vector<32x256xi32>
    %145 = arith.addi %74, %144 : vector<32x256xi32>
    %c16_i32_75 = arith.constant 16 : i32
    %146 = vector.broadcast %c16_i32_75 : i32 to vector<32x256xi32>
    %147 = arith.cmpi slt, %145, %146 : vector<32x256xi32>
    %148 = arith.andi %143, %147 : vector<32x256xi1>
    %cst_76 = arith.constant 0.000000e+00 : f32
    %149 = vector.broadcast %cst_76 : f32 to vector<32x256xf32>
    %150 = arith.select %148, %139, %149 : vector<32x256xi1>, vector<32x256xf32>
    %151 = arith.truncf %150 : vector<32x256xf32> to vector<32x256xbf16>
    %c192 = arith.constant 192 : index
    %c0_77 = arith.constant 0 : index
    %152 = vector.load %arg12[%c192, %c0_77] : memref<288x256xbf16, #tpu.memory_space<vmem>>, vector<32x256xbf16>
    tpu.vector_store %arg12[%c192, %c0_77], %151 {strides = array<i32>} : memref<288x256xbf16, #tpu.memory_space<vmem>>, vector<32x256xbf16>,
    %c0_78 = arith.constant 0 : index
    %c144 = arith.constant 144 : index
    %153 = vector.load %arg11[%c0_78, %c144] : memref<32x512xf32, #tpu.memory_space<vmem>>, vector<32x256xf32>
    %154 = arith.truncf %153 : vector<32x256xf32> to vector<32x256xbf16>
    %c224 = arith.constant 224 : index
    %c0_79 = arith.constant 0 : index
    %155 = vector.load %arg12[%c224, %c0_79] : memref<288x256xbf16, #tpu.memory_space<vmem>>, vector<32x256xbf16>
    tpu.vector_store %arg12[%c224, %c0_79], %154 {strides = array<i32>} : memref<288x256xbf16, #tpu.memory_space<vmem>>, vector<32x256xbf16>,
    %c0_80 = arith.constant 0 : index
    %c145 = arith.constant 145 : index
    %156 = vector.load %arg11[%c0_80, %c145] : memref<32x512xf32, #tpu.memory_space<vmem>>, vector<32x256xf32>
    %c1_i32_81 = arith.constant 1 : i32
    %157 = vector.broadcast %c1_i32_81 : i32 to vector<32x256xi32>
    %158 = arith.addi %74, %157 : vector<32x256xi32>
    %c0_i32_82 = arith.constant 0 : i32
    %159 = vector.broadcast %c0_i32_82 : i32 to vector<32x256xi32>
    %160 = arith.cmpi sge, %158, %159 : vector<32x256xi32>
    %c1_i32_83 = arith.constant 1 : i32
    %161 = vector.broadcast %c1_i32_83 : i32 to vector<32x256xi32>
    %162 = arith.addi %74, %161 : vector<32x256xi32>
    %c16_i32_84 = arith.constant 16 : i32
    %163 = vector.broadcast %c16_i32_84 : i32 to vector<32x256xi32>
    %164 = arith.cmpi slt, %162, %163 : vector<32x256xi32>
    %165 = arith.andi %160, %164 : vector<32x256xi1>
    %cst_85 = arith.constant 0.000000e+00 : f32
    %166 = vector.broadcast %cst_85 : f32 to vector<32x256xf32>
    %167 = arith.select %165, %156, %166 : vector<32x256xi1>, vector<32x256xf32>
    %168 = arith.truncf %167 : vector<32x256xf32> to vector<32x256xbf16>
    %c256 = arith.constant 256 : index
    %c0_86 = arith.constant 0 : index
    %169 = vector.load %arg12[%c256, %c0_86] : memref<288x256xbf16, #tpu.memory_space<vmem>>, vector<32x256xbf16>
    tpu.vector_store %arg12[%c256, %c0_86], %168 {strides = array<i32>} : memref<288x256xbf16, #tpu.memory_space<vmem>>, vector<32x256xbf16>,
    %c0_87 = arith.constant 0 : index
    %c0_88 = arith.constant 0 : index
    %c0_89 = arith.constant 0 : index
    %170 = vector.load %arg5[%c0_87, %c0_88, %c0_89] : memref<3x32x288xbf16, #tpu.memory_space<vmem>>, vector<1x32x288xbf16>
    %171 = vector.shape_cast %170 : vector<1x32x288xbf16> to vector<32x288xbf16>
    %c0_90 = arith.constant 0 : index
    %c0_91 = arith.constant 0 : index
    %172 = vector.load %arg12[%c0_90, %c0_91] : memref<288x256xbf16, #tpu.memory_space<vmem>>, vector<288x256xbf16>
    %cst_92 = arith.constant dense<0.000000e+00> : vector<32x256xf32>
    %173 = tpu.matmul %171, %172, %cst_92 {dimension_numbers = #tpu.dot_dimension_numbers<[1], [0], [0], [1], [0, 0, 1, 1], [], []>} : vector<32x288xbf16>, vector<288x256xbf16>, vector<32x256xf32> -> vector<32x256xf32>
    %c0_93 = arith.constant 0 : index
    %c0_94 = arith.constant 0 : index
    %c0_95 = arith.constant 0 : index
    %174 = vector.load %arg6[%c0_93, %c0_94, %c0_95] : memref<3x32x1xf32, #tpu.memory_space<vmem>>, vector<1x32x1xf32>
    %175 = vector.shape_cast %174 : vector<1x32x1xf32> to vector<32x1xf32>
    %176 = vector.broadcast %175 : vector<32x1xf32> to vector<32x256xf32>
    %177 = arith.addf %173, %176 : vector<32x256xf32>
    %178 = arith.negf %177 : vector<32x256xf32>
    %179 = math.exp %178 : vector<32x256xf32>
    %cst_96 = arith.constant 1.000000e+00 : f32
    %180 = vector.broadcast %cst_96 : f32 to vector<32x256xf32>
    %181 = arith.addf %180, %179 : vector<32x256xf32>
    %182 = arith.divf %180, %181 : vector<32x256xf32>
    %183 = arith.addf %75, %182 : vector<32x256xf32>
    %c0_97 = arith.constant 0 : index
    %c128_98 = arith.constant 128 : index
    %184 = vector.load %arg11[%c0_97, %c128_98] : memref<32x512xf32, #tpu.memory_space<vmem>>, vector<32x256xf32>
    tpu.vector_store %arg11[%c0_97, %c128_98], %177 {strides = array<i32>} : memref<32x512xf32, #tpu.memory_space<vmem>>, vector<32x256xf32>,
    %c0_99 = arith.constant 0 : index
    %c94 = arith.constant 94 : index
    %185 = vector.load %arg11[%c0_99, %c94] : memref<32x512xf32, #tpu.memory_space<vmem>>, vector<32x256xf32>
    %c-2_i32 = arith.constant -2 : i32
    %186 = vector.broadcast %c-2_i32 : i32 to vector<32x256xi32>
    %187 = arith.addi %74, %186 : vector<32x256xi32>
    %c0_i32_100 = arith.constant 0 : i32
    %188 = vector.broadcast %c0_i32_100 : i32 to vector<32x256xi32>
    %189 = arith.cmpi sge, %187, %188 : vector<32x256xi32>
    %c-2_i32_101 = arith.constant -2 : i32
    %190 = vector.broadcast %c-2_i32_101 : i32 to vector<32x256xi32>
    %191 = arith.addi %74, %190 : vector<32x256xi32>
    %c16_i32_102 = arith.constant 16 : i32
    %192 = vector.broadcast %c16_i32_102 : i32 to vector<32x256xi32>
    %193 = arith.cmpi slt, %191, %192 : vector<32x256xi32>
    %194 = arith.andi %189, %193 : vector<32x256xi1>
    %cst_103 = arith.constant 0.000000e+00 : f32
    %195 = vector.broadcast %cst_103 : f32 to vector<32x256xf32>
    %196 = arith.select %194, %185, %195 : vector<32x256xi1>, vector<32x256xf32>
    %197 = arith.truncf %196 : vector<32x256xf32> to vector<32x256xbf16>
    %c0_104 = arith.constant 0 : index
    %c0_105 = arith.constant 0 : index
    %198 = vector.load %arg12[%c0_104, %c0_105] : memref<288x256xbf16, #tpu.memory_space<vmem>>, vector<32x256xbf16>
    tpu.vector_store %arg12[%c0_104, %c0_105], %197 {strides = array<i32>} : memref<288x256xbf16, #tpu.memory_space<vmem>>, vector<32x256xbf16>,
    %c0_106 = arith.constant 0 : index
    %c96_107 = arith.constant 96 : index
    %199 = vector.load %arg11[%c0_106, %c96_107] : memref<32x512xf32, #tpu.memory_space<vmem>>, vector<32x256xf32>
    %200 = arith.truncf %199 : vector<32x256xf32> to vector<32x256xbf16>
    %c32_108 = arith.constant 32 : index
    %c0_109 = arith.constant 0 : index
    %201 = vector.load %arg12[%c32_108, %c0_109] : memref<288x256xbf16, #tpu.memory_space<vmem>>, vector<32x256xbf16>
    tpu.vector_store %arg12[%c32_108, %c0_109], %200 {strides = array<i32>} : memref<288x256xbf16, #tpu.memory_space<vmem>>, vector<32x256xbf16>,
    %c0_110 = arith.constant 0 : index
    %c98 = arith.constant 98 : index
    %202 = vector.load %arg11[%c0_110, %c98] : memref<32x512xf32, #tpu.memory_space<vmem>>, vector<32x256xf32>
    %c2_i32 = arith.constant 2 : i32
    %203 = vector.broadcast %c2_i32 : i32 to vector<32x256xi32>
    %204 = arith.addi %74, %203 : vector<32x256xi32>
    %c0_i32_111 = arith.constant 0 : i32
    %205 = vector.broadcast %c0_i32_111 : i32 to vector<32x256xi32>
    %206 = arith.cmpi sge, %204, %205 : vector<32x256xi32>
    %c2_i32_112 = arith.constant 2 : i32
    %207 = vector.broadcast %c2_i32_112 : i32 to vector<32x256xi32>
    %208 = arith.addi %74, %207 : vector<32x256xi32>
    %c16_i32_113 = arith.constant 16 : i32
    %209 = vector.broadcast %c16_i32_113 : i32 to vector<32x256xi32>
    %210 = arith.cmpi slt, %208, %209 : vector<32x256xi32>
    %211 = arith.andi %206, %210 : vector<32x256xi1>
    %cst_114 = arith.constant 0.000000e+00 : f32
    %212 = vector.broadcast %cst_114 : f32 to vector<32x256xf32>
    %213 = arith.select %211, %202, %212 : vector<32x256xi1>, vector<32x256xf32>
    %214 = arith.truncf %213 : vector<32x256xf32> to vector<32x256xbf16>
    %c64_115 = arith.constant 64 : index
    %c0_116 = arith.constant 0 : index
    %215 = vector.load %arg12[%c64_115, %c0_116] : memref<288x256xbf16, #tpu.memory_space<vmem>>, vector<32x256xbf16>
    tpu.vector_store %arg12[%c64_115, %c0_116], %214 {strides = array<i32>} : memref<288x256xbf16, #tpu.memory_space<vmem>>, vector<32x256xbf16>,
    %c0_117 = arith.constant 0 : index
    %c126 = arith.constant 126 : index
    %216 = vector.load %arg11[%c0_117, %c126] : memref<32x512xf32, #tpu.memory_space<vmem>>, vector<32x256xf32>
    %c-2_i32_118 = arith.constant -2 : i32
    %217 = vector.broadcast %c-2_i32_118 : i32 to vector<32x256xi32>
    %218 = arith.addi %74, %217 : vector<32x256xi32>
    %c0_i32_119 = arith.constant 0 : i32
    %219 = vector.broadcast %c0_i32_119 : i32 to vector<32x256xi32>
    %220 = arith.cmpi sge, %218, %219 : vector<32x256xi32>
    %c-2_i32_120 = arith.constant -2 : i32
    %221 = vector.broadcast %c-2_i32_120 : i32 to vector<32x256xi32>
    %222 = arith.addi %74, %221 : vector<32x256xi32>
    %c16_i32_121 = arith.constant 16 : i32
    %223 = vector.broadcast %c16_i32_121 : i32 to vector<32x256xi32>
    %224 = arith.cmpi slt, %222, %223 : vector<32x256xi32>
    %225 = arith.andi %220, %224 : vector<32x256xi1>
    %cst_122 = arith.constant 0.000000e+00 : f32
    %226 = vector.broadcast %cst_122 : f32 to vector<32x256xf32>
    %227 = arith.select %225, %216, %226 : vector<32x256xi1>, vector<32x256xf32>
    %228 = arith.truncf %227 : vector<32x256xf32> to vector<32x256xbf16>
    %c96_123 = arith.constant 96 : index
    %c0_124 = arith.constant 0 : index
    %229 = vector.load %arg12[%c96_123, %c0_124] : memref<288x256xbf16, #tpu.memory_space<vmem>>, vector<32x256xbf16>
    tpu.vector_store %arg12[%c96_123, %c0_124], %228 {strides = array<i32>} : memref<288x256xbf16, #tpu.memory_space<vmem>>, vector<32x256xbf16>,
    %c0_125 = arith.constant 0 : index
    %c128_126 = arith.constant 128 : index
    %230 = vector.load %arg11[%c0_125, %c128_126] : memref<32x512xf32, #tpu.memory_space<vmem>>, vector<32x256xf32>
    %231 = arith.truncf %230 : vector<32x256xf32> to vector<32x256xbf16>
    %c128_127 = arith.constant 128 : index
    %c0_128 = arith.constant 0 : index
    %232 = vector.load %arg12[%c128_127, %c0_128] : memref<288x256xbf16, #tpu.memory_space<vmem>>, vector<32x256xbf16>
    tpu.vector_store %arg12[%c128_127, %c0_128], %231 {strides = array<i32>} : memref<288x256xbf16, #tpu.memory_space<vmem>>, vector<32x256xbf16>,
    %c0_129 = arith.constant 0 : index
    %c130 = arith.constant 130 : index
    %233 = vector.load %arg11[%c0_129, %c130] : memref<32x512xf32, #tpu.memory_space<vmem>>, vector<32x256xf32>
    %c2_i32_130 = arith.constant 2 : i32
    %234 = vector.broadcast %c2_i32_130 : i32 to vector<32x256xi32>
    %235 = arith.addi %74, %234 : vector<32x256xi32>
    %c0_i32_131 = arith.constant 0 : i32
    %236 = vector.broadcast %c0_i32_131 : i32 to vector<32x256xi32>
    %237 = arith.cmpi sge, %235, %236 : vector<32x256xi32>
    %c2_i32_132 = arith.constant 2 : i32
    %238 = vector.broadcast %c2_i32_132 : i32 to vector<32x256xi32>
    %239 = arith.addi %74, %238 : vector<32x256xi32>
    %c16_i32_133 = arith.constant 16 : i32
    %240 = vector.broadcast %c16_i32_133 : i32 to vector<32x256xi32>
    %241 = arith.cmpi slt, %239, %240 : vector<32x256xi32>
    %242 = arith.andi %237, %241 : vector<32x256xi1>
    %cst_134 = arith.constant 0.000000e+00 : f32
    %243 = vector.broadcast %cst_134 : f32 to vector<32x256xf32>
    %244 = arith.select %242, %233, %243 : vector<32x256xi1>, vector<32x256xf32>
    %245 = arith.truncf %244 : vector<32x256xf32> to vector<32x256xbf16>
    %c160_135 = arith.constant 160 : index
    %c0_136 = arith.constant 0 : index
    %246 = vector.load %arg12[%c160_135, %c0_136] : memref<288x256xbf16, #tpu.memory_space<vmem>>, vector<32x256xbf16>
    tpu.vector_store %arg12[%c160_135, %c0_136], %245 {strides = array<i32>} : memref<288x256xbf16, #tpu.memory_space<vmem>>, vector<32x256xbf16>,
    %c0_137 = arith.constant 0 : index
    %c158 = arith.constant 158 : index
    %247 = vector.load %arg11[%c0_137, %c158] : memref<32x512xf32, #tpu.memory_space<vmem>>, vector<32x256xf32>
    %c-2_i32_138 = arith.constant -2 : i32
    %248 = vector.broadcast %c-2_i32_138 : i32 to vector<32x256xi32>
    %249 = arith.addi %74, %248 : vector<32x256xi32>
    %c0_i32_139 = arith.constant 0 : i32
    %250 = vector.broadcast %c0_i32_139 : i32 to vector<32x256xi32>
    %251 = arith.cmpi sge, %249, %250 : vector<32x256xi32>
    %c-2_i32_140 = arith.constant -2 : i32
    %252 = vector.broadcast %c-2_i32_140 : i32 to vector<32x256xi32>
    %253 = arith.addi %74, %252 : vector<32x256xi32>
    %c16_i32_141 = arith.constant 16 : i32
    %254 = vector.broadcast %c16_i32_141 : i32 to vector<32x256xi32>
    %255 = arith.cmpi slt, %253, %254 : vector<32x256xi32>
    %256 = arith.andi %251, %255 : vector<32x256xi1>
    %cst_142 = arith.constant 0.000000e+00 : f32
    %257 = vector.broadcast %cst_142 : f32 to vector<32x256xf32>
    %258 = arith.select %256, %247, %257 : vector<32x256xi1>, vector<32x256xf32>
    %259 = arith.truncf %258 : vector<32x256xf32> to vector<32x256xbf16>
    %c192_143 = arith.constant 192 : index
    %c0_144 = arith.constant 0 : index
    %260 = vector.load %arg12[%c192_143, %c0_144] : memref<288x256xbf16, #tpu.memory_space<vmem>>, vector<32x256xbf16>
    tpu.vector_store %arg12[%c192_143, %c0_144], %259 {strides = array<i32>} : memref<288x256xbf16, #tpu.memory_space<vmem>>, vector<32x256xbf16>,
    %c0_145 = arith.constant 0 : index
    %c160_146 = arith.constant 160 : index
    %261 = vector.load %arg11[%c0_145, %c160_146] : memref<32x512xf32, #tpu.memory_space<vmem>>, vector<32x256xf32>
    %262 = arith.truncf %261 : vector<32x256xf32> to vector<32x256xbf16>
    %c224_147 = arith.constant 224 : index
    %c0_148 = arith.constant 0 : index
    %263 = vector.load %arg12[%c224_147, %c0_148] : memref<288x256xbf16, #tpu.memory_space<vmem>>, vector<32x256xbf16>
    tpu.vector_store %arg12[%c224_147, %c0_148], %262 {strides = array<i32>} : memref<288x256xbf16, #tpu.memory_space<vmem>>, vector<32x256xbf16>,
    %c0_149 = arith.constant 0 : index
    %c162 = arith.constant 162 : index
    %264 = vector.load %arg11[%c0_149, %c162] : memref<32x512xf32, #tpu.memory_space<vmem>>, vector<32x256xf32>
    %c2_i32_150 = arith.constant 2 : i32
    %265 = vector.broadcast %c2_i32_150 : i32 to vector<32x256xi32>
    %266 = arith.addi %74, %265 : vector<32x256xi32>
    %c0_i32_151 = arith.constant 0 : i32
    %267 = vector.broadcast %c0_i32_151 : i32 to vector<32x256xi32>
    %268 = arith.cmpi sge, %266, %267 : vector<32x256xi32>
    %c2_i32_152 = arith.constant 2 : i32
    %269 = vector.broadcast %c2_i32_152 : i32 to vector<32x256xi32>
    %270 = arith.addi %74, %269 : vector<32x256xi32>
    %c16_i32_153 = arith.constant 16 : i32
    %271 = vector.broadcast %c16_i32_153 : i32 to vector<32x256xi32>
    %272 = arith.cmpi slt, %270, %271 : vector<32x256xi32>
    %273 = arith.andi %268, %272 : vector<32x256xi1>
    %cst_154 = arith.constant 0.000000e+00 : f32
    %274 = vector.broadcast %cst_154 : f32 to vector<32x256xf32>
    %275 = arith.select %273, %264, %274 : vector<32x256xi1>, vector<32x256xf32>
    %276 = arith.truncf %275 : vector<32x256xf32> to vector<32x256xbf16>
    %c256_155 = arith.constant 256 : index
    %c0_156 = arith.constant 0 : index
    %277 = vector.load %arg12[%c256_155, %c0_156] : memref<288x256xbf16, #tpu.memory_space<vmem>>, vector<32x256xbf16>
    tpu.vector_store %arg12[%c256_155, %c0_156], %276 {strides = array<i32>} : memref<288x256xbf16, #tpu.memory_space<vmem>>, vector<32x256xbf16>,
    %c1 = arith.constant 1 : index
    %c0_157 = arith.constant 0 : index
    %c0_158 = arith.constant 0 : index
    %278 = vector.load %arg5[%c1, %c0_157, %c0_158] : memref<3x32x288xbf16, #tpu.memory_space<vmem>>, vector<1x32x288xbf16>
    %279 = vector.shape_cast %278 : vector<1x32x288xbf16> to vector<32x288xbf16>
    %c0_159 = arith.constant 0 : index
    %c0_160 = arith.constant 0 : index
    %280 = vector.load %arg12[%c0_159, %c0_160] : memref<288x256xbf16, #tpu.memory_space<vmem>>, vector<288x256xbf16>
    %cst_161 = arith.constant dense<0.000000e+00> : vector<32x256xf32>
    %281 = tpu.matmul %279, %280, %cst_161 {dimension_numbers = #tpu.dot_dimension_numbers<[1], [0], [0], [1], [0, 0, 1, 1], [], []>} : vector<32x288xbf16>, vector<288x256xbf16>, vector<32x256xf32> -> vector<32x256xf32>
    %c1_162 = arith.constant 1 : index
    %c0_163 = arith.constant 0 : index
    %c0_164 = arith.constant 0 : index
    %282 = vector.load %arg6[%c1_162, %c0_163, %c0_164] : memref<3x32x1xf32, #tpu.memory_space<vmem>>, vector<1x32x1xf32>
    %283 = vector.shape_cast %282 : vector<1x32x1xf32> to vector<32x1xf32>
    %284 = vector.broadcast %283 : vector<32x1xf32> to vector<32x256xf32>
    %285 = arith.addf %281, %284 : vector<32x256xf32>
    %286 = arith.negf %285 : vector<32x256xf32>
    %287 = math.exp %286 : vector<32x256xf32>
    %cst_165 = arith.constant 1.000000e+00 : f32
    %288 = vector.broadcast %cst_165 : f32 to vector<32x256xf32>
    %289 = arith.addf %288, %287 : vector<32x256xf32>
    %290 = arith.divf %288, %289 : vector<32x256xf32>
    %291 = arith.addf %183, %290 : vector<32x256xf32>
    %c0_166 = arith.constant 0 : index
    %c128_167 = arith.constant 128 : index
    %292 = vector.load %arg11[%c0_166, %c128_167] : memref<32x512xf32, #tpu.memory_space<vmem>>, vector<32x256xf32>
    tpu.vector_store %arg11[%c0_166, %c128_167], %285 {strides = array<i32>} : memref<32x512xf32, #tpu.memory_space<vmem>>, vector<32x256xf32>,
    %c0_168 = arith.constant 0 : index
    %c77 = arith.constant 77 : index
    %293 = vector.load %arg11[%c0_168, %c77] : memref<32x512xf32, #tpu.memory_space<vmem>>, vector<32x256xf32>
    %c-3_i32 = arith.constant -3 : i32
    %294 = vector.broadcast %c-3_i32 : i32 to vector<32x256xi32>
    %295 = arith.addi %74, %294 : vector<32x256xi32>
    %c0_i32_169 = arith.constant 0 : i32
    %296 = vector.broadcast %c0_i32_169 : i32 to vector<32x256xi32>
    %297 = arith.cmpi sge, %295, %296 : vector<32x256xi32>
    %c-3_i32_170 = arith.constant -3 : i32
    %298 = vector.broadcast %c-3_i32_170 : i32 to vector<32x256xi32>
    %299 = arith.addi %74, %298 : vector<32x256xi32>
    %c16_i32_171 = arith.constant 16 : i32
    %300 = vector.broadcast %c16_i32_171 : i32 to vector<32x256xi32>
    %301 = arith.cmpi slt, %299, %300 : vector<32x256xi32>
    %302 = arith.andi %297, %301 : vector<32x256xi1>
    %cst_172 = arith.constant 0.000000e+00 : f32
    %303 = vector.broadcast %cst_172 : f32 to vector<32x256xf32>
    %304 = arith.select %302, %293, %303 : vector<32x256xi1>, vector<32x256xf32>
    %305 = arith.truncf %304 : vector<32x256xf32> to vector<32x256xbf16>
    %c0_173 = arith.constant 0 : index
    %c0_174 = arith.constant 0 : index
    %306 = vector.load %arg12[%c0_173, %c0_174] : memref<288x256xbf16, #tpu.memory_space<vmem>>, vector<32x256xbf16>
    tpu.vector_store %arg12[%c0_173, %c0_174], %305 {strides = array<i32>} : memref<288x256xbf16, #tpu.memory_space<vmem>>, vector<32x256xbf16>,
    %c0_175 = arith.constant 0 : index
    %c80 = arith.constant 80 : index
    %307 = vector.load %arg11[%c0_175, %c80] : memref<32x512xf32, #tpu.memory_space<vmem>>, vector<32x256xf32>
    %308 = arith.truncf %307 : vector<32x256xf32> to vector<32x256xbf16>
    %c32_176 = arith.constant 32 : index
    %c0_177 = arith.constant 0 : index
    %309 = vector.load %arg12[%c32_176, %c0_177] : memref<288x256xbf16, #tpu.memory_space<vmem>>, vector<32x256xbf16>
    tpu.vector_store %arg12[%c32_176, %c0_177], %308 {strides = array<i32>} : memref<288x256xbf16, #tpu.memory_space<vmem>>, vector<32x256xbf16>,
    %c0_178 = arith.constant 0 : index
    %c83 = arith.constant 83 : index
    %310 = vector.load %arg11[%c0_178, %c83] : memref<32x512xf32, #tpu.memory_space<vmem>>, vector<32x256xf32>
    %c3_i32 = arith.constant 3 : i32
    %311 = vector.broadcast %c3_i32 : i32 to vector<32x256xi32>
    %312 = arith.addi %74, %311 : vector<32x256xi32>
    %c0_i32_179 = arith.constant 0 : i32
    %313 = vector.broadcast %c0_i32_179 : i32 to vector<32x256xi32>
    %314 = arith.cmpi sge, %312, %313 : vector<32x256xi32>
    %c3_i32_180 = arith.constant 3 : i32
    %315 = vector.broadcast %c3_i32_180 : i32 to vector<32x256xi32>
    %316 = arith.addi %74, %315 : vector<32x256xi32>
    %c16_i32_181 = arith.constant 16 : i32
    %317 = vector.broadcast %c16_i32_181 : i32 to vector<32x256xi32>
    %318 = arith.cmpi slt, %316, %317 : vector<32x256xi32>
    %319 = arith.andi %314, %318 : vector<32x256xi1>
    %cst_182 = arith.constant 0.000000e+00 : f32
    %320 = vector.broadcast %cst_182 : f32 to vector<32x256xf32>
    %321 = arith.select %319, %310, %320 : vector<32x256xi1>, vector<32x256xf32>
    %322 = arith.truncf %321 : vector<32x256xf32> to vector<32x256xbf16>
    %c64_183 = arith.constant 64 : index
    %c0_184 = arith.constant 0 : index
    %323 = vector.load %arg12[%c64_183, %c0_184] : memref<288x256xbf16, #tpu.memory_space<vmem>>, vector<32x256xbf16>
    tpu.vector_store %arg12[%c64_183, %c0_184], %322 {strides = array<i32>} : memref<288x256xbf16, #tpu.memory_space<vmem>>, vector<32x256xbf16>,
    %c0_185 = arith.constant 0 : index
    %c125 = arith.constant 125 : index
    %324 = vector.load %arg11[%c0_185, %c125] : memref<32x512xf32, #tpu.memory_space<vmem>>, vector<32x256xf32>
    %c-3_i32_186 = arith.constant -3 : i32
    %325 = vector.broadcast %c-3_i32_186 : i32 to vector<32x256xi32>
    %326 = arith.addi %74, %325 : vector<32x256xi32>
    %c0_i32_187 = arith.constant 0 : i32
    %327 = vector.broadcast %c0_i32_187 : i32 to vector<32x256xi32>
    %328 = arith.cmpi sge, %326, %327 : vector<32x256xi32>
    %c-3_i32_188 = arith.constant -3 : i32
    %329 = vector.broadcast %c-3_i32_188 : i32 to vector<32x256xi32>
    %330 = arith.addi %74, %329 : vector<32x256xi32>
    %c16_i32_189 = arith.constant 16 : i32
    %331 = vector.broadcast %c16_i32_189 : i32 to vector<32x256xi32>
    %332 = arith.cmpi slt, %330, %331 : vector<32x256xi32>
    %333 = arith.andi %328, %332 : vector<32x256xi1>
    %cst_190 = arith.constant 0.000000e+00 : f32
    %334 = vector.broadcast %cst_190 : f32 to vector<32x256xf32>
    %335 = arith.select %333, %324, %334 : vector<32x256xi1>, vector<32x256xf32>
    %336 = arith.truncf %335 : vector<32x256xf32> to vector<32x256xbf16>
    %c96_191 = arith.constant 96 : index
    %c0_192 = arith.constant 0 : index
    %337 = vector.load %arg12[%c96_191, %c0_192] : memref<288x256xbf16, #tpu.memory_space<vmem>>, vector<32x256xbf16>
    tpu.vector_store %arg12[%c96_191, %c0_192], %336 {strides = array<i32>} : memref<288x256xbf16, #tpu.memory_space<vmem>>, vector<32x256xbf16>,
    %c0_193 = arith.constant 0 : index
    %c128_194 = arith.constant 128 : index
    %338 = vector.load %arg11[%c0_193, %c128_194] : memref<32x512xf32, #tpu.memory_space<vmem>>, vector<32x256xf32>
    %339 = arith.truncf %338 : vector<32x256xf32> to vector<32x256xbf16>
    %c128_195 = arith.constant 128 : index
    %c0_196 = arith.constant 0 : index
    %340 = vector.load %arg12[%c128_195, %c0_196] : memref<288x256xbf16, #tpu.memory_space<vmem>>, vector<32x256xbf16>
    tpu.vector_store %arg12[%c128_195, %c0_196], %339 {strides = array<i32>} : memref<288x256xbf16, #tpu.memory_space<vmem>>, vector<32x256xbf16>,
    %c0_197 = arith.constant 0 : index
    %c131 = arith.constant 131 : index
    %341 = vector.load %arg11[%c0_197, %c131] : memref<32x512xf32, #tpu.memory_space<vmem>>, vector<32x256xf32>
    %c3_i32_198 = arith.constant 3 : i32
    %342 = vector.broadcast %c3_i32_198 : i32 to vector<32x256xi32>
    %343 = arith.addi %74, %342 : vector<32x256xi32>
    %c0_i32_199 = arith.constant 0 : i32
    %344 = vector.broadcast %c0_i32_199 : i32 to vector<32x256xi32>
    %345 = arith.cmpi sge, %343, %344 : vector<32x256xi32>
    %c3_i32_200 = arith.constant 3 : i32
    %346 = vector.broadcast %c3_i32_200 : i32 to vector<32x256xi32>
    %347 = arith.addi %74, %346 : vector<32x256xi32>
    %c16_i32_201 = arith.constant 16 : i32
    %348 = vector.broadcast %c16_i32_201 : i32 to vector<32x256xi32>
    %349 = arith.cmpi slt, %347, %348 : vector<32x256xi32>
    %350 = arith.andi %345, %349 : vector<32x256xi1>
    %cst_202 = arith.constant 0.000000e+00 : f32
    %351 = vector.broadcast %cst_202 : f32 to vector<32x256xf32>
    %352 = arith.select %350, %341, %351 : vector<32x256xi1>, vector<32x256xf32>
    %353 = arith.truncf %352 : vector<32x256xf32> to vector<32x256xbf16>
    %c160_203 = arith.constant 160 : index
    %c0_204 = arith.constant 0 : index
    %354 = vector.load %arg12[%c160_203, %c0_204] : memref<288x256xbf16, #tpu.memory_space<vmem>>, vector<32x256xbf16>
    tpu.vector_store %arg12[%c160_203, %c0_204], %353 {strides = array<i32>} : memref<288x256xbf16, #tpu.memory_space<vmem>>, vector<32x256xbf16>,
    %c0_205 = arith.constant 0 : index
    %c173 = arith.constant 173 : index
    %355 = vector.load %arg11[%c0_205, %c173] : memref<32x512xf32, #tpu.memory_space<vmem>>, vector<32x256xf32>
    %c-3_i32_206 = arith.constant -3 : i32
    %356 = vector.broadcast %c-3_i32_206 : i32 to vector<32x256xi32>
    %357 = arith.addi %74, %356 : vector<32x256xi32>
    %c0_i32_207 = arith.constant 0 : i32
    %358 = vector.broadcast %c0_i32_207 : i32 to vector<32x256xi32>
    %359 = arith.cmpi sge, %357, %358 : vector<32x256xi32>
    %c-3_i32_208 = arith.constant -3 : i32
    %360 = vector.broadcast %c-3_i32_208 : i32 to vector<32x256xi32>
    %361 = arith.addi %74, %360 : vector<32x256xi32>
    %c16_i32_209 = arith.constant 16 : i32
    %362 = vector.broadcast %c16_i32_209 : i32 to vector<32x256xi32>
    %363 = arith.cmpi slt, %361, %362 : vector<32x256xi32>
    %364 = arith.andi %359, %363 : vector<32x256xi1>
    %cst_210 = arith.constant 0.000000e+00 : f32
    %365 = vector.broadcast %cst_210 : f32 to vector<32x256xf32>
    %366 = arith.select %364, %355, %365 : vector<32x256xi1>, vector<32x256xf32>
    %367 = arith.truncf %366 : vector<32x256xf32> to vector<32x256xbf16>
    %c192_211 = arith.constant 192 : index
    %c0_212 = arith.constant 0 : index
    %368 = vector.load %arg12[%c192_211, %c0_212] : memref<288x256xbf16, #tpu.memory_space<vmem>>, vector<32x256xbf16>
    tpu.vector_store %arg12[%c192_211, %c0_212], %367 {strides = array<i32>} : memref<288x256xbf16, #tpu.memory_space<vmem>>, vector<32x256xbf16>,
    %c0_213 = arith.constant 0 : index
    %c176 = arith.constant 176 : index
    %369 = vector.load %arg11[%c0_213, %c176] : memref<32x512xf32, #tpu.memory_space<vmem>>, vector<32x256xf32>
    %370 = arith.truncf %369 : vector<32x256xf32> to vector<32x256xbf16>
    %c224_214 = arith.constant 224 : index
    %c0_215 = arith.constant 0 : index
    %371 = vector.load %arg12[%c224_214, %c0_215] : memref<288x256xbf16, #tpu.memory_space<vmem>>, vector<32x256xbf16>
    tpu.vector_store %arg12[%c224_214, %c0_215], %370 {strides = array<i32>} : memref<288x256xbf16, #tpu.memory_space<vmem>>, vector<32x256xbf16>,
    %c0_216 = arith.constant 0 : index
    %c179 = arith.constant 179 : index
    %372 = vector.load %arg11[%c0_216, %c179] : memref<32x512xf32, #tpu.memory_space<vmem>>, vector<32x256xf32>
    %c3_i32_217 = arith.constant 3 : i32
    %373 = vector.broadcast %c3_i32_217 : i32 to vector<32x256xi32>
    %374 = arith.addi %74, %373 : vector<32x256xi32>
    %c0_i32_218 = arith.constant 0 : i32
    %375 = vector.broadcast %c0_i32_218 : i32 to vector<32x256xi32>
    %376 = arith.cmpi sge, %374, %375 : vector<32x256xi32>
    %c3_i32_219 = arith.constant 3 : i32
    %377 = vector.broadcast %c3_i32_219 : i32 to vector<32x256xi32>
    %378 = arith.addi %74, %377 : vector<32x256xi32>
    %c16_i32_220 = arith.constant 16 : i32
    %379 = vector.broadcast %c16_i32_220 : i32 to vector<32x256xi32>
    %380 = arith.cmpi slt, %378, %379 : vector<32x256xi32>
    %381 = arith.andi %376, %380 : vector<32x256xi1>
    %cst_221 = arith.constant 0.000000e+00 : f32
    %382 = vector.broadcast %cst_221 : f32 to vector<32x256xf32>
    %383 = arith.select %381, %372, %382 : vector<32x256xi1>, vector<32x256xf32>
    %384 = arith.truncf %383 : vector<32x256xf32> to vector<32x256xbf16>
    %c256_222 = arith.constant 256 : index
    %c0_223 = arith.constant 0 : index
    %385 = vector.load %arg12[%c256_222, %c0_223] : memref<288x256xbf16, #tpu.memory_space<vmem>>, vector<32x256xbf16>
    tpu.vector_store %arg12[%c256_222, %c0_223], %384 {strides = array<i32>} : memref<288x256xbf16, #tpu.memory_space<vmem>>, vector<32x256xbf16>,
    %c2 = arith.constant 2 : index
    %c0_224 = arith.constant 0 : index
    %c0_225 = arith.constant 0 : index
    %386 = vector.load %arg5[%c2, %c0_224, %c0_225] : memref<3x32x288xbf16, #tpu.memory_space<vmem>>, vector<1x32x288xbf16>
    %387 = vector.shape_cast %386 : vector<1x32x288xbf16> to vector<32x288xbf16>
    %c0_226 = arith.constant 0 : index
    %c0_227 = arith.constant 0 : index
    %388 = vector.load %arg12[%c0_226, %c0_227] : memref<288x256xbf16, #tpu.memory_space<vmem>>, vector<288x256xbf16>
    %cst_228 = arith.constant dense<0.000000e+00> : vector<32x256xf32>
    %389 = tpu.matmul %387, %388, %cst_228 {dimension_numbers = #tpu.dot_dimension_numbers<[1], [0], [0], [1], [0, 0, 1, 1], [], []>} : vector<32x288xbf16>, vector<288x256xbf16>, vector<32x256xf32> -> vector<32x256xf32>
    %c2_229 = arith.constant 2 : index
    %c0_230 = arith.constant 0 : index
    %c0_231 = arith.constant 0 : index
    %390 = vector.load %arg6[%c2_229, %c0_230, %c0_231] : memref<3x32x1xf32, #tpu.memory_space<vmem>>, vector<1x32x1xf32>
    %391 = vector.shape_cast %390 : vector<1x32x1xf32> to vector<32x1xf32>
    %392 = vector.broadcast %391 : vector<32x1xf32> to vector<32x256xf32>
    %393 = arith.addf %389, %392 : vector<32x256xf32>
    %394 = arith.negf %393 : vector<32x256xf32>
    %395 = math.exp %394 : vector<32x256xf32>
    %cst_232 = arith.constant 1.000000e+00 : f32
    %396 = vector.broadcast %cst_232 : f32 to vector<32x256xf32>
    %397 = arith.addf %396, %395 : vector<32x256xf32>
    %398 = arith.divf %396, %397 : vector<32x256xf32>
    %399 = arith.addf %291, %398 : vector<32x256xf32>
    %c0_233 = arith.constant 0 : index
    %c0_234 = arith.constant 0 : index
    %c0_235 = arith.constant 0 : index
    %400 = vector.load %arg10[%c0_233, %c0_234, %c0_235] : memref<1x32x256xf32, #tpu.memory_space<vmem>>, vector<1x32x256xf32>
    %401 = vector.shape_cast %400 : vector<1x32x256xf32> to vector<32x256xf32>
    %402 = vector.broadcast %53 : vector<32x1xf32> to vector<32x256xf32>
    %403 = arith.addf %399, %402 : vector<32x256xf32>
    %404 = arith.mulf %17, %403 : vector<32x256xf32>
    %405 = arith.addf %401, %404 : vector<32x256xf32>
    %c0_236 = arith.constant 0 : index
    %c0_237 = arith.constant 0 : index
    %c0_238 = arith.constant 0 : index
    %406 = vector.load %arg10[%c0_236, %c0_237, %c0_238] : memref<1x32x256xf32, #tpu.memory_space<vmem>>, vector<1x32x256xf32>
    %407 = vector.shape_cast %406 : vector<1x32x256xf32> to vector<32x256xf32>
    %408 = vector.shape_cast %405 : vector<32x256xf32> to vector<1x32x256xf32>
    tpu.vector_store %arg10[%c0_236, %c0_237, %c0_238], %408 {strides = array<i32>} : memref<1x32x256xf32, #tpu.memory_space<vmem>>, vector<1x32x256xf32>,
    return
  }
  func.func @transform_0(%arg0: i32) -> (i32, i32, i32) {
    %c0_i32 = arith.constant 0 : i32
    %c0_i32_0 = arith.constant 0 : i32
    %c0_i32_1 = arith.constant 0 : i32
    return %arg0, %c0_i32, %c0_i32_0 : i32, i32, i32
  }
  func.func @transform_1(%arg0: i32) -> (i32, i32) {
    %c0_i32 = arith.constant 0 : i32
    %c0_i32_0 = arith.constant 0 : i32
    %c0_i32_1 = arith.constant 0 : i32
    return %c0_i32, %c0_i32_0 : i32, i32
  }
  func.func @transform_2(%arg0: i32) -> (i32, i32) {
    %c0_i32 = arith.constant 0 : i32
    %c0_i32_0 = arith.constant 0 : i32
    %c0_i32_1 = arith.constant 0 : i32
    return %c0_i32, %c0_i32_0 : i32, i32
  }
  func.func @transform_3(%arg0: i32) -> (i32, i32) {
    %c0_i32 = arith.constant 0 : i32
    %c0_i32_0 = arith.constant 0 : i32
    %c0_i32_1 = arith.constant 0 : i32
    return %c0_i32, %c0_i32_0 : i32, i32
  }
  func.func @transform_4(%arg0: i32) -> (i32, i32, i32) {
    %c0_i32 = arith.constant 0 : i32
    %c0_i32_0 = arith.constant 0 : i32
    %c0_i32_1 = arith.constant 0 : i32
    %c0_i32_2 = arith.constant 0 : i32
    return %c0_i32, %c0_i32_0, %c0_i32_1 : i32, i32, i32
  }
  func.func @transform_5(%arg0: i32) -> (i32, i32, i32) {
    %c0_i32 = arith.constant 0 : i32
    %c0_i32_0 = arith.constant 0 : i32
    %c0_i32_1 = arith.constant 0 : i32
    %c0_i32_2 = arith.constant 0 : i32
    return %c0_i32, %c0_i32_0, %c0_i32_1 : i32, i32, i32
  }
  func.func @transform_6(%arg0: i32) -> (i32, i32) {
    %c0_i32 = arith.constant 0 : i32
    %c0_i32_0 = arith.constant 0 : i32
    %c0_i32_1 = arith.constant 0 : i32
    return %c0_i32, %c0_i32_0 : i32, i32
  }
  func.func @transform_7(%arg0: i32) -> (i32, i32) {
    %c0_i32 = arith.constant 0 : i32
    %c0_i32_0 = arith.constant 0 : i32
    %c0_i32_1 = arith.constant 0 : i32
    return %c0_i32, %c0_i32_0 : i32, i32
  }
  func.func @transform_8(%arg0: i32) -> (i32, i32) {
    %c0_i32 = arith.constant 0 : i32
    %c0_i32_0 = arith.constant 0 : i32
    %c0_i32_1 = arith.constant 0 : i32
    return %c0_i32, %c0_i32_0 : i32, i32
  }
  func.func @transform_9(%arg0: i32) -> (i32, i32, i32) {
    %c0_i32 = arith.constant 0 : i32
    %c0_i32_0 = arith.constant 0 : i32
    %c0_i32_1 = arith.constant 0 : i32
    return %arg0, %c0_i32, %c0_i32_0 : i32, i32, i32
  }
}

</mosaic_0001>

<llo_original>
// kernel: multiscale_attention_cspa_forward.1
$region0: #{multiscale_attention_cspa_forward.1}
  #allocation0 [shape = 'u32[]', space=smem, size = 0x4, offset = 0x4, fixed_abs, tag = 'smem constant byte address 0x4 - core index']
  #allocation1 [shape = 'u32[144,128]{1,0:T(1,128)}', space=vmem, size = 0x12000, scoped, tag = 'internal scratch']
  #allocation2 [shape = 'f32[32,512]{1,0:T(8,128)}', space=vmem, size = 0x10000, scoped, tag = 'scratch operand']
  #allocation3 [shape = 'bf16[288,256]{1,0:T(16,128)(2,1)}', space=vmem, size = 0x24000, scoped, tag = 'scratch operand']
  %s0 = inlined_call_operand.vmem [shape: f32[2,32,256], index: 0, kind: input, shape index: {}]
  %s1 = inlined_call_operand.vmem [shape: bf16[64,32], index: 1, kind: input, shape index: {}]
  %s2 = inlined_call_operand.vmem [shape: f32[64,1], index: 2, kind: input, shape index: {}]
  %s3 = inlined_call_operand.vmem [shape: f32[64,1], index: 3, kind: input, shape index: {}]
  %s4 = inlined_call_operand.vmem [shape: bf16[3,32,288], index: 4, kind: input, shape index: {}]
  %s5 = inlined_call_operand.vmem [shape: f32[3,32,1], index: 5, kind: input, shape index: {}]
  %s6 = inlined_call_operand.vmem [shape: bf16[2,32], index: 6, kind: input, shape index: {}]
  %s7 = inlined_call_operand.vmem [shape: bf16[32,2], index: 7, kind: input, shape index: {}]
  %s8 = inlined_call_operand.vmem [shape: f32[32,1], index: 8, kind: input, shape index: {}]
  %s9 = inlined_call_operand.vmem [shape: f32[2,32,256], index: 9, kind: output, shape index: {}]
  %s10 = sld [smem:[#allocation0]]
  $region69: #{multiscale_attention_cspa_forward.1} parent=0
    _
  %s12 = ssub.s32 1, %s10
  %s13 = scalar_select 0, %s12, %s10
  loop: start=0, step=1, limit=4
  $region2: #{multiscale_attention_cspa_forward.1} parent=0 // loop_pre_header
    _
  $region3: #{multiscale_attention_cspa_forward.1} parent=0 // loop_header
    %s15 = sphi 0, %s19
    %p16 = scmp.ge.s32.totalorder %s15, 4
    %s25 = sphi 0, %s27
    %s28 = sphi 0, %s25
    %s29 = sphi 0, %s28
    %s45 = sphi 0, %s29
    %s49 = sphi 0, %s49
    %s51 = sphi 0, %s49
    %s52 = sphi 0, %s51
    %s66 = sphi 0, %s52
    %s70 = sphi 0, %s70
    %s72 = sphi 0, %s70
    %s73 = sphi 0, %s72
    %s87 = sphi 0, %s73
    %s91 = sphi 0, %s91
    %s93 = sphi 0, %s91
    %s94 = sphi 0, %s93
    %s108 = sphi 0, %s94
    %s112 = sphi 0, %s112
    %s114 = sphi 0, %s112
    %s115 = sphi 0, %s114
    %s129 = sphi 0, %s115
    %s133 = sphi 0, %s133
    %s135 = sphi 0, %s133
    %s136 = sphi 0, %s135
    %s150 = sphi 0, %s136
    %s154 = sphi 0, %s154
    %s156 = sphi 0, %s154
    %s157 = sphi 0, %s156
    %s171 = sphi 0, %s157
    %s175 = sphi 0, %s175
    %s177 = sphi 0, %s175
    %s178 = sphi 0, %s177
    %s192 = sphi 0, %s178
    %s196 = sphi 0, %s196
    %s198 = sphi 0, %s196
    %s199 = sphi 0, %s198
    %s213 = sphi 0, %s199
    %s219 = sphi 0, %s221
    %s222 = sphi 0, %s219
    %s223 = sphi 0, %s222
    %s239 = sphi 0, %s223
  $region4: #{multiscale_attention_cspa_forward.1} parent=0 // loop_header_branch
    %18 = sbr.rel (%p16) target = $region8
  $region5: #{multiscale_attention_cspa_forward.1} parent=0 // loop_body
    %s20 = ssub.s32 %s15, 1
    %s21 = ssub.s32 %s15, 2
    %s22 = sadd.s32 %s15, 1
    %s23 = ssub.s32 %s15, %s22
    %p24 = scmp.eq.s32.totalorder %s23, 0
    %s26 = sadd.s32 %s25, 1
    %s27 = scalar_select %p24, %s25, %s26
    %p30 = pneg %p24
    %p31 = scmp.eq.s32.totalorder %s15, 1
    %p32 = por %p30, %p31
    %p33 = scmp.ne.s32.totalorder %s25, %s28
    %p34 = scmp.eq.s32.totalorder %s15, 0
    %p35 = por %p33, %p34
    %p36 = scmp.ne.s32.totalorder %s25, %s28
    %p37 = scmp.eq.s32.totalorder %s20, 1
    %p38 = por %p36, %p37
    %p39 = scmp.ne.s32.totalorder %s28, %s29
    %p40 = scmp.eq.s32.totalorder %s20, 0
    %p41 = por %p39, %p40
    %p42 = scmp.ne.s32.totalorder %s28, %s29
    %p43 = scmp.eq.s32.totalorder %s21, 1
    %p44 = por %p42, %p43
    %p46 = scmp.ne.s32.totalorder %s29, %s45
    %p47 = scmp.eq.s32.totalorder %s21, 0
    %p48 = por %p46, %p47
    %s50 = sadd.s32 %s49, 1
    %p53 = scmp.eq.s32.totalorder %s15, 1
    %p54 = scmp.ne.s32.totalorder %s49, %s51
    %p55 = scmp.eq.s32.totalorder %s15, 0
    %p56 = por %p54, %p55
    %p57 = scmp.ne.s32.totalorder %s49, %s51
    %p58 = scmp.eq.s32.totalorder %s20, 1
    %p59 = por %p57, %p58
    %p60 = scmp.ne.s32.totalorder %s51, %s52
    %p61 = scmp.eq.s32.totalorder %s20, 0
    %p62 = por %p60, %p61
    %p63 = scmp.ne.s32.totalorder %s51, %s52
    %p64 = scmp.eq.s32.totalorder %s21, 1
    %p65 = por %p63, %p64
    %p67 = scmp.ne.s32.totalorder %s52, %s66
    %p68 = scmp.eq.s32.totalorder %s21, 0
    %p69 = por %p67, %p68
    %s71 = sadd.s32 %s70, 1
    %p74 = scmp.eq.s32.totalorder %s15, 1
    %p75 = scmp.ne.s32.totalorder %s70, %s72
    %p76 = scmp.eq.s32.totalorder %s15, 0
    %p77 = por %p75, %p76
    %p78 = scmp.ne.s32.totalorder %s70, %s72
    %p79 = scmp.eq.s32.totalorder %s20, 1
    %p80 = por %p78, %p79
    %p81 = scmp.ne.s32.totalorder %s72, %s73
    %p82 = scmp.eq.s32.totalorder %s20, 0
    %p83 = por %p81, %p82
    %p84 = scmp.ne.s32.totalorder %s72, %s73
    %p85 = scmp.eq.s32.totalorder %s21, 1
    %p86 = por %p84, %p85
    %p88 = scmp.ne.s32.totalorder %s73, %s87
    %p89 = scmp.eq.s32.totalorder %s21, 0
    %p90 = por %p88, %p89
    %s92 = sadd.s32 %s91, 1
    %p95 = scmp.eq.s32.totalorder %s15, 1
    %p96 = scmp.ne.s32.totalorder %s91, %s93
    %p97 = scmp.eq.s32.totalorder %s15, 0
    %p98 = por %p96, %p97
    %p99 = scmp.ne.s32.totalorder %s91, %s93
    %p100 = scmp.eq.s32.totalorder %s20, 1
    %p101 = por %p99, %p100
    %p102 = scmp.ne.s32.totalorder %s93, %s94
    %p103 = scmp.eq.s32.totalorder %s20, 0
    %p104 = por %p102, %p103
    %p105 = scmp.ne.s32.totalorder %s93, %s94
    %p106 = scmp.eq.s32.totalorder %s21, 1
    %p107 = por %p105, %p106
    %p109 = scmp.ne.s32.totalorder %s94, %s108
    %p110 = scmp.eq.s32.totalorder %s21, 0
    %p111 = por %p109, %p110
    %s113 = sadd.s32 %s112, 1
    %p116 = scmp.eq.s32.totalorder %s15, 1
    %p117 = scmp.ne.s32.totalorder %s112, %s114
    %p118 = scmp.eq.s32.totalorder %s15, 0
    %p119 = por %p117, %p118
    %p120 = scmp.ne.s32.totalorder %s112, %s114
    %p121 = scmp.eq.s32.totalorder %s20, 1
    %p122 = por %p120, %p121
    %p123 = scmp.ne.s32.totalorder %s114, %s115
    %p124 = scmp.eq.s32.totalorder %s20, 0
    %p125 = por %p123, %p124
    %p126 = scmp.ne.s32.totalorder %s114, %s115
    %p127 = scmp.eq.s32.totalorder %s21, 1
    %p128 = por %p126, %p127
    %p130 = scmp.ne.s32.totalorder %s115, %s129
    %p131 = scmp.eq.s32.totalorder %s21, 0
    %p132 = por %p130, %p131
    %s134 = sadd.s32 %s133, 1
    %p137 = scmp.eq.s32.totalorder %s15, 1
    %p138 = scmp.ne.s32.totalorder %s133, %s135
    %p139 = scmp.eq.s32.totalorder %s15, 0
    %p140 = por %p138, %p139
    %p141 = scmp.ne.s32.totalorder %s133, %s135
    %p142 = scmp.eq.s32.totalorder %s20, 1
    %p143 = por %p141, %p142
    %p144 = scmp.ne.s32.totalorder %s135, %s136
    %p145 = scmp.eq.s32.totalorder %s20, 0
    %p146 = por %p144, %p145
    %p147 = scmp.ne.s32.totalorder %s135, %s136
    %p148 = scmp.eq.s32.totalorder %s21, 1
    %p149 = por %p147, %p148
    %p151 = scmp.ne.s32.totalorder %s136, %s150
    %p152 = scmp.eq.s32.totalorder %s21, 0
    %p153 = por %p151, %p152
    %s155 = sadd.s32 %s154, 1
    %p158 = scmp.eq.s32.totalorder %s15, 1
    %p159 = scmp.ne.s32.totalorder %s154, %s156
    %p160 = scmp.eq.s32.totalorder %s15, 0
    %p161 = por %p159, %p160
    %p162 = scmp.ne.s32.totalorder %s154, %s156
    %p163 = scmp.eq.s32.totalorder %s20, 1
    %p164 = por %p162, %p163
    %p165 = scmp.ne.s32.totalorder %s156, %s157
    %p166 = scmp.eq.s32.totalorder %s20, 0
    %p167 = por %p165, %p166
    %p168 = scmp.ne.s32.totalorder %s156, %s157
    %p169 = scmp.eq.s32.totalorder %s21, 1
    %p170 = por %p168, %p169
    %p172 = scmp.ne.s32.totalorder %s157, %s171
    %p173 = scmp.eq.s32.totalorder %s21, 0
    %p174 = por %p172, %p173
    %s176 = sadd.s32 %s175, 1
    %p179 = scmp.eq.s32.totalorder %s15, 1
    %p180 = scmp.ne.s32.totalorder %s175, %s177
    %p181 = scmp.eq.s32.totalorder %s15, 0
    %p182 = por %p180, %p181
    %p183 = scmp.ne.s32.totalorder %s175, %s177
    %p184 = scmp.eq.s32.totalorder %s20, 1
    %p185 = por %p183, %p184
    %p186 = scmp.ne.s32.totalorder %s177, %s178
    %p187 = scmp.eq.s32.totalorder %s20, 0
    %p188 = por %p186, %p187
    %p189 = scmp.ne.s32.totalorder %s177, %s178
    %p190 = scmp.eq.s32.totalorder %s21, 1
    %p191 = por %p189, %p190
    %p193 = scmp.ne.s32.totalorder %s178, %s192
    %p194 = scmp.eq.s32.totalorder %s21, 0
    %p195 = por %p193, %p194
    %s197 = sadd.s32 %s196, 1
    %p200 = scmp.eq.s32.totalorder %s15, 1
    %p201 = scmp.ne.s32.totalorder %s196, %s198
    %p202 = scmp.eq.s32.totalorder %s15, 0
    %p203 = por %p201, %p202
    %p204 = scmp.ne.s32.totalorder %s196, %s198
    %p205 = scmp.eq.s32.totalorder %s20, 1
    %p206 = por %p204, %p205
    %p207 = scmp.ne.s32.totalorder %s198, %s199
    %p208 = scmp.eq.s32.totalorder %s20, 0
    %p209 = por %p207, %p208
    %p210 = scmp.ne.s32.totalorder %s198, %s199
    %p211 = scmp.eq.s32.totalorder %s21, 1
    %p212 = por %p210, %p211
    %p214 = scmp.ne.s32.totalorder %s199, %s213
    %p215 = scmp.eq.s32.totalorder %s21, 0
    %p216 = por %p214, %p215
    %s217 = ssub.s32 %s15, %s22
    %p218 = scmp.eq.s32.totalorder %s217, 0
    %s220 = sadd.s32 %s219, 1
    %s221 = scalar_select %p218, %s219, %s220
    %p224 = pneg %p218
    %p225 = scmp.eq.s32.totalorder %s15, 1
    %p226 = por %p224, %p225
    %p227 = scmp.ne.s32.totalorder %s219, %s222
    %p228 = scmp.eq.s32.totalorder %s15, 0
    %p229 = por %p227, %p228
    %p230 = scmp.ne.s32.totalorder %s219, %s222
    %p231 = scmp.eq.s32.totalorder %s20, 1
    %p232 = por %p230, %p231
    %p233 = scmp.ne.s32.totalorder %s222, %s223
    %p234 = scmp.eq.s32.totalorder %s20, 0
    %p235 = por %p233, %p234
    %p236 = scmp.ne.s32.totalorder %s222, %s223
    %p237 = scmp.eq.s32.totalorder %s21, 1
    %p238 = por %p236, %p237
    %p240 = scmp.ne.s32.totalorder %s223, %s239
    %p241 = scmp.eq.s32.totalorder %s21, 0
    %p242 = por %p240, %p241
    %p243 = scmp.le.s32.totalorder 1, %s15
    %p244 = scmp.lt.s32.totalorder %s15, 3
    %p245 = pnand %p243, %p244
    %p246 = pneg %p245
    // Predicated region
    $region9: #{multiscale_attention_cspa_forward.1} parent=5 // pred_check
      _
    $region10: #{multiscale_attention_cspa_forward.1} parent=5 // pred_check_branch
      %248 = sbr.rel (%p245) target = $region12
    $region11: #{multiscale_attention_cspa_forward.1} parent=5 // pred_region
      %s249 = ssub.s32 %s15, 1
      // Predicated region
      $region13: #{multiscale_attention_cspa_forward.1} parent=11 // pred_check
        %p250 = pneg %p62
      $region14: #{multiscale_attention_cspa_forward.1} parent=11 // pred_check_branch
        %252 = sbr.rel (%p250) target = $region16
      $region15: #{multiscale_attention_cspa_forward.1} parent=11 // pred_region
        _
      $region16: #{multiscale_attention_cspa_forward.1} parent=11 // pred_fallthru
        _
      // Predicated region
      $region17: #{multiscale_attention_cspa_forward.1} parent=11 // pred_check
        %p253 = pneg %p83
      $region18: #{multiscale_attention_cspa_forward.1} parent=11 // pred_check_branch
        %255 = sbr.rel (%p253) target = $region20
      $region19: #{multiscale_attention_cspa_forward.1} parent=11 // pred_region
        _
      $region20: #{multiscale_attention_cspa_forward.1} parent=11 // pred_fallthru
        _
      // Predicated region
      $region21: #{multiscale_attention_cspa_forward.1} parent=11 // pred_check
        %p256 = pneg %p104
      $region22: #{multiscale_attention_cspa_forward.1} parent=11 // pred_check_branch
        %258 = sbr.rel (%p256) target = $region24
      $region23: #{multiscale_attention_cspa_forward.1} parent=11 // pred_region
        _
      $region24: #{multiscale_attention_cspa_forward.1} parent=11 // pred_fallthru
        _
      // Predicated region
      $region25: #{multiscale_attention_cspa_forward.1} parent=11 // pred_check
        %p259 = pneg %p125
      $region26: #{multiscale_attention_cspa_forward.1} parent=11 // pred_check_branch
        %261 = sbr.rel (%p259) target = $region28
      $region27: #{multiscale_attention_cspa_forward.1} parent=11 // pred_region
        _
      $region28: #{multiscale_attention_cspa_forward.1} parent=11 // pred_fallthru
        _
      // Predicated region
      $region29: #{multiscale_attention_cspa_forward.1} parent=11 // pred_check
        %p262 = pneg %p146
      $region30: #{multiscale_attention_cspa_forward.1} parent=11 // pred_check_branch
        %264 = sbr.rel (%p262) target = $region32
      $region31: #{multiscale_attention_cspa_forward.1} parent=11 // pred_region
        _
      $region32: #{multiscale_attention_cspa_forward.1} parent=11 // pred_fallthru
        _
      // Predicated region
      $region33: #{multiscale_attention_cspa_forward.1} parent=11 // pred_check
        %p265 = pneg %p167
      $region34: #{multiscale_attention_cspa_forward.1} parent=11 // pred_check_branch
        %267 = sbr.rel (%p265) target = $region36
      $region35: #{multiscale_attention_cspa_forward.1} parent=11 // pred_region
        _
      $region36: #{multiscale_attention_cspa_forward.1} parent=11 // pred_fallthru
        _
      // Predicated region
      $region37: #{multiscale_attention_cspa_forward.1} parent=11 // pred_check
        %p268 = pneg %p188
      $region38: #{multiscale_attention_cspa_forward.1} parent=11 // pred_check_branch
        %270 = sbr.rel (%p268) target = $region40
      $region39: #{multiscale_attention_cspa_forward.1} parent=11 // pred_region
        _
      $region40: #{multiscale_attention_cspa_forward.1} parent=11 // pred_fallthru
        _
      // Predicated region
      $region41: #{multiscale_attention_cspa_forward.1} parent=11 // pred_check
        %p271 = pneg %p209
      $region42: #{multiscale_attention_cspa_forward.1} parent=11 // pred_check_branch
        %273 = sbr.rel (%p271) target = $region44
      $region43: #{multiscale_attention_cspa_forward.1} parent=11 // pred_region
        _
      $region44: #{multiscale_attention_cspa_forward.1} parent=11 // pred_fallthru
        _
    $region12: #{multiscale_attention_cspa_forward.1} parent=5 // pred_fallthru
      _
    %p274 = scmp.lt.s32.totalorder %s15, 2
    // Predicated region
    $region45: #{multiscale_attention_cspa_forward.1} parent=5 // pred_check
      %p275 = pneg %p274
    $region46: #{multiscale_attention_cspa_forward.1} parent=5 // pred_check_branch
      %277 = sbr.rel (%p275) target = $region48
    $region47: #{multiscale_attention_cspa_forward.1} parent=5 // pred_region
      // Predicated region
      $region49: #{multiscale_attention_cspa_forward.1} parent=47 // pred_check
        %p278 = pneg %p35
      $region50: #{multiscale_attention_cspa_forward.1} parent=47 // pred_check_branch
        %280 = sbr.rel (%p278) target = $region52
      $region51: #{multiscale_attention_cspa_forward.1} parent=47 // pred_region
        %p281 = scmp.lt.s32.totalorder %s15, 1
        %s282 = scalar_select %p281, %s15, 1
        %s283 = smul.addr %s282, 8
        %s284 = smul.addr %s283, 8
        %s285 = scalar_lea.vmem %s0, %s284
      $region52: #{multiscale_attention_cspa_forward.1} parent=47 // pred_fallthru
        _
    $region48: #{multiscale_attention_cspa_forward.1} parent=5 // pred_fallthru
      _
    %p286 = scmp.le.s32.totalorder 1, %s15
    %p287 = scmp.lt.s32.totalorder %s15, 3
    %p288 = pnand %p286, %p287
    %p289 = pneg %p288
    // Predicated region
    $region53: #{multiscale_attention_cspa_forward.1} parent=5 // pred_check
      _
    $region54: #{multiscale_attention_cspa_forward.1} parent=5 // pred_check_branch
      %291 = sbr.rel (%p288) target = $region56
    $region55: #{multiscale_attention_cspa_forward.1} parent=5 // pred_region
      %s292 = ssub.s32 %s15, 1
      %p293 = scmp.lt.s32.totalorder %s20, 1
      %s294 = scalar_select %p293, %s20, 1
      %s295 = smul.addr %s294, 8
      %s296 = smul.addr %s295, 8
      %s297 = scalar_lea.vmem %s0, %s296
      %p298 = pneg %p41
      %p299 = pneg %p38
      %p300 = pneg %p62
      %p301 = pneg %p59
      %p302 = pneg %p83
      %p303 = pneg %p80
      %p304 = pneg %p104
      %p305 = pneg %p101
      %p306 = pneg %p125
      %p307 = pneg %p122
      %p308 = pneg %p146
      %p309 = pneg %p143
      %p310 = pneg %p167
      %p311 = pneg %p164
      %p312 = pneg %p188
      %p313 = pneg %p185
      %p314 = pneg %p209
      %p315 = pneg %p206
      %p316 = pneg %p235
      %p317 = pneg %p232
      %p318 = scmp.lt.s32.totalorder %s20, 1
      %s319 = scalar_select %p318, %s20, 1
      %s320 = smul.addr %s319, 8
      %s321 = smul.addr %s320, 8
      %s322 = scalar_lea.vmem %s9, %s321
      %p323 = scmp.lt.s32.totalorder %s20, 1
      %s324 = scalar_select %p323, %s20, 1
      %s325 = smul.addr %s324, 8
      %s326 = smul.addr %s325, 8
      %s327 = scalar_lea.vmem %s0, %s326
      %p328 = scmp.lt.s32.totalorder %s20, 1
      %s329 = scalar_select %p328, %s20, 1
      %s330 = smul.addr %s329, 8
      %s331 = smul.addr %s330, 8
      %s332 = scalar_lea.vmem %s9, %s331
      %v334 = vld [vmem:[%s327] sm:$0xff]
      %v335 = vld [vmem:[%s327 + $0x8] sm:$0xff]
      %v336 = vld [vmem:[%s327 + $0x10] sm:$0xff]
      %v337 = vld [vmem:[%s327 + $0x18] sm:$0xff]
      %v338 = vld [vmem:[%s327 + $0x20] sm:$0xff]
      %v339 = vld [vmem:[%s327 + $0x28] sm:$0xff]
      %v340 = vld [vmem:[%s327 + $0x30] sm:$0xff]
      %v341 = vld [vmem:[%s327 + $0x38] sm:$0xff]
      %v342 = vpack.c.bf16 %v336, %v334
      %v343 = vpack.c.bf16 %v337, %v335
      %v344 = vpack.c.bf16 %v340, %v338
      %v345 = vpack.c.bf16 %v341, %v339
      %v346 = vld [vmem:[%s1] sm:$0xf]
      %v347 = vld [vmem:[%s1 + $0x4] sm:$0xf]
      %v348 = vld [vmem:[%s1 + $0x8] sm:$0xf]
      %v349 = vld [vmem:[%s1 + $0xc] sm:$0xf]
      %v350 = vld [vmem:[%s1 + $0x10] sm:$0xf]
      %v351 = vld [vmem:[%s1 + $0x14] sm:$0xf]
      %v352 = vld [vmem:[%s1 + $0x18] sm:$0xf]
      %v353 = vld [vmem:[%s1 + $0x1c] sm:$0xf]
      %v362 = vunpack.c.l.b16 %v346
      %v363 = vunpack.c.l.b16 %v347
      %v364 = vunpack.c.l.b16 %v348
      %v365 = vunpack.c.l.b16 %v349
      %v366 = vunpack.c.l.b16 %v350
      %v367 = vunpack.c.l.b16 %v351
      %v368 = vunpack.c.l.b16 %v352
      %v369 = vunpack.c.l.b16 %v353
      %v370 = vpack.c.b16 %v363, %v362
      %v371 = vpack.c.b16 %v365, %v364
      %v372 = vpack.c.b16 %v367, %v366
      %v373 = vpack.c.b16 %v369, %v368
      %vm374 = vcmask 261120
      %v376 = vsel %vm374, %v370, 0
      %v379 = vsel %vm374, %v371, 0
      %v382 = vsel %vm374, %v372, 0
      %v385 = vsel %vm374, %v373, 0
      %387 = vmatprep.subr.bf16.mxu0 %v343
      %388 = vmatpush1.bf16.msra.mxu0 %v342
      %389 = vmatprep.subr.bf16.mxu0 %v345
      %390 = vmatpush1.bf16.msra.mxu0 %v344
      %391 = vmatprep.subr.bf16.mxu0 0
      %392 = vmatpush1.bf16.msra.mxu0 0
      %393 = vmatprep.subr.bf16.mxu0 0
      %394 = vmatpush1.bf16.msra.mxu0 0
      %395 = vmatprep.subr.bf16.mxu0 0
      %396 = vmatpush1.bf16.msra.mxu0 0
      %397 = vmatprep.subr.bf16.mxu0 0
      %398 = vmatpush1.bf16.msra.mxu0 0
      %399 = vmatprep.subr.bf16.mxu0 0
      %400 = vmatpush1.bf16.msra.mxu0 0
      %401 = vmatprep.subr.bf16.mxu0 0
      %402 = vmatpush1.bf16.msra.mxu0 0
      %403 = vmatprep.subr.bf16.mxu0 0
      %404 = vmatpush1.bf16.msra.mxu0 0
      %405 = vmatprep.subr.bf16.mxu0 0
      %406 = vmatpush1.bf16.msra.mxu0 0
      %407 = vmatprep.subr.bf16.mxu0 0
      %408 = vmatpush1.bf16.msra.mxu0 0
      %409 = vmatprep.subr.bf16.mxu0 0
      %410 = vmatpush1.bf16.msra.mxu0 0
      %411 = vmatprep.subr.bf16.mxu0 0
      %412 = vmatpush1.bf16.msra.mxu0 0
      %413 = vmatprep.subr.bf16.mxu0 0
      %414 = vmatpush1.bf16.msra.mxu0 0
      %415 = vmatprep.subr.bf16.mxu0 0
      %416 = vmatpush1.bf16.msra.mxu0 0
      %417 = vmatprep.subr.bf16.mxu0 0
      %418 = vmatpush1.bf16.msra.mxu0 0
      %419 = vmatprep.mubr.bf16.mxu0 0
      %420 = vmatmul.mubr.bf16.gmra.mrb[0].mxu0 %v376
      %v421 = vpop.f32.mrb[0].mxu0
      %v422 = vadd.f32 0.0, %v421
      %v423 = vpop.f32.mrb[0].mxu0
      %v424 = vadd.f32 0.0, %v423
      %v425 = vpop.f32.mrb[0].mxu0
      %v426 = vadd.f32 0.0, %v425
      %v427 = vpop.f32.mrb[0].mxu0
      %v428 = vadd.f32 0.0, %v427
      %429 = vmatprep.mubr.bf16.mxu0 0
      %430 = vmatmul.mubr.bf16.gmra.mrb[0].mxu0 %v379
      %v431 = vpop.f32.mrb[0].mxu0
      %v432 = vadd.f32 0.0, %v431
      %v433 = vpop.f32.mrb[0].mxu0
      %v434 = vadd.f32 0.0, %v433
      %v435 = vpop.f32.mrb[0].mxu0
      %v436 = vadd.f32 0.0, %v435
      %v437 = vpop.f32.mrb[0].mxu0
      %v438 = vadd.f32 0.0, %v437
      %439 = vmatprep.mubr.bf16.mxu0 0
      %440 = vmatmul.mubr.bf16.gmra.mrb[0].mxu0 %v382
      %v441 = vpop.f32.mrb[0].mxu0
      %v442 = vadd.f32 0.0, %v441
      %v443 = vpop.f32.mrb[0].mxu0
      %v444 = vadd.f32 0.0, %v443
      %v445 = vpop.f32.mrb[0].mxu0
      %v446 = vadd.f32 0.0, %v445
      %v447 = vpop.f32.mrb[0].mxu0
      %v448 = vadd.f32 0.0, %v447
      %449 = vmatprep.mubr.bf16.mxu0 0
      %450 = vmatmul.mubr.bf16.gmra.mrb[0].mxu0 %v385
      %v451 = vpop.f32.mrb[0].mxu0
      %v452 = vadd.f32 0.0, %v451
      %v453 = vpop.f32.mrb[0].mxu0
      %v454 = vadd.f32 0.0, %v453
      %v455 = vpop.f32.mrb[0].mxu0
      %v456 = vadd.f32 0.0, %v455
      %v457 = vpop.f32.mrb[0].mxu0
      %v458 = vadd.f32 0.0, %v457
      %459 = vdwg.mxu0
      %v460 = vld [vmem:[%s2] sm:$0xff]
      %v461 = vld [vmem:[%s2 + $0x8] sm:$0xff]
      %v462 = vld [vmem:[%s2 + $0x10] sm:$0xff]
      %v463 = vld [vmem:[%s2 + $0x18] sm:$0xff]
      %v464 = vld [vmem:[%s2 + $0x20] sm:$0xff]
      %v465 = vld [vmem:[%s2 + $0x28] sm:$0xff]
      %v466 = vld [vmem:[%s2 + $0x30] sm:$0xff]
      %v467 = vld [vmem:[%s2 + $0x38] sm:$0xff]
      %469 = vset.pattern.permute.xlu0 0
      %470 = vperm.xlu0 %469, %v460
      %v471 = vpop.permute.xlu0 %470
      %474 = vset.pattern.permute.xlu0 0
      %475 = vperm.xlu0 %474, %v461
      %v476 = vpop.permute.xlu0 %475
      %479 = vset.pattern.permute.xlu0 0
      %480 = vperm.xlu0 %479, %v462
      %v481 = vpop.permute.xlu0 %480
      %484 = vset.pattern.permute.xlu0 0
      %485 = vperm.xlu0 %484, %v463
      %v486 = vpop.permute.xlu0 %485
      %489 = vset.pattern.permute.xlu0 0
      %490 = vperm.xlu0 %489, %v464
      %v491 = vpop.permute.xlu0 %490
      %494 = vset.pattern.permute.xlu0 0
      %495 = vperm.xlu0 %494, %v465
      %v496 = vpop.permute.xlu0 %495
      %499 = vset.pattern.permute.xlu0 0
      %500 = vperm.xlu0 %499, %v466
      %v501 = vpop.permute.xlu0 %500
      %504 = vset.pattern.permute.xlu0 0
      %505 = vperm.xlu0 %504, %v467
      %v506 = vpop.permute.xlu0 %505
      %v508 = vmul.f32 %v422, %v471
      %v509 = vmul.f32 %v424, %v471
      %v510 = vmul.f32 %v426, %v476
      %v511 = vmul.f32 %v428, %v476
      %v512 = vmul.f32 %v432, %v481
      %v513 = vmul.f32 %v434, %v481
      %v514 = vmul.f32 %v436, %v486
      %v515 = vmul.f32 %v438, %v486
      %v516 = vmul.f32 %v442, %v491
      %v517 = vmul.f32 %v444, %v491
      %v518 = vmul.f32 %v446, %v496
      %v519 = vmul.f32 %v448, %v496
      %v520 = vmul.f32 %v452, %v501
      %v521 = vmul.f32 %v454, %v501
      %v522 = vmul.f32 %v456, %v506
      %v523 = vmul.f32 %v458, %v506
      %v524 = vld [vmem:[%s3] sm:$0xff]
      %v525 = vld [vmem:[%s3 + $0x8] sm:$0xff]
      %v526 = vld [vmem:[%s3 + $0x10] sm:$0xff]
      %v527 = vld [vmem:[%s3 + $0x18] sm:$0xff]
      %v528 = vld [vmem:[%s3 + $0x20] sm:$0xff]
      %v529 = vld [vmem:[%s3 + $0x28] sm:$0xff]
      %v530 = vld [vmem:[%s3 + $0x30] sm:$0xff]
      %v531 = vld [vmem:[%s3 + $0x38] sm:$0xff]
      %533 = vset.pattern.permute.xlu0 0
      %534 = vperm.xlu0 %533, %v524
      %v535 = vpop.permute.xlu0 %534
      %538 = vset.pattern.permute.xlu0 0
      %539 = vperm.xlu0 %538, %v525
      %v540 = vpop.permute.xlu0 %539
      %543 = vset.pattern.permute.xlu0 0
      %544 = vperm.xlu0 %543, %v526
      %v545 = vpop.permute.xlu0 %544
      %548 = vset.pattern.permute.xlu0 0
      %549 = vperm.xlu0 %548, %v527
      %v550 = vpop.permute.xlu0 %549
      %553 = vset.pattern.permute.xlu0 0
      %554 = vperm.xlu0 %553, %v528
      %v555 = vpop.permute.xlu0 %554
      %558 = vset.pattern.permute.xlu0 0
      %559 = vperm.xlu0 %558, %v529
      %v560 = vpop.permute.xlu0 %559
      %563 = vset.pattern.permute.xlu0 0
      %564 = vperm.xlu0 %563, %v530
      %v565 = vpop.permute.xlu0 %564
      %568 = vset.pattern.permute.xlu0 0
      %569 = vperm.xlu0 %568, %v531
      %v570 = vpop.permute.xlu0 %569
      %v572 = vadd.f32 %v508, %v535
      %v573 = vadd.f32 %v509, %v535
      %v574 = vadd.f32 %v510, %v540
      %v575 = vadd.f32 %v511, %v540
      %v576 = vadd.f32 %v512, %v545
      %v577 = vadd.f32 %v513, %v545
      %v578 = vadd.f32 %v514, %v550
      %v579 = vadd.f32 %v515, %v550
      %v580 = vadd.f32 %v516, %v555
      %v581 = vadd.f32 %v517, %v555
      %v582 = vadd.f32 %v518, %v560
      %v583 = vadd.f32 %v519, %v560
      %v584 = vadd.f32 %v520, %v565
      %v585 = vadd.f32 %v521, %v565
      %v586 = vadd.f32 %v522, %v570
      %v587 = vadd.f32 %v523, %v570
      %v588 = vxor.u32 %v572, 2147483648
      %v589 = vxor.u32 %v573, 2147483648
      %v590 = vxor.u32 %v574, 2147483648
      %v591 = vxor.u32 %v575, 2147483648
      %v592 = vxor.u32 %v576, 2147483648
      %v593 = vxor.u32 %v577, 2147483648
      %v594 = vxor.u32 %v578, 2147483648
      %v595 = vxor.u32 %v579, 2147483648
      %v596 = vxor.u32 %v580, 2147483648
      %v597 = vxor.u32 %v581, 2147483648
      %v598 = vxor.u32 %v582, 2147483648
      %v599 = vxor.u32 %v583, 2147483648
      %v600 = vxor.u32 %v584, 2147483648
      %v601 = vxor.u32 %v585, 2147483648
      %v602 = vxor.u32 %v586, 2147483648
      %v603 = vxor.u32 %v587, 2147483648
      %v604 = vmul.f32 %v588, 1.442695
      %v605 = vpow.pop %v604
      %v606 = vmul.f32 %v589, 1.442695
      %v607 = vpow.pop %v606
      %v608 = vmul.f32 %v590, 1.442695
      %v609 = vpow.pop %v608
      %v610 = vmul.f32 %v591, 1.442695
      %v611 = vpow.pop %v610
      %v612 = vmul.f32 %v592, 1.442695
      %v613 = vpow.pop %v612
      %v614 = vmul.f32 %v593, 1.442695
      %v615 = vpow.pop %v614
      %v616 = vmul.f32 %v594, 1.442695
      %v617 = vpow.pop %v616
      %v618 = vmul.f32 %v595, 1.442695
      %v619 = vpow.pop %v618
      %v620 = vmul.f32 %v596, 1.442695
      %v621 = vpow.pop %v620
      %v622 = vmul.f32 %v597, 1.442695
      %v623 = vpow.pop %v622
      %v624 = vmul.f32 %v598, 1.442695
      %v625 = vpow.pop %v624
      %v626 = vmul.f32 %v599, 1.442695
      %v627 = vpow.pop %v626
      %v628 = vmul.f32 %v600, 1.442695
      %v629 = vpow.pop %v628
      %v630 = vmul.f32 %v601, 1.442695
      %v631 = vpow.pop %v630
      %v632 = vmul.f32 %v602, 1.442695
      %v633 = vpow.pop %v632
      %v634 = vmul.f32 %v603, 1.442695
      %v635 = vpow.pop %v634
      %v636 = vadd.f32 %v605, 1.0
      %v637 = vadd.f32 %v607, 1.0
      %v638 = vadd.f32 %v609, 1.0
      %v639 = vadd.f32 %v611, 1.0
      %v640 = vadd.f32 %v613, 1.0
      %v641 = vadd.f32 %v615, 1.0
      %v642 = vadd.f32 %v617, 1.0
      %v643 = vadd.f32 %v619, 1.0
      %v644 = vadd.f32 %v621, 1.0
      %v645 = vadd.f32 %v623, 1.0
      %v646 = vadd.f32 %v625, 1.0
      %v647 = vadd.f32 %v627, 1.0
      %v648 = vadd.f32 %v629, 1.0
      %v649 = vadd.f32 %v631, 1.0
      %v650 = vadd.f32 %v633, 1.0
      %v651 = vadd.f32 %v635, 1.0
      %v652 = vrcp.pop %v636
      %v653 = vmul.f32 1.0, %v652
      %v654 = vrcp.pop %v637
      %v655 = vmul.f32 1.0, %v654
      %v656 = vrcp.pop %v638
      %v657 = vmul.f32 1.0, %v656
      %v658 = vrcp.pop %v639
      %v659 = vmul.f32 1.0, %v658
      %v660 = vrcp.pop %v640
      %v661 = vmul.f32 1.0, %v660
      %v662 = vrcp.pop %v641
      %v663 = vmul.f32 1.0, %v662
      %v664 = vrcp.pop %v642
      %v665 = vmul.f32 1.0, %v664
      %v666 = vrcp.pop %v643
      %v667 = vmul.f32 1.0, %v666
      %v668 = vrcp.pop %v644
      %v669 = vmul.f32 1.0, %v668
      %v670 = vrcp.pop %v645
      %v671 = vmul.f32 1.0, %v670
      %v672 = vrcp.pop %v646
      %v673 = vmul.f32 1.0, %v672
      %v674 = vrcp.pop %v647
      %v675 = vmul.f32 1.0, %v674
      %v676 = vrcp.pop %v648
      %v677 = vmul.f32 1.0, %v676
      %v678 = vrcp.pop %v649
      %v679 = vmul.f32 1.0, %v678
      %v680 = vrcp.pop %v650
      %v681 = vmul.f32 1.0, %v680
      %v682 = vrcp.pop %v651
      %v683 = vmul.f32 1.0, %v682
      %v684 = vmul.f32 %v572, %v653
      %v685 = vmul.f32 %v573, %v655
      %v686 = vmul.f32 %v574, %v657
      %v687 = vmul.f32 %v575, %v659
      %v688 = vmul.f32 %v576, %v661
      %v689 = vmul.f32 %v577, %v663
      %v690 = vmul.f32 %v578, %v665
      %v691 = vmul.f32 %v579, %v667
      %v692 = vmul.f32 %v580, %v669
      %v693 = vmul.f32 %v581, %v671
      %v694 = vmul.f32 %v582, %v673
      %v695 = vmul.f32 %v583, %v675
      %v696 = vmul.f32 %v584, %v677
      %v697 = vmul.f32 %v585, %v679
      %v698 = vmul.f32 %v586, %v681
      %v699 = vmul.f32 %v587, %v683
      %700 = vst [vmem:[%s332] sm:$0xff] %v692
      %701 = vst [vmem:[%s332 + $0x8] sm:$0xff] %v693
      %702 = vst [vmem:[%s332 + $0x10] sm:$0xff] %v694
      %703 = vst [vmem:[%s332 + $0x18] sm:$0xff] %v695
      %704 = vst [vmem:[%s332 + $0x20] sm:$0xff] %v696
      %705 = vst [vmem:[%s332 + $0x28] sm:$0xff] %v697
      %706 = vst [vmem:[%s332 + $0x30] sm:$0xff] %v698
      %707 = vst [vmem:[%s332 + $0x38] sm:$0xff] %v699
      %v708 = vadd.f32 %v684, %v685
      %709 = vadd.xlane.f32.xlu0 %v708
      %v710 = vpop.xlane.xlu0 %709
      %v711 = vadd.f32 %v686, %v687
      %712 = vadd.xlane.f32.xlu0 %v711
      %v713 = vpop.xlane.xlu0 %712
      %v714 = vadd.f32 %v688, %v689
      %715 = vadd.xlane.f32.xlu0 %v714
      %v716 = vpop.xlane.xlu0 %715
      %v717 = vadd.f32 %v690, %v691
      %718 = vadd.xlane.f32.xlu0 %v717
      %v719 = vpop.xlane.xlu0 %718
      %v720 = vrcp.pop 256.0
      %v721 = vmul.f32 %v710, %v720
      %v722 = vmul.f32 %v713, %v720
      %v723 = vmul.f32 %v716, %v720
      %v724 = vmul.f32 %v719, %v720
      %v725 = vmax.f32 %v684, %v685
      %726 = vmax.xlane.f32.xlu0 %v725
      %v727 = vpop.xlane.xlu0 %726
      %v728 = vmax.f32 %v686, %v687
      %729 = vmax.xlane.f32.xlu0 %v728
      %v730 = vpop.xlane.xlu0 %729
      %v731 = vmax.f32 %v688, %v689
      %732 = vmax.xlane.f32.xlu0 %v731
      %v733 = vpop.xlane.xlu0 %732
      %v734 = vmax.f32 %v690, %v691
      %735 = vmax.xlane.f32.xlu0 %v734
      %v736 = vpop.xlane.xlu0 %735
      %v737 = vlaneseq
      %v738 = vand.u32 %v737, 127
      %vm739 = vcmp.eq.s32.totalorder %v738, 0
      %v740 = vsel %vm739, %v721, %v727
      %v741 = vsel %vm739, %v722, %v730
      %v742 = vsel %vm739, %v723, %v733
      %v743 = vsel %vm739, %v724, %v736
      %v744 = vpack.c.bf16 %v741, %v740
      %v745 = vpack.c.bf16 %v743, %v742
      %v746 = vld [vmem:[%s6] sm:$0x1]
      %v748 = vsel %vm374, %v746, 0
      %750 = vmatprep.subr.bf16.mxu0 0
      %751 = vmatpush1.bf16.msra.mxu0 %v744
      %752 = vmatprep.subr.bf16.mxu0 0
      %753 = vmatpush1.bf16.msra.mxu0 %v745
      %754 = vmatprep.subr.bf16.mxu0 0
      %755 = vmatpush1.bf16.msra.mxu0 0
      %756 = vmatprep.subr.bf16.mxu0 0
      %757 = vmatpush1.bf16.msra.mxu0 0
      %758 = vmatprep.subr.bf16.mxu0 0
      %759 = vmatpush1.bf16.msra.mxu0 0
      %760 = vmatprep.subr.bf16.mxu0 0
      %761 = vmatpush1.bf16.msra.mxu0 0
      %762 = vmatprep.subr.bf16.mxu0 0
      %763 = vmatpush1.bf16.msra.mxu0 0
      %764 = vmatprep.subr.bf16.mxu0 0
      %765 = vmatpush1.bf16.msra.mxu0 0
      %766 = vmatprep.subr.bf16.mxu0 0
      %767 = vmatpush1.bf16.msra.mxu0 0
      %768 = vmatprep.subr.bf16.mxu0 0
      %769 = vmatpush1.bf16.msra.mxu0 0
      %770 = vmatprep.subr.bf16.mxu0 0
      %771 = vmatpush1.bf16.msra.mxu0 0
      %772 = vmatprep.subr.bf16.mxu0 0
      %773 = vmatpush1.bf16.msra.mxu0 0
      %774 = vmatprep.subr.bf16.mxu0 0
      %775 = vmatpush1.bf16.msra.mxu0 0
      %776 = vmatprep.subr.bf16.mxu0 0
      %777 = vmatpush1.bf16.msra.mxu0 0
      %778 = vmatprep.subr.bf16.mxu0 0
      %779 = vmatpush1.bf16.msra.mxu0 0
      %780 = vmatprep.subr.bf16.mxu0 0
      %781 = vmatpush1.bf16.msra.mxu0 0
      %782 = vmatprep.mubr.bf16.mxu0 0
      %783 = vmatmul.mubr.bf16.gmra.mrb[0].mxu0 %v748
      %v784 = vpop.f32.mrb[0].mxu0
      %v785 = vadd.f32 0.0, %v784
      %v786 = vpop.f32.mrb[0].mxu0
      %v787 = vpop.f32.mrb[0].mxu0
      %v788 = vpop.f32.mrb[0].mxu0
      %789 = vdwg.mxu0
      %v790 = vmax.f32 %v785, 0.0
      %v791 = vld [vmem:[%s7] sm:$0xf]
      %v792 = vld [vmem:[%s7 + $0x4] sm:$0xf]
      %v793 = vld [vmem:[%s7 + $0x8] sm:$0xf]
      %v794 = vld [vmem:[%s7 + $0xc] sm:$0xf]
      %v795 = vpack.c.bf16 %v790, %v790
      %v796 = vld [vmem:[%s8] sm:$0xff]
      %v797 = vld [vmem:[%s8 + $0x8] sm:$0xff]
      %v798 = vld [vmem:[%s8 + $0x10] sm:$0xff]
      %v799 = vld [vmem:[%s8 + $0x18] sm:$0xff]
      %801 = vset.pattern.permute.xlu0 0
      %802 = vperm.xlu0 %801, %v796
      %v803 = vpop.permute.xlu0 %802
      %806 = vset.pattern.permute.xlu0 0
      %807 = vperm.xlu0 %806, %v797
      %v808 = vpop.permute.xlu0 %807
      %811 = vset.pattern.permute.xlu0 0
      %812 = vperm.xlu0 %811, %v798
      %v813 = vpop.permute.xlu0 %812
      %816 = vset.pattern.permute.xlu0 0
      %817 = vperm.xlu0 %816, %v799
      %v818 = vpop.permute.xlu0 %817
      %v824 = vunpack.c.l.b16 %v791
      %v825 = vunpack.c.l.b16 %v792
      %v826 = vunpack.c.l.b16 %v793
      %v827 = vunpack.c.l.b16 %v794
      %v828 = vpack.c.b16 %v825, %v824
      %v829 = vpack.c.b16 %v827, %v826
      %vm830 = vcmask 15360
      %v832 = vsel %vm830, %v828, 0
      %v835 = vsel %vm830, %v829, 0
      %vm837 = vcmask 1040384
      %v839 = vsel %vm837, %v795, 0
      %841 = vmatprep.subr.bf16.mxu0 0
      %842 = vmatpush1.bf16.msra.mxu0 %v839
      %843 = vmatprep.subr.bf16.mxu0 0
      %844 = vmatpush1.bf16.msra.mxu0 0
      %845 = vmatprep.subr.bf16.mxu0 0
      %846 = vmatpush1.bf16.msra.mxu0 0
      %847 = vmatprep.subr.bf16.mxu0 0
      %848 = vmatpush1.bf16.msra.mxu0 0
      %849 = vmatprep.subr.bf16.mxu0 0
      %850 = vmatpush1.bf16.msra.mxu0 0
      %851 = vmatprep.subr.bf16.mxu0 0
      %852 = vmatpush1.bf16.msra.mxu0 0
      %853 = vmatprep.subr.bf16.mxu0 0
      %854 = vmatpush1.bf16.msra.mxu0 0
      %855 = vmatprep.subr.bf16.mxu0 0
      %856 = vmatpush1.bf16.msra.mxu0 0
      %857 = vmatprep.subr.bf16.mxu0 0
      %858 = vmatpush1.bf16.msra.mxu0 0
      %859 = vmatprep.subr.bf16.mxu0 0
      %860 = vmatpush1.bf16.msra.mxu0 0
      %861 = vmatprep.subr.bf16.mxu0 0
      %862 = vmatpush1.bf16.msra.mxu0 0
      %863 = vmatprep.subr.bf16.mxu0 0
      %864 = vmatpush1.bf16.msra.mxu0 0
      %865 = vmatprep.subr.bf16.mxu0 0
      %866 = vmatpush1.bf16.msra.mxu0 0
      %867 = vmatprep.subr.bf16.mxu0 0
      %868 = vmatpush1.bf16.msra.mxu0 0
      %869 = vmatprep.subr.bf16.mxu0 0
      %870 = vmatpush1.bf16.msra.mxu0 0
      %871 = vmatprep.subr.bf16.mxu0 0
      %872 = vmatpush1.bf16.msra.mxu0 0
      %873 = vmatprep.mubr.bf16.mxu0 0
      %874 = vmatmul.mubr.bf16.gmra.mrb[0].mxu0 %v832
      %v875 = vpop.f32.mrb[0].mxu0
      %v876 = vadd.f32 %v803, %v875
      %v877 = vpop.f32.mrb[0].mxu0
      %v878 = vpop.f32.mrb[0].mxu0
      %v879 = vadd.f32 %v808, %v878
      %v880 = vpop.f32.mrb[0].mxu0
      %881 = vmatprep.mubr.bf16.mxu0 0
      %882 = vmatmul.mubr.bf16.gmra.mrb[0].mxu0 %v835
      %v883 = vpop.f32.mrb[0].mxu0
      %v884 = vadd.f32 %v813, %v883
      %v885 = vpop.f32.mrb[0].mxu0
      %v886 = vpop.f32.mrb[0].mxu0
      %v887 = vadd.f32 %v818, %v886
      %v888 = vpop.f32.mrb[0].mxu0
      %889 = vdwg.mxu0
      %v890 = vsel %vm830, %v876, 0.0
      %891 = vadd.xlane.f32.xlu0 %v890
      %v892 = vpop.xlane.xlu0 %891
      %v893 = vsel %vm830, %v879, 0.0
      %894 = vadd.xlane.f32.xlu0 %v893
      %v895 = vpop.xlane.xlu0 %894
      %v896 = vsel %vm830, %v884, 0.0
      %897 = vadd.xlane.f32.xlu0 %v896
      %v898 = vpop.xlane.xlu0 %897
      %v899 = vsel %vm830, %v887, 0.0
      %900 = vadd.xlane.f32.xlu0 %v899
      %v901 = vpop.xlane.xlu0 %900
      %v902 = vxor.u32 %v892, 2147483648
      %v903 = vxor.u32 %v895, 2147483648
      %v904 = vxor.u32 %v898, 2147483648
      %v905 = vxor.u32 %v901, 2147483648
      %v906 = vmul.f32 %v902, 1.442695
      %v907 = vpow.pop %v906
      %v908 = vmul.f32 %v903, 1.442695
      %v909 = vpow.pop %v908
      %v910 = vmul.f32 %v904, 1.442695
      %v911 = vpow.pop %v910
      %v912 = vmul.f32 %v905, 1.442695
      %v913 = vpow.pop %v912
      %v914 = vadd.f32 %v907, 1.0
      %v915 = vadd.f32 %v909, 1.0
      %v916 = vadd.f32 %v911, 1.0
      %v917 = vadd.f32 %v913, 1.0
      %v918 = vrcp.pop %v914
      %v919 = vmul.f32 1.0, %v918
      %v920 = vrcp.pop %v915
      %v921 = vmul.f32 1.0, %v920
      %v922 = vrcp.pop %v916
      %v923 = vmul.f32 1.0, %v922
      %v924 = vrcp.pop %v917
      %v925 = vmul.f32 1.0, %v924
      %926 = vst [vmem:[#allocation2] sm:$0xff] 0.0
      %927 = vst [vmem:[#allocation2 + $0x20] sm:$0xff] 0.0
      %928 = vst [vmem:[#allocation2 + $0x40] sm:$0xff] 0.0
      %929 = vst [vmem:[#allocation2 + $0x60] sm:$0xff] 0.0
      %930 = vst [vmem:[#allocation2 + $0x18] sm:$0xff] 0.0
      %931 = vst [vmem:[#allocation2 + $0x38] sm:$0xff] 0.0
      %932 = vst [vmem:[#allocation2 + $0x58] sm:$0xff] 0.0
      %933 = vst [vmem:[#allocation2 + $0x78] sm:$0xff] 0.0
      %v934 = vadd.s32 %v738, 128
      %vm935 = vcmp.lt.s32.totalorder %v738, 0
      %v936 = vsub.s32 0, %v738
      %v937 = vsel %vm935, %v936, %v738
      %v938 = vshrl.u32 %v937, 4
      %v939 = vand.u32 %v937, 15
      %v940 = vsub.s32 0, %v939
      %v941 = vsel %vm935, %v940, %v939
      %vm942 = vcmp.lt.s32.totalorder %v934, 0
      %v943 = vsub.s32 0, %v934
      %v944 = vsel %vm942, %v943, %v934
      %v945 = vshrl.u32 %v944, 4
      %v946 = vand.u32 %v944, 15
      %v947 = vsub.s32 0, %v946
      %v948 = vsel %vm942, %v947, %v946
      %vm949 = vcmp.ne.s32.totalorder %v941, 0
      %vm950 = vcmp.ne.s32.totalorder %v948, 0
      %vm951 = vcmp.lt.s32.totalorder %v941, 0
      %vm952 = vcmp.lt.s32.totalorder %v948, 0
      %vm953 = vmand %vm951, %vm949
      %vm954 = vmand %vm952, %vm950
      %v955 = vadd.s32 %v941, 16
      %v956 = vadd.s32 %v948, 16
      %v957 = vsel %vm953, %v955, %v941
      %v958 = vsel %vm954, %v956, %v948
      %959 = vst [vmem:[#allocation2 + $0x8] sm:$0xff] %v684
      %960 = vst [vmem:[#allocation2 + $0x10] sm:$0xff] %v685
      %961 = vst [vmem:[#allocation2 + $0x28] sm:$0xff] %v686
      %962 = vst [vmem:[#allocation2 + $0x30] sm:$0xff] %v687
      %963 = vst [vmem:[#allocation2 + $0x48] sm:$0xff] %v688
      %964 = vst [vmem:[#allocation2 + $0x50] sm:$0xff] %v689
      %965 = vst [vmem:[#allocation2 + $0x68] sm:$0xff] %v690
      %966 = vst [vmem:[#allocation2 + $0x70] sm:$0xff] %v691
      %v967 = vld [vmem:[#allocation2] sm:$0xff]
      %v968 = vld [vmem:[#allocation2 + $0x8] sm:$0xff]
      %v969 = vld [vmem:[#allocation2 + $0x10] sm:$0xff]
      %v970 = vld [vmem:[#allocation2 + $0x20] sm:$0xff]
      %v971 = vld [vmem:[#allocation2 + $0x28] sm:$0xff]
      %v972 = vld [vmem:[#allocation2 + $0x30] sm:$0xff]
      %v973 = vld [vmem:[#allocation2 + $0x40] sm:$0xff]
      %v974 = vld [vmem:[#allocation2 + $0x48] sm:$0xff]
      %v975 = vld [vmem:[#allocation2 + $0x50] sm:$0xff]
      %v976 = vld [vmem:[#allocation2 + $0x60] sm:$0xff]
      %v977 = vld [vmem:[#allocation2 + $0x68] sm:$0xff]
      %v978 = vld [vmem:[#allocation2 + $0x70] sm:$0xff]
      %v979 = vadd.s32 %v957, 4294967295
      %v980 = vadd.s32 %v958, 4294967295
      %vm981 = vcmp.ge.s32.totalorder %v979, 0
      %vm982 = vcmp.ge.s32.totalorder %v980, 0
      %vm983 = vcmp.lt.s32.totalorder %v979, 16
      %vm984 = vcmp.lt.s32.totalorder %v980, 16
      %vm985 = vmand %vm981, %vm983
      %vm986 = vmand %vm982, %vm984
      %999 = vrot.lane.b32.xlu0 %v967, 17
      %v1000 = vpop.permute.xlu0 %999
      %1001 = vrot.lane.b32.xlu0 %v968, 17
      %v1002 = vpop.permute.xlu0 %1001
      %1003 = vrot.lane.b32.xlu0 %v969, 17
      %v1004 = vpop.permute.xlu0 %1003
      %1005 = vrot.lane.b32.xlu0 %v970, 17
      %v1006 = vpop.permute.xlu0 %1005
      %1007 = vrot.lane.b32.xlu0 %v971, 17
      %v1008 = vpop.permute.xlu0 %1007
      %1009 = vrot.lane.b32.xlu0 %v972, 17
      %v1010 = vpop.permute.xlu0 %1009
      %1011 = vrot.lane.b32.xlu0 %v973, 17
      %v1012 = vpop.permute.xlu0 %1011
      %1013 = vrot.lane.b32.xlu0 %v974, 17
      %v1014 = vpop.permute.xlu0 %1013
      %1015 = vrot.lane.b32.xlu0 %v975, 17
      %v1016 = vpop.permute.xlu0 %1015
      %1017 = vrot.lane.b32.xlu0 %v976, 17
      %v1018 = vpop.permute.xlu0 %1017
      %1019 = vrot.lane.b32.xlu0 %v977, 17
      %v1020 = vpop.permute.xlu0 %1019
      %1021 = vrot.lane.b32.xlu0 %v978, 17
      %v1022 = vpop.permute.xlu0 %1021
      %vm1023 = vcmask 138240
      %v1024 = vsel %vm1023, %v1000, %v1002
      %v1025 = vsel %vm1023, %v1002, %v1004
      %v1026 = vsel %vm1023, %v1006, %v1008
      %v1027 = vsel %vm1023, %v1008, %v1010
      %v1028 = vsel %vm1023, %v1012, %v1014
      %v1029 = vsel %vm1023, %v1014, %v1016
      %v1030 = vsel %vm1023, %v1018, %v1020
      %v1031 = vsel %vm1023, %v1020, %v1022
      %v1040 = vsel %vm985, %v1024, 0.0
      %v1041 = vsel %vm986, %v1025, 0.0
      %v1042 = vsel %vm985, %v1026, 0.0
      %v1043 = vsel %vm986, %v1027, 0.0
      %v1044 = vsel %vm985, %v1028, 0.0
      %v1045 = vsel %vm986, %v1029, 0.0
      %v1046 = vsel %vm985, %v1030, 0.0
      %v1047 = vsel %vm986, %v1031, 0.0
      %v1048 = vpack.c.bf16 %v1042, %v1040
      %v1049 = vpack.c.bf16 %v1043, %v1041
      %v1050 = vpack.c.bf16 %v1046, %v1044
      %v1051 = vpack.c.bf16 %v1047, %v1045
      %1052 = vst [vmem:[#allocation3] sm:$0xff] %v1048
      %1053 = vst [vmem:[#allocation3 + $0x8] sm:$0xff] %v1049
      %1054 = vst [vmem:[#allocation3 + $0x10] sm:$0xff] %v1050
      %1055 = vst [vmem:[#allocation3 + $0x18] sm:$0xff] %v1051
      %v1056 = vld [vmem:[#allocation2] sm:$0xff]
      %v1057 = vld [vmem:[#allocation2 + $0x8] sm:$0xff]
      %v1058 = vld [vmem:[#allocation2 + $0x10] sm:$0xff]
      %v1059 = vld [vmem:[#allocation2 + $0x20] sm:$0xff]
      %v1060 = vld [vmem:[#allocation2 + $0x28] sm:$0xff]
      %v1061 = vld [vmem:[#allocation2 + $0x30] sm:$0xff]
      %v1062 = vld [vmem:[#allocation2 + $0x40] sm:$0xff]
      %v1063 = vld [vmem:[#allocation2 + $0x48] sm:$0xff]
      %v1064 = vld [vmem:[#allocation2 + $0x50] sm:$0xff]
      %v1065 = vld [vmem:[#allocation2 + $0x60] sm:$0xff]
      %v1066 = vld [vmem:[#allocation2 + $0x68] sm:$0xff]
      %v1067 = vld [vmem:[#allocation2 + $0x70] sm:$0xff]
      %v1068 = vpack.c.bf16 %v1059, %v1056
      %v1069 = vpack.c.bf16 %v1060, %v1057
      %v1070 = vpack.c.bf16 %v1061, %v1058
      %v1071 = vpack.c.bf16 %v1065, %v1062
      %v1072 = vpack.c.bf16 %v1066, %v1063
      %v1073 = vpack.c.bf16 %v1067, %v1064
      %1080 = vrot.lane.b32.xlu0 %v1068, 16
      %v1081 = vpop.permute.xlu0 %1080
      %1082 = vrot.lane.b32.xlu0 %v1069, 16
      %v1083 = vpop.permute.xlu0 %1082
      %1084 = vrot.lane.b32.xlu0 %v1070, 16
      %v1085 = vpop.permute.xlu0 %1084
      %1086 = vrot.lane.b32.xlu0 %v1071, 16
      %v1087 = vpop.permute.xlu0 %1086
      %1088 = vrot.lane.b32.xlu0 %v1072, 16
      %v1089 = vpop.permute.xlu0 %1088
      %1090 = vrot.lane.b32.xlu0 %v1073, 16
      %v1091 = vpop.permute.xlu0 %1090
      %vm1092 = vcmask 130048
      %v1093 = vsel %vm1092, %v1081, %v1083
      %v1094 = vsel %vm1092, %v1083, %v1085
      %v1095 = vsel %vm1092, %v1087, %v1089
      %v1096 = vsel %vm1092, %v1089, %v1091
      %1101 = vst [vmem:[#allocation3 + $0x20] sm:$0xff] %v1093
      %1102 = vst [vmem:[#allocation3 + $0x28] sm:$0xff] %v1094
      %1103 = vst [vmem:[#allocation3 + $0x30] sm:$0xff] %v1095
      %1104 = vst [vmem:[#allocation3 + $0x38] sm:$0xff] %v1096
      %v1105 = vld [vmem:[#allocation2] sm:$0xff]
      %v1106 = vld [vmem:[#allocation2 + $0x8] sm:$0xff]
      %v1107 = vld [vmem:[#allocation2 + $0x10] sm:$0xff]
      %v1108 = vld [vmem:[#allocation2 + $0x20] sm:$0xff]
      %v1109 = vld [vmem:[#allocation2 + $0x28] sm:$0xff]
      %v1110 = vld [vmem:[#allocation2 + $0x30] sm:$0xff]
      %v1111 = vld [vmem:[#allocation2 + $0x40] sm:$0xff]
      %v1112 = vld [vmem:[#allocation2 + $0x48] sm:$0xff]
      %v1113 = vld [vmem:[#allocation2 + $0x50] sm:$0xff]
      %v1114 = vld [vmem:[#allocation2 + $0x60] sm:$0xff]
      %v1115 = vld [vmem:[#allocation2 + $0x68] sm:$0xff]
      %v1116 = vld [vmem:[#allocation2 + $0x70] sm:$0xff]
      %v1117 = vadd.s32 %v957, 1
      %v1118 = vadd.s32 %v958, 1
      %vm1119 = vcmp.ge.s32.totalorder %v1117, 0
      %vm1120 = vcmp.ge.s32.totalorder %v1118, 0
      %vm1121 = vcmp.lt.s32.totalorder %v1117, 16
      %vm1122 = vcmp.lt.s32.totalorder %v1118, 16
      %vm1123 = vmand %vm1119, %vm1121
      %vm1124 = vmand %vm1120, %vm1122
      %1137 = vrot.lane.b32.xlu0 %v1105, 15
      %v1138 = vpop.permute.xlu0 %1137
      %1139 = vrot.lane.b32.xlu0 %v1106, 15
      %v1140 = vpop.permute.xlu0 %1139
      %1141 = vrot.lane.b32.xlu0 %v1107, 15
      %v1142 = vpop.permute.xlu0 %1141
      %1143 = vrot.lane.b32.xlu0 %v1108, 15
      %v1144 = vpop.permute.xlu0 %1143
      %1145 = vrot.lane.b32.xlu0 %v1109, 15
      %v1146 = vpop.permute.xlu0 %1145
      %1147 = vrot.lane.b32.xlu0 %v1110, 15
      %v1148 = vpop.permute.xlu0 %1147
      %1149 = vrot.lane.b32.xlu0 %v1111, 15
      %v1150 = vpop.permute.xlu0 %1149
      %1151 = vrot.lane.b32.xlu0 %v1112, 15
      %v1152 = vpop.permute.xlu0 %1151
      %1153 = vrot.lane.b32.xlu0 %v1113, 15
      %v1154 = vpop.permute.xlu0 %1153
      %1155 = vrot.lane.b32.xlu0 %v1114, 15
      %v1156 = vpop.permute.xlu0 %1155
      %1157 = vrot.lane.b32.xlu0 %v1115, 15
      %v1158 = vpop.permute.xlu0 %1157
      %1159 = vrot.lane.b32.xlu0 %v1116, 15
      %v1160 = vpop.permute.xlu0 %1159
      %vm1161 = vcmask 121856
      %v1162 = vsel %vm1161, %v1138, %v1140
      %v1163 = vsel %vm1161, %v1140, %v1142
      %v1164 = vsel %vm1161, %v1144, %v1146
      %v1165 = vsel %vm1161, %v1146, %v1148
      %v1166 = vsel %vm1161, %v1150, %v1152
      %v1167 = vsel %vm1161, %v1152, %v1154
      %v1168 = vsel %vm1161, %v1156, %v1158
      %v1169 = vsel %vm1161, %v1158, %v1160
      %v1178 = vsel %vm1123, %v1162, 0.0
      %v1179 = vsel %vm1124, %v1163, 0.0
      %v1180 = vsel %vm1123, %v1164, 0.0
      %v1181 = vsel %vm1124, %v1165, 0.0
      %v1182 = vsel %vm1123, %v1166, 0.0
      %v1183 = vsel %vm1124, %v1167, 0.0
      %v1184 = vsel %vm1123, %v1168, 0.0
      %v1185 = vsel %vm1124, %v1169, 0.0
      %v1186 = vpack.c.bf16 %v1180, %v1178
      %v1187 = vpack.c.bf16 %v1181, %v1179
      %v1188 = vpack.c.bf16 %v1184, %v1182
      %v1189 = vpack.c.bf16 %v1185, %v1183
      %1190 = vst [vmem:[#allocation3 + $0x40] sm:$0xff] %v1186
      %1191 = vst [vmem:[#allocation3 + $0x48] sm:$0xff] %v1187
      %1192 = vst [vmem:[#allocation3 + $0x50] sm:$0xff] %v1188
      %1193 = vst [vmem:[#allocation3 + $0x58] sm:$0xff] %v1189
      %v1194 = vld [vmem:[#allocation2] sm:$0xff]
      %v1195 = vld [vmem:[#allocation2 + $0x8] sm:$0xff]
      %v1196 = vld [vmem:[#allocation2 + $0x10] sm:$0xff]
      %v1197 = vld [vmem:[#allocation2 + $0x20] sm:$0xff]
      %v1198 = vld [vmem:[#allocation2 + $0x28] sm:$0xff]
      %v1199 = vld [vmem:[#allocation2 + $0x30] sm:$0xff]
      %v1200 = vld [vmem:[#allocation2 + $0x40] sm:$0xff]
      %v1201 = vld [vmem:[#allocation2 + $0x48] sm:$0xff]
      %v1202 = vld [vmem:[#allocation2 + $0x50] sm:$0xff]
      %v1203 = vld [vmem:[#allocation2 + $0x60] sm:$0xff]
      %v1204 = vld [vmem:[#allocation2 + $0x68] sm:$0xff]
      %v1205 = vld [vmem:[#allocation2 + $0x70] sm:$0xff]
      %1218 = vrot.lane.b32.xlu0 %v1194, 1
      %v1219 = vpop.permute.xlu0 %1218
      %1220 = vrot.lane.b32.xlu0 %v1195, 1
      %v1221 = vpop.permute.xlu0 %1220
      %1222 = vrot.lane.b32.xlu0 %v1196, 1
      %v1223 = vpop.permute.xlu0 %1222
      %1224 = vrot.lane.b32.xlu0 %v1197, 1
      %v1225 = vpop.permute.xlu0 %1224
      %1226 = vrot.lane.b32.xlu0 %v1198, 1
      %v1227 = vpop.permute.xlu0 %1226
      %1228 = vrot.lane.b32.xlu0 %v1199, 1
      %v1229 = vpop.permute.xlu0 %1228
      %1230 = vrot.lane.b32.xlu0 %v1200, 1
      %v1231 = vpop.permute.xlu0 %1230
      %1232 = vrot.lane.b32.xlu0 %v1201, 1
      %v1233 = vpop.permute.xlu0 %1232
      %1234 = vrot.lane.b32.xlu0 %v1202, 1
      %v1235 = vpop.permute.xlu0 %1234
      %1236 = vrot.lane.b32.xlu0 %v1203, 1
      %v1237 = vpop.permute.xlu0 %1236
      %1238 = vrot.lane.b32.xlu0 %v1204, 1
      %v1239 = vpop.permute.xlu0 %1238
      %1240 = vrot.lane.b32.xlu0 %v1205, 1
      %v1241 = vpop.permute.xlu0 %1240
      %vm1242 = vcmask 7168
      %v1243 = vsel %vm1242, %v1219, %v1221
      %v1244 = vsel %vm1242, %v1221, %v1223
      %v1245 = vsel %vm1242, %v1225, %v1227
      %v1246 = vsel %vm1242, %v1227, %v1229
      %v1247 = vsel %vm1242, %v1231, %v1233
      %v1248 = vsel %vm1242, %v1233, %v1235
      %v1249 = vsel %vm1242, %v1237, %v1239
      %v1250 = vsel %vm1242, %v1239, %v1241
      %v1259 = vsel %vm985, %v1243, 0.0
      %v1260 = vsel %vm986, %v1244, 0.0
      %v1261 = vsel %vm985, %v1245, 0.0
      %v1262 = vsel %vm986, %v1246, 0.0
      %v1263 = vsel %vm985, %v1247, 0.0
      %v1264 = vsel %vm986, %v1248, 0.0
      %v1265 = vsel %vm985, %v1249, 0.0
      %v1266 = vsel %vm986, %v1250, 0.0
      %v1267 = vpack.c.bf16 %v1261, %v1259
      %v1268 = vpack.c.bf16 %v1262, %v1260
      %v1269 = vpack.c.bf16 %v1265, %v1263
      %v1270 = vpack.c.bf16 %v1266, %v1264
      %1271 = vst [vmem:[#allocation3 + $0x60] sm:$0xff] %v1267
      %1272 = vst [vmem:[#allocation3 + $0x68] sm:$0xff] %v1268
      %1273 = vst [vmem:[#allocation3 + $0x70] sm:$0xff] %v1269
      %1274 = vst [vmem:[#allocation3 + $0x78] sm:$0xff] %v1270
      %v1275 = vld [vmem:[#allocation2 + $0x8] sm:$0xff]
      %v1276 = vld [vmem:[#allocation2 + $0x10] sm:$0xff]
      %v1277 = vld [vmem:[#allocation2 + $0x28] sm:$0xff]
      %v1278 = vld [vmem:[#allocation2 + $0x30] sm:$0xff]
      %v1279 = vld [vmem:[#allocation2 + $0x48] sm:$0xff]
      %v1280 = vld [vmem:[#allocation2 + $0x50] sm:$0xff]
      %v1281 = vld [vmem:[#allocation2 + $0x68] sm:$0xff]
      %v1282 = vld [vmem:[#allocation2 + $0x70] sm:$0xff]
      %v1283 = vpack.c.bf16 %v1277, %v1275
      %v1284 = vpack.c.bf16 %v1278, %v1276
      %v1285 = vpack.c.bf16 %v1281, %v1279
      %v1286 = vpack.c.bf16 %v1282, %v1280
      %1287 = vst [vmem:[#allocation3 + $0x80] sm:$0xff] %v1283
      %1288 = vst [vmem:[#allocation3 + $0x88] sm:$0xff] %v1284
      %1289 = vst [vmem:[#allocation3 + $0x90] sm:$0xff] %v1285
      %1290 = vst [vmem:[#allocation3 + $0x98] sm:$0xff] %v1286
      %v1291 = vld [vmem:[#allocation2 + $0x8] sm:$0xff]
      %v1292 = vld [vmem:[#allocation2 + $0x10] sm:$0xff]
      %v1293 = vld [vmem:[#allocation2 + $0x18] sm:$0xff]
      %v1294 = vld [vmem:[#allocation2 + $0x28] sm:$0xff]
      %v1295 = vld [vmem:[#allocation2 + $0x30] sm:$0xff]
      %v1296 = vld [vmem:[#allocation2 + $0x38] sm:$0xff]
      %v1297 = vld [vmem:[#allocation2 + $0x48] sm:$0xff]
      %v1298 = vld [vmem:[#allocation2 + $0x50] sm:$0xff]
      %v1299 = vld [vmem:[#allocation2 + $0x58] sm:$0xff]
      %v1300 = vld [vmem:[#allocation2 + $0x68] sm:$0xff]
      %v1301 = vld [vmem:[#allocation2 + $0x70] sm:$0xff]
      %v1302 = vld [vmem:[#allocation2 + $0x78] sm:$0xff]
      %1315 = vrot.lane.b32.xlu0 %v1291, 127
      %v1316 = vpop.permute.xlu0 %1315
      %1317 = vrot.lane.b32.xlu0 %v1292, 127
      %v1318 = vpop.permute.xlu0 %1317
      %1319 = vrot.lane.b32.xlu0 %v1293, 127
      %v1320 = vpop.permute.xlu0 %1319
      %1321 = vrot.lane.b32.xlu0 %v1294, 127
      %v1322 = vpop.permute.xlu0 %1321
      %1323 = vrot.lane.b32.xlu0 %v1295, 127
      %v1324 = vpop.permute.xlu0 %1323
      %1325 = vrot.lane.b32.xlu0 %v1296, 127
      %v1326 = vpop.permute.xlu0 %1325
      %1327 = vrot.lane.b32.xlu0 %v1297, 127
      %v1328 = vpop.permute.xlu0 %1327
      %1329 = vrot.lane.b32.xlu0 %v1298, 127
      %v1330 = vpop.permute.xlu0 %1329
      %1331 = vrot.lane.b32.xlu0 %v1299, 127
      %v1332 = vpop.permute.xlu0 %1331
      %1333 = vrot.lane.b32.xlu0 %v1300, 127
      %v1334 = vpop.permute.xlu0 %1333
      %1335 = vrot.lane.b32.xlu0 %v1301, 127
      %v1336 = vpop.permute.xlu0 %1335
      %1337 = vrot.lane.b32.xlu0 %v1302, 127
      %v1338 = vpop.permute.xlu0 %1337
      %vm1339 = vcmask 1039360
      %v1340 = vsel %vm1339, %v1316, %v1318
      %v1341 = vsel %vm1339, %v1318, %v1320
      %v1342 = vsel %vm1339, %v1322, %v1324
      %v1343 = vsel %vm1339, %v1324, %v1326
      %v1344 = vsel %vm1339, %v1328, %v1330
      %v1345 = vsel %vm1339, %v1330, %v1332
      %v1346 = vsel %vm1339, %v1334, %v1336
      %v1347 = vsel %vm1339, %v1336, %v1338
      %v1356 = vsel %vm1123, %v1340, 0.0
      %v1357 = vsel %vm1124, %v1341, 0.0
      %v1358 = vsel %vm1123, %v1342, 0.0
      %v1359 = vsel %vm1124, %v1343, 0.0
      %v1360 = vsel %vm1123, %v1344, 0.0
      %v1361 = vsel %vm1124, %v1345, 0.0
      %v1362 = vsel %vm1123, %v1346, 0.0
      %v1363 = vsel %vm1124, %v1347, 0.0
      %v1364 = vpack.c.bf16 %v1358, %v1356
      %v1365 = vpack.c.bf16 %v1359, %v1357
      %v1366 = vpack.c.bf16 %v1362, %v1360
      %v1367 = vpack.c.bf16 %v1363, %v1361
      %1368 = vst [vmem:[#allocation3 + $0xa0] sm:$0xff] %v1364
      %1369 = vst [vmem:[#allocation3 + $0xa8] sm:$0xff] %v1365
      %1370 = vst [vmem:[#allocation3 + $0xb0] sm:$0xff] %v1366
      %1371 = vst [vmem:[#allocation3 + $0xb8] sm:$0xff] %v1367
      %v1372 = vld [vmem:[#allocation2 + $0x8] sm:$0xff]
      %v1373 = vld [vmem:[#allocation2 + $0x10] sm:$0xff]
      %v1374 = vld [vmem:[#allocation2 + $0x18] sm:$0xff]
      %v1375 = vld [vmem:[#allocation2 + $0x28] sm:$0xff]
      %v1376 = vld [vmem:[#allocation2 + $0x30] sm:$0xff]
      %v1377 = vld [vmem:[#allocation2 + $0x38] sm:$0xff]
      %v1378 = vld [vmem:[#allocation2 + $0x48] sm:$0xff]
      %v1379 = vld [vmem:[#allocation2 + $0x50] sm:$0xff]
      %v1380 = vld [vmem:[#allocation2 + $0x58] sm:$0xff]
      %v1381 = vld [vmem:[#allocation2 + $0x68] sm:$0xff]
      %v1382 = vld [vmem:[#allocation2 + $0x70] sm:$0xff]
      %v1383 = vld [vmem:[#allocation2 + $0x78] sm:$0xff]
      %1396 = vrot.lane.b32.xlu0 %v1372, 113
      %v1397 = vpop.permute.xlu0 %1396
      %1398 = vrot.lane.b32.xlu0 %v1373, 113
      %v1399 = vpop.permute.xlu0 %1398
      %1400 = vrot.lane.b32.xlu0 %v1374, 113
      %v1401 = vpop.permute.xlu0 %1400
      %1402 = vrot.lane.b32.xlu0 %v1375, 113
      %v1403 = vpop.permute.xlu0 %1402
      %1404 = vrot.lane.b32.xlu0 %v1376, 113
      %v1405 = vpop.permute.xlu0 %1404
      %1406 = vrot.lane.b32.xlu0 %v1377, 113
      %v1407 = vpop.permute.xlu0 %1406
      %1408 = vrot.lane.b32.xlu0 %v1378, 113
      %v1409 = vpop.permute.xlu0 %1408
      %1410 = vrot.lane.b32.xlu0 %v1379, 113
      %v1411 = vpop.permute.xlu0 %1410
      %1412 = vrot.lane.b32.xlu0 %v1380, 113
      %v1413 = vpop.permute.xlu0 %1412
      %1414 = vrot.lane.b32.xlu0 %v1381, 113
      %v1415 = vpop.permute.xlu0 %1414
      %1416 = vrot.lane.b32.xlu0 %v1382, 113
      %v1417 = vpop.permute.xlu0 %1416
      %1418 = vrot.lane.b32.xlu0 %v1383, 113
      %v1419 = vpop.permute.xlu0 %1418
      %vm1420 = vcmask 924672
      %v1421 = vsel %vm1420, %v1397, %v1399
      %v1422 = vsel %vm1420, %v1399, %v1401
      %v1423 = vsel %vm1420, %v1403, %v1405
      %v1424 = vsel %vm1420, %v1405, %v1407
      %v1425 = vsel %vm1420, %v1409, %v1411
      %v1426 = vsel %vm1420, %v1411, %v1413
      %v1427 = vsel %vm1420, %v1415, %v1417
      %v1428 = vsel %vm1420, %v1417, %v1419
      %v1437 = vsel %vm985, %v1421, 0.0
      %v1438 = vsel %vm986, %v1422, 0.0
      %v1439 = vsel %vm985, %v1423, 0.0
      %v1440 = vsel %vm986, %v1424, 0.0
      %v1441 = vsel %vm985, %v1425, 0.0
      %v1442 = vsel %vm986, %v1426, 0.0
      %v1443 = vsel %vm985, %v1427, 0.0
      %v1444 = vsel %vm986, %v1428, 0.0
      %v1445 = vpack.c.bf16 %v1439, %v1437
      %v1446 = vpack.c.bf16 %v1440, %v1438
      %v1447 = vpack.c.bf16 %v1443, %v1441
      %v1448 = vpack.c.bf16 %v1444, %v1442
      %1449 = vst [vmem:[#allocation3 + $0xc0] sm:$0xff] %v1445
      %1450 = vst [vmem:[#allocation3 + $0xc8] sm:$0xff] %v1446
      %1451 = vst [vmem:[#allocation3 + $0xd0] sm:$0xff] %v1447
      %1452 = vst [vmem:[#allocation3 + $0xd8] sm:$0xff] %v1448
      %v1453 = vld [vmem:[#allocation2 + $0x8] sm:$0xff]
      %v1454 = vld [vmem:[#allocation2 + $0x10] sm:$0xff]
      %v1455 = vld [vmem:[#allocation2 + $0x18] sm:$0xff]
      %v1456 = vld [vmem:[#allocation2 + $0x28] sm:$0xff]
      %v1457 = vld [vmem:[#allocation2 + $0x30] sm:$0xff]
      %v1458 = vld [vmem:[#allocation2 + $0x38] sm:$0xff]
      %v1459 = vld [vmem:[#allocation2 + $0x48] sm:$0xff]
      %v1460 = vld [vmem:[#allocation2 + $0x50] sm:$0xff]
      %v1461 = vld [vmem:[#allocation2 + $0x58] sm:$0xff]
      %v1462 = vld [vmem:[#allocation2 + $0x68] sm:$0xff]
      %v1463 = vld [vmem:[#allocation2 + $0x70] sm:$0xff]
      %v1464 = vld [vmem:[#allocation2 + $0x78] sm:$0xff]
      %v1465 = vpack.c.bf16 %v1456, %v1453
      %v1466 = vpack.c.bf16 %v1457, %v1454
      %v1467 = vpack.c.bf16 %v1458, %v1455
      %v1468 = vpack.c.bf16 %v1462, %v1459
      %v1469 = vpack.c.bf16 %v1463, %v1460
      %v1470 = vpack.c.bf16 %v1464, %v1461
      %1477 = vrot.lane.b32.xlu0 %v1465, 112
      %v1478 = vpop.permute.xlu0 %1477
      %1479 = vrot.lane.b32.xlu0 %v1466, 112
      %v1480 = vpop.permute.xlu0 %1479
      %1481 = vrot.lane.b32.xlu0 %v1467, 112
      %v1482 = vpop.permute.xlu0 %1481
      %1483 = vrot.lane.b32.xlu0 %v1468, 112
      %v1484 = vpop.permute.xlu0 %1483
      %1485 = vrot.lane.b32.xlu0 %v1469, 112
      %v1486 = vpop.permute.xlu0 %1485
      %1487 = vrot.lane.b32.xlu0 %v1470, 112
      %v1488 = vpop.permute.xlu0 %1487
      %vm1489 = vcmask 916480
      %v1490 = vsel %vm1489, %v1478, %v1480
      %v1491 = vsel %vm1489, %v1480, %v1482
      %v1492 = vsel %vm1489, %v1484, %v1486
      %v1493 = vsel %vm1489, %v1486, %v1488
      %1498 = vst [vmem:[#allocation3 + $0xe0] sm:$0xff] %v1490
      %1499 = vst [vmem:[#allocation3 + $0xe8] sm:$0xff] %v1491
      %1500 = vst [vmem:[#allocation3 + $0xf0] sm:$0xff] %v1492
      %1501 = vst [vmem:[#allocation3 + $0xf8] sm:$0xff] %v1493
      %v1502 = vld [vmem:[#allocation2 + $0x8] sm:$0xff]
      %v1503 = vld [vmem:[#allocation2 + $0x10] sm:$0xff]
      %v1504 = vld [vmem:[#allocation2 + $0x18] sm:$0xff]
      %v1505 = vld [vmem:[#allocation2 + $0x28] sm:$0xff]
      %v1506 = vld [vmem:[#allocation2 + $0x30] sm:$0xff]
      %v1507 = vld [vmem:[#allocation2 + $0x38] sm:$0xff]
      %v1508 = vld [vmem:[#allocation2 + $0x48] sm:$0xff]
      %v1509 = vld [vmem:[#allocation2 + $0x50] sm:$0xff]
      %v1510 = vld [vmem:[#allocation2 + $0x58] sm:$0xff]
      %v1511 = vld [vmem:[#allocation2 + $0x68] sm:$0xff]
      %v1512 = vld [vmem:[#allocation2 + $0x70] sm:$0xff]
      %v1513 = vld [vmem:[#allocation2 + $0x78] sm:$0xff]
      %1526 = vrot.lane.b32.xlu0 %v1502, 111
      %v1527 = vpop.permute.xlu0 %1526
      %1528 = vrot.lane.b32.xlu0 %v1503, 111
      %v1529 = vpop.permute.xlu0 %1528
      %1530 = vrot.lane.b32.xlu0 %v1504, 111
      %v1531 = vpop.permute.xlu0 %1530
      %1532 = vrot.lane.b32.xlu0 %v1505, 111
      %v1533 = vpop.permute.xlu0 %1532
      %1534 = vrot.lane.b32.xlu0 %v1506, 111
      %v1535 = vpop.permute.xlu0 %1534
      %1536 = vrot.lane.b32.xlu0 %v1507, 111
      %v1537 = vpop.permute.xlu0 %1536
      %1538 = vrot.lane.b32.xlu0 %v1508, 111
      %v1539 = vpop.permute.xlu0 %1538
      %1540 = vrot.lane.b32.xlu0 %v1509, 111
      %v1541 = vpop.permute.xlu0 %1540
      %1542 = vrot.lane.b32.xlu0 %v1510, 111
      %v1543 = vpop.permute.xlu0 %1542
      %1544 = vrot.lane.b32.xlu0 %v1511, 111
      %v1545 = vpop.permute.xlu0 %1544
      %1546 = vrot.lane.b32.xlu0 %v1512, 111
      %v1547 = vpop.permute.xlu0 %1546
      %1548 = vrot.lane.b32.xlu0 %v1513, 111
      %v1549 = vpop.permute.xlu0 %1548
      %vm1550 = vcmask 908288
      %v1551 = vsel %vm1550, %v1527, %v1529
      %v1552 = vsel %vm1550, %v1529, %v1531
      %v1553 = vsel %vm1550, %v1533, %v1535
      %v1554 = vsel %vm1550, %v1535, %v1537
      %v1555 = vsel %vm1550, %v1539, %v1541
      %v1556 = vsel %vm1550, %v1541, %v1543
      %v1557 = vsel %vm1550, %v1545, %v1547
      %v1558 = vsel %vm1550, %v1547, %v1549
      %v1567 = vsel %vm1123, %v1551, 0.0
      %v1568 = vsel %vm1124, %v1552, 0.0
      %v1569 = vsel %vm1123, %v1553, 0.0
      %v1570 = vsel %vm1124, %v1554, 0.0
      %v1571 = vsel %vm1123, %v1555, 0.0
      %v1572 = vsel %vm1124, %v1556, 0.0
      %v1573 = vsel %vm1123, %v1557, 0.0
      %v1574 = vsel %vm1124, %v1558, 0.0
      %v1575 = vpack.c.bf16 %v1569, %v1567
      %v1576 = vpack.c.bf16 %v1570, %v1568
      %v1577 = vpack.c.bf16 %v1573, %v1571
      %v1578 = vpack.c.bf16 %v1574, %v1572
      %1579 = vst [vmem:[#allocation3 + $0x100] sm:$0xff] %v1575
      %1580 = vst [vmem:[#allocation3 + $0x108] sm:$0xff] %v1576
      %1581 = vst [vmem:[#allocation3 + $0x110] sm:$0xff] %v1577
      %1582 = vst [vmem:[#allocation3 + $0x118] sm:$0xff] %v1578
      %v1583 = vld [vmem:[%s4] sm:$0xff]
      %v1584 = vld [vmem:[%s4 + $0x8] sm:$0xf]
      %v1585 = vld [vmem:[%s4 + $0xc] sm:$0xff]
      %v1586 = vld [vmem:[%s4 + $0x14] sm:$0xf]
      %v1587 = vld [vmem:[%s4 + $0x18] sm:$0xff]
      %v1588 = vld [vmem:[%s4 + $0x20] sm:$0xf]
      %v1589 = vld [vmem:[%s4 + $0x24] sm:$0xff]
      %v1590 = vld [vmem:[%s4 + $0x2c] sm:$0xf]
      %v1591 = vld [vmem:[#allocation3] sm:$0xff]
      %v1592 = vld [vmem:[#allocation3 + $0x8] sm:$0xff]
      %v1593 = vld [vmem:[#allocation3 + $0x10] sm:$0xff]
      %v1594 = vld [vmem:[#allocation3 + $0x18] sm:$0xff]
      %v1595 = vld [vmem:[#allocation3 + $0x20] sm:$0xff]
      %v1596 = vld [vmem:[#allocation3 + $0x28] sm:$0xff]
      %v1597 = vld [vmem:[#allocation3 + $0x30] sm:$0xff]
      %v1598 = vld [vmem:[#allocation3 + $0x38] sm:$0xff]
      %v1599 = vld [vmem:[#allocation3 + $0x40] sm:$0xff]
      %v1600 = vld [vmem:[#allocation3 + $0x48] sm:$0xff]
      %v1601 = vld [vmem:[#allocation3 + $0x50] sm:$0xff]
      %v1602 = vld [vmem:[#allocation3 + $0x58] sm:$0xff]
      %v1603 = vld [vmem:[#allocation3 + $0x60] sm:$0xff]
      %v1604 = vld [vmem:[#allocation3 + $0x68] sm:$0xff]
      %v1605 = vld [vmem:[#allocation3 + $0x70] sm:$0xff]
      %v1606 = vld [vmem:[#allocation3 + $0x78] sm:$0xff]
      %v1607 = vld [vmem:[#allocation3 + $0x80] sm:$0xff]
      %v1608 = vld [vmem:[#allocation3 + $0x88] sm:$0xff]
      %v1609 = vld [vmem:[#allocation3 + $0x90] sm:$0xff]
      %v1610 = vld [vmem:[#allocation3 + $0x98] sm:$0xff]
      %v1611 = vld [vmem:[#allocation3 + $0xa0] sm:$0xff]
      %v1612 = vld [vmem:[#allocation3 + $0xa8] sm:$0xff]
      %v1613 = vld [vmem:[#allocation3 + $0xb0] sm:$0xff]
      %v1614 = vld [vmem:[#allocation3 + $0xb8] sm:$0xff]
      %v1615 = vld [vmem:[#allocation3 + $0xc0] sm:$0xff]
      %v1616 = vld [vmem:[#allocation3 + $0xc8] sm:$0xff]
      %v1617 = vld [vmem:[#allocation3 + $0xd0] sm:$0xff]
      %v1618 = vld [vmem:[#allocation3 + $0xd8] sm:$0xff]
      %v1619 = vld [vmem:[#allocation3 + $0xe0] sm:$0xff]
      %v1620 = vld [vmem:[#allocation3 + $0xe8] sm:$0xff]
      %v1621 = vld [vmem:[#allocation3 + $0xf0] sm:$0xff]
      %v1622 = vld [vmem:[#allocation3 + $0xf8] sm:$0xff]
      %v1623 = vld [vmem:[#allocation3 + $0x100] sm:$0xff]
      %v1624 = vld [vmem:[#allocation3 + $0x108] sm:$0xff]
      %v1625 = vld [vmem:[#allocation3 + $0x110] sm:$0xff]
      %v1626 = vld [vmem:[#allocation3 + $0x118] sm:$0xff]
      %v1627 = vld [vmem:[%s5] sm:$0xff]
      %v1628 = vld [vmem:[%s5 + $0x8] sm:$0xff]
      %v1629 = vld [vmem:[%s5 + $0x10] sm:$0xff]
      %v1630 = vld [vmem:[%s5 + $0x18] sm:$0xff]
      %1632 = vset.pattern.permute.xlu0 0
      %1633 = vperm.xlu0 %1632, %v1627
      %v1634 = vpop.permute.xlu0 %1633
      %1637 = vset.pattern.permute.xlu0 0
      %1638 = vperm.xlu0 %1637, %v1628
      %v1639 = vpop.permute.xlu0 %1638
      %1642 = vset.pattern.permute.xlu0 0
      %1643 = vperm.xlu0 %1642, %v1629
      %v1644 = vpop.permute.xlu0 %1643
      %1647 = vset.pattern.permute.xlu0 0
      %1648 = vperm.xlu0 %1647, %v1630
      %v1649 = vpop.permute.xlu0 %1648
      %v1659 = vunpack.c.l.b16 %v1583
      %v1660 = vunpack.c.h.b16 %v1583
      %v1661 = vunpack.c.l.b16 %v1584
      %v1662 = vunpack.c.l.b16 %v1585
      %v1663 = vunpack.c.h.b16 %v1585
      %v1664 = vunpack.c.l.b16 %v1586
      %v1665 = vunpack.c.l.b16 %v1587
      %v1666 = vunpack.c.h.b16 %v1587
      %v1667 = vunpack.c.l.b16 %v1588
      %v1668 = vunpack.c.l.b16 %v1589
      %v1669 = vunpack.c.h.b16 %v1589
      %v1670 = vunpack.c.l.b16 %v1590
      %v1671 = vpack.c.b16 %v1662, %v1659
      %v1672 = vpack.c.b16 %v1663, %v1660
      %v1673 = vpack.c.b16 %v1664, %v1661
      %v1674 = vpack.c.b16 %v1668, %v1665
      %v1675 = vpack.c.b16 %v1669, %v1666
      %v1676 = vpack.c.b16 %v1670, %v1667
      %v1682 = vsel %vm374, %v1673, 0
      %v1685 = vsel %vm374, %v1676, 0
      %1687 = vmatprep.subr.bf16.mxu0 %v1592
      %1688 = vmatpush1.bf16.msra.mxu0 %v1591
      %1689 = vmatprep.subr.bf16.mxu0 %v1594
      %1690 = vmatpush1.bf16.msra.mxu0 %v1593
      %1691 = vmatprep.subr.bf16.mxu0 %v1596
      %1692 = vmatpush1.bf16.msra.mxu0 %v1595
      %1693 = vmatprep.subr.bf16.mxu0 %v1598
      %1694 = vmatpush1.bf16.msra.mxu0 %v1597
      %1695 = vmatprep.subr.bf16.mxu0 %v1600
      %1696 = vmatpush1.bf16.msra.mxu0 %v1599
      %1697 = vmatprep.subr.bf16.mxu0 %v1602
      %1698 = vmatpush1.bf16.msra.mxu0 %v1601
      %1699 = vmatprep.subr.bf16.mxu0 %v1604
      %1700 = vmatpush1.bf16.msra.mxu0 %v1603
      %1701 = vmatprep.subr.bf16.mxu0 %v1606
      %1702 = vmatpush1.bf16.msra.mxu0 %v1605
      %1703 = vmatprep.subr.bf16.mxu0 %v1608
      %1704 = vmatpush1.bf16.msra.mxu0 %v1607
      %1705 = vmatprep.subr.bf16.mxu0 %v1610
      %1706 = vmatpush1.bf16.msra.mxu0 %v1609
      %1707 = vmatprep.subr.bf16.mxu0 %v1612
      %1708 = vmatpush1.bf16.msra.mxu0 %v1611
      %1709 = vmatprep.subr.bf16.mxu0 %v1614
      %1710 = vmatpush1.bf16.msra.mxu0 %v1613
      %1711 = vmatprep.subr.bf16.mxu0 %v1616
      %1712 = vmatpush1.bf16.msra.mxu0 %v1615
      %1713 = vmatprep.subr.bf16.mxu0 %v1618
      %1714 = vmatpush1.bf16.msra.mxu0 %v1617
      %1715 = vmatprep.subr.bf16.mxu0 %v1620
      %1716 = vmatpush1.bf16.msra.mxu0 %v1619
      %1717 = vmatprep.subr.bf16.mxu0 %v1622
      %1718 = vmatpush1.bf16.msra.mxu0 %v1621
      %1719 = vmatprep.mubr.bf16.mxu0 %v1672
      %1720 = vmatmul.mubr.bf16.gmra.mrb[0].mxu0 %v1671
      %v1721 = vpop.f32.mrb[0].mxu0
      %v1722 = vadd.f32 %v1634, %v1721
      %v1723 = vpop.f32.mrb[0].mxu0
      %v1724 = vadd.f32 %v1634, %v1723
      %v1725 = vpop.f32.mrb[0].mxu0
      %v1726 = vadd.f32 %v1639, %v1725
      %v1727 = vpop.f32.mrb[0].mxu0
      %v1728 = vadd.f32 %v1639, %v1727
      %1729 = vmatprep.mubr.bf16.mxu0 %v1675
      %1730 = vmatmul.mubr.bf16.gmra.mrb[0].mxu0 %v1674
      %v1731 = vpop.f32.mrb[0].mxu0
      %v1732 = vadd.f32 %v1644, %v1731
      %v1733 = vpop.f32.mrb[0].mxu0
      %v1734 = vadd.f32 %v1644, %v1733
      %v1735 = vpop.f32.mrb[0].mxu0
      %v1736 = vadd.f32 %v1649, %v1735
      %v1737 = vpop.f32.mrb[0].mxu0
      %v1738 = vadd.f32 %v1649, %v1737
      %1739 = vdwg.mxu0
      %1740 = vmatprep.subr.bf16.mxu0 %v1624
      %1741 = vmatpush1.bf16.msra.mxu0 %v1623
      %1742 = vmatprep.subr.bf16.mxu0 %v1626
      %1743 = vmatpush1.bf16.msra.mxu0 %v1625
      %1744 = vmatprep.subr.bf16.mxu0 0
      %1745 = vmatpush1.bf16.msra.mxu0 0
      %1746 = vmatprep.subr.bf16.mxu0 0
      %1747 = vmatpush1.bf16.msra.mxu0 0
      %1748 = vmatprep.subr.bf16.mxu0 0
      %1749 = vmatpush1.bf16.msra.mxu0 0
      %1750 = vmatprep.subr.bf16.mxu0 0
      %1751 = vmatpush1.bf16.msra.mxu0 0
      %1752 = vmatprep.subr.bf16.mxu0 0
      %1753 = vmatpush1.bf16.msra.mxu0 0
      %1754 = vmatprep.subr.bf16.mxu0 0
      %1755 = vmatpush1.bf16.msra.mxu0 0
      %1756 = vmatprep.subr.bf16.mxu0 0
      %1757 = vmatpush1.bf16.msra.mxu0 0
      %1758 = vmatprep.subr.bf16.mxu0 0
      %1759 = vmatpush1.bf16.msra.mxu0 0
      %1760 = vmatprep.subr.bf16.mxu0 0
      %1761 = vmatpush1.bf16.msra.mxu0 0
      %1762 = vmatprep.subr.bf16.mxu0 0
      %1763 = vmatpush1.bf16.msra.mxu0 0
      %1764 = vmatprep.subr.bf16.mxu0 0
      %1765 = vmatpush1.bf16.msra.mxu0 0
      %1766 = vmatprep.subr.bf16.mxu0 0
      %1767 = vmatpush1.bf16.msra.mxu0 0
      %1768 = vmatprep.subr.bf16.mxu0 0
      %1769 = vmatpush1.bf16.msra.mxu0 0
      %1770 = vmatprep.subr.bf16.mxu0 0
      %1771 = vmatpush1.bf16.msra.mxu0 0
      %1772 = vmatprep.mubr.bf16.mxu0 0
      %1773 = vmatmul.mubr.bf16.gmra.mrb[0].mxu0 %v1682
      %v1774 = vpop.f32.mrb[0].mxu0
      %v1775 = vadd.f32 %v1722, %v1774
      %v1776 = vpop.f32.mrb[0].mxu0
      %v1777 = vadd.f32 %v1724, %v1776
      %v1778 = vpop.f32.mrb[0].mxu0
      %v1779 = vadd.f32 %v1726, %v1778
      %v1780 = vpop.f32.mrb[0].mxu0
      %v1781 = vadd.f32 %v1728, %v1780
      %1782 = vmatprep.mubr.bf16.mxu0 0
      %1783 = vmatmul.mubr.bf16.gmra.mrb[0].mxu0 %v1685
      %v1784 = vpop.f32.mrb[0].mxu0
      %v1785 = vadd.f32 %v1732, %v1784
      %v1786 = vpop.f32.mrb[0].mxu0
      %v1787 = vadd.f32 %v1734, %v1786
      %v1788 = vpop.f32.mrb[0].mxu0
      %v1789 = vadd.f32 %v1736, %v1788
      %v1790 = vpop.f32.mrb[0].mxu0
      %v1791 = vadd.f32 %v1738, %v1790
      %1792 = vdwg.mxu0
      %v1793 = vxor.u32 %v1775, 2147483648
      %v1794 = vxor.u32 %v1777, 2147483648
      %v1795 = vxor.u32 %v1779, 2147483648
      %v1796 = vxor.u32 %v1781, 2147483648
      %v1797 = vxor.u32 %v1785, 2147483648
      %v1798 = vxor.u32 %v1787, 2147483648
      %v1799 = vxor.u32 %v1789, 2147483648
      %v1800 = vxor.u32 %v1791, 2147483648
      %v1801 = vmul.f32 %v1793, 1.442695
      %v1802 = vpow.pop %v1801
      %v1803 = vmul.f32 %v1794, 1.442695
      %v1804 = vpow.pop %v1803
      %v1805 = vmul.f32 %v1795, 1.442695
      %v1806 = vpow.pop %v1805
      %v1807 = vmul.f32 %v1796, 1.442695
      %v1808 = vpow.pop %v1807
      %v1809 = vmul.f32 %v1797, 1.442695
      %v1810 = vpow.pop %v1809
      %v1811 = vmul.f32 %v1798, 1.442695
      %v1812 = vpow.pop %v1811
      %v1813 = vmul.f32 %v1799, 1.442695
      %v1814 = vpow.pop %v1813
      %v1815 = vmul.f32 %v1800, 1.442695
      %v1816 = vpow.pop %v1815
      %v1817 = vadd.f32 %v1802, 1.0
      %v1818 = vadd.f32 %v1804, 1.0
      %v1819 = vadd.f32 %v1806, 1.0
      %v1820 = vadd.f32 %v1808, 1.0
      %v1821 = vadd.f32 %v1810, 1.0
      %v1822 = vadd.f32 %v1812, 1.0
      %v1823 = vadd.f32 %v1814, 1.0
      %v1824 = vadd.f32 %v1816, 1.0
      %v1825 = vrcp.pop %v1817
      %v1826 = vmul.f32 1.0, %v1825
      %v1827 = vrcp.pop %v1818
      %v1828 = vmul.f32 1.0, %v1827
      %v1829 = vrcp.pop %v1819
      %v1830 = vmul.f32 1.0, %v1829
      %v1831 = vrcp.pop %v1820
      %v1832 = vmul.f32 1.0, %v1831
      %v1833 = vrcp.pop %v1821
      %v1834 = vmul.f32 1.0, %v1833
      %v1835 = vrcp.pop %v1822
      %v1836 = vmul.f32 1.0, %v1835
      %v1837 = vrcp.pop %v1823
      %v1838 = vmul.f32 1.0, %v1837
      %v1839 = vrcp.pop %v1824
      %v1840 = vmul.f32 1.0, %v1839
      %v1841 = vadd.f32 %v1826, 0.0
      %v1842 = vadd.f32 %v1828, 0.0
      %v1843 = vadd.f32 %v1830, 0.0
      %v1844 = vadd.f32 %v1832, 0.0
      %v1845 = vadd.f32 %v1834, 0.0
      %v1846 = vadd.f32 %v1836, 0.0
      %v1847 = vadd.f32 %v1838, 0.0
      %v1848 = vadd.f32 %v1840, 0.0
      %1849 = vst [vmem:[#allocation2 + $0x8] sm:$0xff] %v1775
      %1850 = vst [vmem:[#allocation2 + $0x10] sm:$0xff] %v1777
      %1851 = vst [vmem:[#allocation2 + $0x28] sm:$0xff] %v1779
      %1852 = vst [vmem:[#allocation2 + $0x30] sm:$0xff] %v1781
      %1853 = vst [vmem:[#allocation2 + $0x48] sm:$0xff] %v1785
      %1854 = vst [vmem:[#allocation2 + $0x50] sm:$0xff] %v1787
      %1855 = vst [vmem:[#allocation2 + $0x68] sm:$0xff] %v1789
      %1856 = vst [vmem:[#allocation2 + $0x70] sm:$0xff] %v1791
      %v1857 = vld [vmem:[#allocation2] sm:$0xff]
      %v1858 = vld [vmem:[#allocation2 + $0x8] sm:$0xff]
      %v1859 = vld [vmem:[#allocation2 + $0x10] sm:$0xff]
      %v1860 = vld [vmem:[#allocation2 + $0x20] sm:$0xff]
      %v1861 = vld [vmem:[#allocation2 + $0x28] sm:$0xff]
      %v1862 = vld [vmem:[#allocation2 + $0x30] sm:$0xff]
      %v1863 = vld [vmem:[#allocation2 + $0x40] sm:$0xff]
      %v1864 = vld [vmem:[#allocation2 + $0x48] sm:$0xff]
      %v1865 = vld [vmem:[#allocation2 + $0x50] sm:$0xff]
      %v1866 = vld [vmem:[#allocation2 + $0x60] sm:$0xff]
      %v1867 = vld [vmem:[#allocation2 + $0x68] sm:$0xff]
      %v1868 = vld [vmem:[#allocation2 + $0x70] sm:$0xff]
      %v1869 = vadd.s32 %v957, 4294967294
      %v1870 = vadd.s32 %v958, 4294967294
      %vm1871 = vcmp.ge.s32.totalorder %v1869, 0
      %vm1872 = vcmp.ge.s32.totalorder %v1870, 0
      %vm1873 = vcmp.lt.s32.totalorder %v1869, 16
      %vm1874 = vcmp.lt.s32.totalorder %v1870, 16
      %vm1875 = vmand %vm1871, %vm1873
      %vm1876 = vmand %vm1872, %vm1874
      %1889 = vrot.lane.b32.xlu0 %v1857, 34
      %v1890 = vpop.permute.xlu0 %1889
      %1891 = vrot.lane.b32.xlu0 %v1858, 34
      %v1892 = vpop.permute.xlu0 %1891
      %1893 = vrot.lane.b32.xlu0 %v1859, 34
      %v1894 = vpop.permute.xlu0 %1893
      %1895 = vrot.lane.b32.xlu0 %v1860, 34
      %v1896 = vpop.permute.xlu0 %1895
      %1897 = vrot.lane.b32.xlu0 %v1861, 34
      %v1898 = vpop.permute.xlu0 %1897
      %1899 = vrot.lane.b32.xlu0 %v1862, 34
      %v1900 = vpop.permute.xlu0 %1899
      %1901 = vrot.lane.b32.xlu0 %v1863, 34
      %v1902 = vpop.permute.xlu0 %1901
      %1903 = vrot.lane.b32.xlu0 %v1864, 34
      %v1904 = vpop.permute.xlu0 %1903
      %1905 = vrot.lane.b32.xlu0 %v1865, 34
      %v1906 = vpop.permute.xlu0 %1905
      %1907 = vrot.lane.b32.xlu0 %v1866, 34
      %v1908 = vpop.permute.xlu0 %1907
      %1909 = vrot.lane.b32.xlu0 %v1867, 34
      %v1910 = vpop.permute.xlu0 %1909
      %1911 = vrot.lane.b32.xlu0 %v1868, 34
      %v1912 = vpop.permute.xlu0 %1911
      %vm1913 = vcmask 277504
      %v1914 = vsel %vm1913, %v1890, %v1892
      %v1915 = vsel %vm1913, %v1892, %v1894
      %v1916 = vsel %vm1913, %v1896, %v1898
      %v1917 = vsel %vm1913, %v1898, %v1900
      %v1918 = vsel %vm1913, %v1902, %v1904
      %v1919 = vsel %vm1913, %v1904, %v1906
      %v1920 = vsel %vm1913, %v1908, %v1910
      %v1921 = vsel %vm1913, %v1910, %v1912
      %v1930 = vsel %vm1875, %v1914, 0.0
      %v1931 = vsel %vm1876, %v1915, 0.0
      %v1932 = vsel %vm1875, %v1916, 0.0
      %v1933 = vsel %vm1876, %v1917, 0.0
      %v1934 = vsel %vm1875, %v1918, 0.0
      %v1935 = vsel %vm1876, %v1919, 0.0
      %v1936 = vsel %vm1875, %v1920, 0.0
      %v1937 = vsel %vm1876, %v1921, 0.0
      %v1938 = vpack.c.bf16 %v1932, %v1930
      %v1939 = vpack.c.bf16 %v1933, %v1931
      %v1940 = vpack.c.bf16 %v1936, %v1934
      %v1941 = vpack.c.bf16 %v1937, %v1935
      %1942 = vst [vmem:[#allocation3] sm:$0xff] %v1938
      %1943 = vst [vmem:[#allocation3 + $0x8] sm:$0xff] %v1939
      %1944 = vst [vmem:[#allocation3 + $0x10] sm:$0xff] %v1940
      %1945 = vst [vmem:[#allocation3 + $0x18] sm:$0xff] %v1941
      %v1946 = vld [vmem:[#allocation2] sm:$0xff]
      %v1947 = vld [vmem:[#allocation2 + $0x8] sm:$0xff]
      %v1948 = vld [vmem:[#allocation2 + $0x10] sm:$0xff]
      %v1949 = vld [vmem:[#allocation2 + $0x20] sm:$0xff]
      %v1950 = vld [vmem:[#allocation2 + $0x28] sm:$0xff]
      %v1951 = vld [vmem:[#allocation2 + $0x30] sm:$0xff]
      %v1952 = vld [vmem:[#allocation2 + $0x40] sm:$0xff]
      %v1953 = vld [vmem:[#allocation2 + $0x48] sm:$0xff]
      %v1954 = vld [vmem:[#allocation2 + $0x50] sm:$0xff]
      %v1955 = vld [vmem:[#allocation2 + $0x60] sm:$0xff]
      %v1956 = vld [vmem:[#allocation2 + $0x68] sm:$0xff]
      %v1957 = vld [vmem:[#allocation2 + $0x70] sm:$0xff]
      %v1958 = vpack.c.bf16 %v1949, %v1946
      %v1959 = vpack.c.bf16 %v1950, %v1947
      %v1960 = vpack.c.bf16 %v1951, %v1948
      %v1961 = vpack.c.bf16 %v1955, %v1952
      %v1962 = vpack.c.bf16 %v1956, %v1953
      %v1963 = vpack.c.bf16 %v1957, %v1954
      %1970 = vrot.lane.b32.xlu0 %v1958, 32
      %v1971 = vpop.permute.xlu0 %1970
      %1972 = vrot.lane.b32.xlu0 %v1959, 32
      %v1973 = vpop.permute.xlu0 %1972
      %1974 = vrot.lane.b32.xlu0 %v1960, 32
      %v1975 = vpop.permute.xlu0 %1974
      %1976 = vrot.lane.b32.xlu0 %v1961, 32
      %v1977 = vpop.permute.xlu0 %1976
      %1978 = vrot.lane.b32.xlu0 %v1962, 32
      %v1979 = vpop.permute.xlu0 %1978
      %1980 = vrot.lane.b32.xlu0 %v1963, 32
      %v1981 = vpop.permute.xlu0 %1980
      %vm1982 = vcmask 261120
      %v1983 = vsel %vm1982, %v1971, %v1973
      %v1984 = vsel %vm1982, %v1973, %v1975
      %v1985 = vsel %vm1982, %v1977, %v1979
      %v1986 = vsel %vm1982, %v1979, %v1981
      %1991 = vst [vmem:[#allocation3 + $0x20] sm:$0xff] %v1983
      %1992 = vst [vmem:[#allocation3 + $0x28] sm:$0xff] %v1984
      %1993 = vst [vmem:[#allocation3 + $0x30] sm:$0xff] %v1985
      %1994 = vst [vmem:[#allocation3 + $0x38] sm:$0xff] %v1986
      %v1995 = vld [vmem:[#allocation2] sm:$0xff]
      %v1996 = vld [vmem:[#allocation2 + $0x8] sm:$0xff]
      %v1997 = vld [vmem:[#allocation2 + $0x10] sm:$0xff]
      %v1998 = vld [vmem:[#allocation2 + $0x20] sm:$0xff]
      %v1999 = vld [vmem:[#allocation2 + $0x28] sm:$0xff]
      %v2000 = vld [vmem:[#allocation2 + $0x30] sm:$0xff]
      %v2001 = vld [vmem:[#allocation2 + $0x40] sm:$0xff]
      %v2002 = vld [vmem:[#allocation2 + $0x48] sm:$0xff]
      %v2003 = vld [vmem:[#allocation2 + $0x50] sm:$0xff]
      %v2004 = vld [vmem:[#allocation2 + $0x60] sm:$0xff]
      %v2005 = vld [vmem:[#allocation2 + $0x68] sm:$0xff]
      %v2006 = vld [vmem:[#allocation2 + $0x70] sm:$0xff]
      %v2007 = vadd.s32 %v957, 2
      %v2008 = vadd.s32 %v958, 2
      %vm2009 = vcmp.ge.s32.totalorder %v2007, 0
      %vm2010 = vcmp.ge.s32.totalorder %v2008, 0
      %vm2011 = vcmp.lt.s32.totalorder %v2007, 16
      %vm2012 = vcmp.lt.s32.totalorder %v2008, 16
      %vm2013 = vmand %vm2009, %vm2011
      %vm2014 = vmand %vm2010, %vm2012
      %2027 = vrot.lane.b32.xlu0 %v1995, 30
      %v2028 = vpop.permute.xlu0 %2027
      %2029 = vrot.lane.b32.xlu0 %v1996, 30
      %v2030 = vpop.permute.xlu0 %2029
      %2031 = vrot.lane.b32.xlu0 %v1997, 30
      %v2032 = vpop.permute.xlu0 %2031
      %2033 = vrot.lane.b32.xlu0 %v1998, 30
      %v2034 = vpop.permute.xlu0 %2033
      %2035 = vrot.lane.b32.xlu0 %v1999, 30
      %v2036 = vpop.permute.xlu0 %2035
      %2037 = vrot.lane.b32.xlu0 %v2000, 30
      %v2038 = vpop.permute.xlu0 %2037
      %2039 = vrot.lane.b32.xlu0 %v2001, 30
      %v2040 = vpop.permute.xlu0 %2039
      %2041 = vrot.lane.b32.xlu0 %v2002, 30
      %v2042 = vpop.permute.xlu0 %2041
      %2043 = vrot.lane.b32.xlu0 %v2003, 30
      %v2044 = vpop.permute.xlu0 %2043
      %2045 = vrot.lane.b32.xlu0 %v2004, 30
      %v2046 = vpop.permute.xlu0 %2045
      %2047 = vrot.lane.b32.xlu0 %v2005, 30
      %v2048 = vpop.permute.xlu0 %2047
      %2049 = vrot.lane.b32.xlu0 %v2006, 30
      %v2050 = vpop.permute.xlu0 %2049
      %vm2051 = vcmask 244736
      %v2052 = vsel %vm2051, %v2028, %v2030
      %v2053 = vsel %vm2051, %v2030, %v2032
      %v2054 = vsel %vm2051, %v2034, %v2036
      %v2055 = vsel %vm2051, %v2036, %v2038
      %v2056 = vsel %vm2051, %v2040, %v2042
      %v2057 = vsel %vm2051, %v2042, %v2044
      %v2058 = vsel %vm2051, %v2046, %v2048
      %v2059 = vsel %vm2051, %v2048, %v2050
      %v2068 = vsel %vm2013, %v2052, 0.0
      %v2069 = vsel %vm2014, %v2053, 0.0
      %v2070 = vsel %vm2013, %v2054, 0.0
      %v2071 = vsel %vm2014, %v2055, 0.0
      %v2072 = vsel %vm2013, %v2056, 0.0
      %v2073 = vsel %vm2014, %v2057, 0.0
      %v2074 = vsel %vm2013, %v2058, 0.0
      %v2075 = vsel %vm2014, %v2059, 0.0
      %v2076 = vpack.c.bf16 %v2070, %v2068
      %v2077 = vpack.c.bf16 %v2071, %v2069
      %v2078 = vpack.c.bf16 %v2074, %v2072
      %v2079 = vpack.c.bf16 %v2075, %v2073
      %2080 = vst [vmem:[#allocation3 + $0x40] sm:$0xff] %v2076
      %2081 = vst [vmem:[#allocation3 + $0x48] sm:$0xff] %v2077
      %2082 = vst [vmem:[#allocation3 + $0x50] sm:$0xff] %v2078
      %2083 = vst [vmem:[#allocation3 + $0x58] sm:$0xff] %v2079
      %v2084 = vld [vmem:[#allocation2] sm:$0xff]
      %v2085 = vld [vmem:[#allocation2 + $0x8] sm:$0xff]
      %v2086 = vld [vmem:[#allocation2 + $0x10] sm:$0xff]
      %v2087 = vld [vmem:[#allocation2 + $0x20] sm:$0xff]
      %v2088 = vld [vmem:[#allocation2 + $0x28] sm:$0xff]
      %v2089 = vld [vmem:[#allocation2 + $0x30] sm:$0xff]
      %v2090 = vld [vmem:[#allocation2 + $0x40] sm:$0xff]
      %v2091 = vld [vmem:[#allocation2 + $0x48] sm:$0xff]
      %v2092 = vld [vmem:[#allocation2 + $0x50] sm:$0xff]
      %v2093 = vld [vmem:[#allocation2 + $0x60] sm:$0xff]
      %v2094 = vld [vmem:[#allocation2 + $0x68] sm:$0xff]
      %v2095 = vld [vmem:[#allocation2 + $0x70] sm:$0xff]
      %2108 = vrot.lane.b32.xlu0 %v2084, 2
      %v2109 = vpop.permute.xlu0 %2108
      %2110 = vrot.lane.b32.xlu0 %v2085, 2
      %v2111 = vpop.permute.xlu0 %2110
      %2112 = vrot.lane.b32.xlu0 %v2086, 2
      %v2113 = vpop.permute.xlu0 %2112
      %2114 = vrot.lane.b32.xlu0 %v2087, 2
      %v2115 = vpop.permute.xlu0 %2114
      %2116 = vrot.lane.b32.xlu0 %v2088, 2
      %v2117 = vpop.permute.xlu0 %2116
      %2118 = vrot.lane.b32.xlu0 %v2089, 2
      %v2119 = vpop.permute.xlu0 %2118
      %2120 = vrot.lane.b32.xlu0 %v2090, 2
      %v2121 = vpop.permute.xlu0 %2120
      %2122 = vrot.lane.b32.xlu0 %v2091, 2
      %v2123 = vpop.permute.xlu0 %2122
      %2124 = vrot.lane.b32.xlu0 %v2092, 2
      %v2125 = vpop.permute.xlu0 %2124
      %2126 = vrot.lane.b32.xlu0 %v2093, 2
      %v2127 = vpop.permute.xlu0 %2126
      %2128 = vrot.lane.b32.xlu0 %v2094, 2
      %v2129 = vpop.permute.xlu0 %2128
      %2130 = vrot.lane.b32.xlu0 %v2095, 2
      %v2131 = vpop.permute.xlu0 %2130
      %v2132 = vsel %vm830, %v2109, %v2111
      %v2133 = vsel %vm830, %v2111, %v2113
      %v2134 = vsel %vm830, %v2115, %v2117
      %v2135 = vsel %vm830, %v2117, %v2119
      %v2136 = vsel %vm830, %v2121, %v2123
      %v2137 = vsel %vm830, %v2123, %v2125
      %v2138 = vsel %vm830, %v2127, %v2129
      %v2139 = vsel %vm830, %v2129, %v2131
      %v2148 = vsel %vm1875, %v2132, 0.0
      %v2149 = vsel %vm1876, %v2133, 0.0
      %v2150 = vsel %vm1875, %v2134, 0.0
      %v2151 = vsel %vm1876, %v2135, 0.0
      %v2152 = vsel %vm1875, %v2136, 0.0
      %v2153 = vsel %vm1876, %v2137, 0.0
      %v2154 = vsel %vm1875, %v2138, 0.0
      %v2155 = vsel %vm1876, %v2139, 0.0
      %v2156 = vpack.c.bf16 %v2150, %v2148
      %v2157 = vpack.c.bf16 %v2151, %v2149
      %v2158 = vpack.c.bf16 %v2154, %v2152
      %v2159 = vpack.c.bf16 %v2155, %v2153
      %2160 = vst [vmem:[#allocation3 + $0x60] sm:$0xff] %v2156
      %2161 = vst [vmem:[#allocation3 + $0x68] sm:$0xff] %v2157
      %2162 = vst [vmem:[#allocation3 + $0x70] sm:$0xff] %v2158
      %2163 = vst [vmem:[#allocation3 + $0x78] sm:$0xff] %v2159
      %v2164 = vld [vmem:[#allocation2 + $0x8] sm:$0xff]
      %v2165 = vld [vmem:[#allocation2 + $0x10] sm:$0xff]
      %v2166 = vld [vmem:[#allocation2 + $0x28] sm:$0xff]
      %v2167 = vld [vmem:[#allocation2 + $0x30] sm:$0xff]
      %v2168 = vld [vmem:[#allocation2 + $0x48] sm:$0xff]
      %v2169 = vld [vmem:[#allocation2 + $0x50] sm:$0xff]
      %v2170 = vld [vmem:[#allocation2 + $0x68] sm:$0xff]
      %v2171 = vld [vmem:[#allocation2 + $0x70] sm:$0xff]
      %v2172 = vpack.c.bf16 %v2166, %v2164
      %v2173 = vpack.c.bf16 %v2167, %v2165
      %v2174 = vpack.c.bf16 %v2170, %v2168
      %v2175 = vpack.c.bf16 %v2171, %v2169
      %2176 = vst [vmem:[#allocation3 + $0x80] sm:$0xff] %v2172
      %2177 = vst [vmem:[#allocation3 + $0x88] sm:$0xff] %v2173
      %2178 = vst [vmem:[#allocation3 + $0x90] sm:$0xff] %v2174
      %2179 = vst [vmem:[#allocation3 + $0x98] sm:$0xff] %v2175
      %v2180 = vld [vmem:[#allocation2 + $0x8] sm:$0xff]
      %v2181 = vld [vmem:[#allocation2 + $0x10] sm:$0xff]
      %v2182 = vld [vmem:[#allocation2 + $0x18] sm:$0xff]
      %v2183 = vld [vmem:[#allocation2 + $0x28] sm:$0xff]
      %v2184 = vld [vmem:[#allocation2 + $0x30] sm:$0xff]
      %v2185 = vld [vmem:[#allocation2 + $0x38] sm:$0xff]
      %v2186 = vld [vmem:[#allocation2 + $0x48] sm:$0xff]
      %v2187 = vld [vmem:[#allocation2 + $0x50] sm:$0xff]
      %v2188 = vld [vmem:[#allocation2 + $0x58] sm:$0xff]
      %v2189 = vld [vmem:[#allocation2 + $0x68] sm:$0xff]
      %v2190 = vld [vmem:[#allocation2 + $0x70] sm:$0xff]
      %v2191 = vld [vmem:[#allocation2 + $0x78] sm:$0xff]
      %2204 = vrot.lane.b32.xlu0 %v2180, 126
      %v2205 = vpop.permute.xlu0 %2204
      %2206 = vrot.lane.b32.xlu0 %v2181, 126
      %v2207 = vpop.permute.xlu0 %2206
      %2208 = vrot.lane.b32.xlu0 %v2182, 126
      %v2209 = vpop.permute.xlu0 %2208
      %2210 = vrot.lane.b32.xlu0 %v2183, 126
      %v2211 = vpop.permute.xlu0 %2210
      %2212 = vrot.lane.b32.xlu0 %v2184, 126
      %v2213 = vpop.permute.xlu0 %2212
      %2214 = vrot.lane.b32.xlu0 %v2185, 126
      %v2215 = vpop.permute.xlu0 %2214
      %2216 = vrot.lane.b32.xlu0 %v2186, 126
      %v2217 = vpop.permute.xlu0 %2216
      %2218 = vrot.lane.b32.xlu0 %v2187, 126
      %v2219 = vpop.permute.xlu0 %2218
      %2220 = vrot.lane.b32.xlu0 %v2188, 126
      %v2221 = vpop.permute.xlu0 %2220
      %2222 = vrot.lane.b32.xlu0 %v2189, 126
      %v2223 = vpop.permute.xlu0 %2222
      %2224 = vrot.lane.b32.xlu0 %v2190, 126
      %v2225 = vpop.permute.xlu0 %2224
      %2226 = vrot.lane.b32.xlu0 %v2191, 126
      %v2227 = vpop.permute.xlu0 %2226
      %vm2228 = vcmask 1031168
      %v2229 = vsel %vm2228, %v2205, %v2207
      %v2230 = vsel %vm2228, %v2207, %v2209
      %v2231 = vsel %vm2228, %v2211, %v2213
      %v2232 = vsel %vm2228, %v2213, %v2215
      %v2233 = vsel %vm2228, %v2217, %v2219
      %v2234 = vsel %vm2228, %v2219, %v2221
      %v2235 = vsel %vm2228, %v2223, %v2225
      %v2236 = vsel %vm2228, %v2225, %v2227
      %v2245 = vsel %vm2013, %v2229, 0.0
      %v2246 = vsel %vm2014, %v2230, 0.0
      %v2247 = vsel %vm2013, %v2231, 0.0
      %v2248 = vsel %vm2014, %v2232, 0.0
      %v2249 = vsel %vm2013, %v2233, 0.0
      %v2250 = vsel %vm2014, %v2234, 0.0
      %v2251 = vsel %vm2013, %v2235, 0.0
      %v2252 = vsel %vm2014, %v2236, 0.0
      %v2253 = vpack.c.bf16 %v2247, %v2245
      %v2254 = vpack.c.bf16 %v2248, %v2246
      %v2255 = vpack.c.bf16 %v2251, %v2249
      %v2256 = vpack.c.bf16 %v2252, %v2250
      %2257 = vst [vmem:[#allocation3 + $0xa0] sm:$0xff] %v2253
      %2258 = vst [vmem:[#allocation3 + $0xa8] sm:$0xff] %v2254
      %2259 = vst [vmem:[#allocation3 + $0xb0] sm:$0xff] %v2255
      %2260 = vst [vmem:[#allocation3 + $0xb8] sm:$0xff] %v2256
      %v2261 = vld [vmem:[#allocation2 + $0x8] sm:$0xff]
      %v2262 = vld [vmem:[#allocation2 + $0x10] sm:$0xff]
      %v2263 = vld [vmem:[#allocation2 + $0x18] sm:$0xff]
      %v2264 = vld [vmem:[#allocation2 + $0x28] sm:$0xff]
      %v2265 = vld [vmem:[#allocation2 + $0x30] sm:$0xff]
      %v2266 = vld [vmem:[#allocation2 + $0x38] sm:$0xff]
      %v2267 = vld [vmem:[#allocation2 + $0x48] sm:$0xff]
      %v2268 = vld [vmem:[#allocation2 + $0x50] sm:$0xff]
      %v2269 = vld [vmem:[#allocation2 + $0x58] sm:$0xff]
      %v2270 = vld [vmem:[#allocation2 + $0x68] sm:$0xff]
      %v2271 = vld [vmem:[#allocation2 + $0x70] sm:$0xff]
      %v2272 = vld [vmem:[#allocation2 + $0x78] sm:$0xff]
      %2285 = vrot.lane.b32.xlu0 %v2261, 98
      %v2286 = vpop.permute.xlu0 %2285
      %2287 = vrot.lane.b32.xlu0 %v2262, 98
      %v2288 = vpop.permute.xlu0 %2287
      %2289 = vrot.lane.b32.xlu0 %v2263, 98
      %v2290 = vpop.permute.xlu0 %2289
      %2291 = vrot.lane.b32.xlu0 %v2264, 98
      %v2292 = vpop.permute.xlu0 %2291
      %2293 = vrot.lane.b32.xlu0 %v2265, 98
      %v2294 = vpop.permute.xlu0 %2293
      %2295 = vrot.lane.b32.xlu0 %v2266, 98
      %v2296 = vpop.permute.xlu0 %2295
      %2297 = vrot.lane.b32.xlu0 %v2267, 98
      %v2298 = vpop.permute.xlu0 %2297
      %2299 = vrot.lane.b32.xlu0 %v2268, 98
      %v2300 = vpop.permute.xlu0 %2299
      %2301 = vrot.lane.b32.xlu0 %v2269, 98
      %v2302 = vpop.permute.xlu0 %2301
      %2303 = vrot.lane.b32.xlu0 %v2270, 98
      %v2304 = vpop.permute.xlu0 %2303
      %2305 = vrot.lane.b32.xlu0 %v2271, 98
      %v2306 = vpop.permute.xlu0 %2305
      %2307 = vrot.lane.b32.xlu0 %v2272, 98
      %v2308 = vpop.permute.xlu0 %2307
      %vm2309 = vcmask 801792
      %v2310 = vsel %vm2309, %v2286, %v2288
      %v2311 = vsel %vm2309, %v2288, %v2290
      %v2312 = vsel %vm2309, %v2292, %v2294
      %v2313 = vsel %vm2309, %v2294, %v2296
      %v2314 = vsel %vm2309, %v2298, %v2300
      %v2315 = vsel %vm2309, %v2300, %v2302
      %v2316 = vsel %vm2309, %v2304, %v2306
      %v2317 = vsel %vm2309, %v2306, %v2308
      %v2326 = vsel %vm1875, %v2310, 0.0
      %v2327 = vsel %vm1876, %v2311, 0.0
      %v2328 = vsel %vm1875, %v2312, 0.0
      %v2329 = vsel %vm1876, %v2313, 0.0
      %v2330 = vsel %vm1875, %v2314, 0.0
      %v2331 = vsel %vm1876, %v2315, 0.0
      %v2332 = vsel %vm1875, %v2316, 0.0
      %v2333 = vsel %vm1876, %v2317, 0.0
      %v2334 = vpack.c.bf16 %v2328, %v2326
      %v2335 = vpack.c.bf16 %v2329, %v2327
      %v2336 = vpack.c.bf16 %v2332, %v2330
      %v2337 = vpack.c.bf16 %v2333, %v2331
      %2338 = vst [vmem:[#allocation3 + $0xc0] sm:$0xff] %v2334
      %2339 = vst [vmem:[#allocation3 + $0xc8] sm:$0xff] %v2335
      %2340 = vst [vmem:[#allocation3 + $0xd0] sm:$0xff] %v2336
      %2341 = vst [vmem:[#allocation3 + $0xd8] sm:$0xff] %v2337
      %v2342 = vld [vmem:[#allocation2 + $0x8] sm:$0xff]
      %v2343 = vld [vmem:[#allocation2 + $0x10] sm:$0xff]
      %v2344 = vld [vmem:[#allocation2 + $0x18] sm:$0xff]
      %v2345 = vld [vmem:[#allocation2 + $0x28] sm:$0xff]
      %v2346 = vld [vmem:[#allocation2 + $0x30] sm:$0xff]
      %v2347 = vld [vmem:[#allocation2 + $0x38] sm:$0xff]
      %v2348 = vld [vmem:[#allocation2 + $0x48] sm:$0xff]
      %v2349 = vld [vmem:[#allocation2 + $0x50] sm:$0xff]
      %v2350 = vld [vmem:[#allocation2 + $0x58] sm:$0xff]
      %v2351 = vld [vmem:[#allocation2 + $0x68] sm:$0xff]
      %v2352 = vld [vmem:[#allocation2 + $0x70] sm:$0xff]
      %v2353 = vld [vmem:[#allocation2 + $0x78] sm:$0xff]
      %v2354 = vpack.c.bf16 %v2345, %v2342
      %v2355 = vpack.c.bf16 %v2346, %v2343
      %v2356 = vpack.c.bf16 %v2347, %v2344
      %v2357 = vpack.c.bf16 %v2351, %v2348
      %v2358 = vpack.c.bf16 %v2352, %v2349
      %v2359 = vpack.c.bf16 %v2353, %v2350
      %2366 = vrot.lane.b32.xlu0 %v2354, 96
      %v2367 = vpop.permute.xlu0 %2366
      %2368 = vrot.lane.b32.xlu0 %v2355, 96
      %v2369 = vpop.permute.xlu0 %2368
      %2370 = vrot.lane.b32.xlu0 %v2356, 96
      %v2371 = vpop.permute.xlu0 %2370
      %2372 = vrot.lane.b32.xlu0 %v2357, 96
      %v2373 = vpop.permute.xlu0 %2372
      %2374 = vrot.lane.b32.xlu0 %v2358, 96
      %v2375 = vpop.permute.xlu0 %2374
      %2376 = vrot.lane.b32.xlu0 %v2359, 96
      %v2377 = vpop.permute.xlu0 %2376
      %vm2378 = vcmask 785408
      %v2379 = vsel %vm2378, %v2367, %v2369
      %v2380 = vsel %vm2378, %v2369, %v2371
      %v2381 = vsel %vm2378, %v2373, %v2375
      %v2382 = vsel %vm2378, %v2375, %v2377
      %2387 = vst [vmem:[#allocation3 + $0xe0] sm:$0xff] %v2379
      %2388 = vst [vmem:[#allocation3 + $0xe8] sm:$0xff] %v2380
      %2389 = vst [vmem:[#allocation3 + $0xf0] sm:$0xff] %v2381
      %2390 = vst [vmem:[#allocation3 + $0xf8] sm:$0xff] %v2382
      %v2391 = vld [vmem:[#allocation2 + $0x8] sm:$0xff]
      %v2392 = vld [vmem:[#allocation2 + $0x10] sm:$0xff]
      %v2393 = vld [vmem:[#allocation2 + $0x18] sm:$0xff]
      %v2394 = vld [vmem:[#allocation2 + $0x28] sm:$0xff]
      %v2395 = vld [vmem:[#allocation2 + $0x30] sm:$0xff]
      %v2396 = vld [vmem:[#allocation2 + $0x38] sm:$0xff]
      %v2397 = vld [vmem:[#allocation2 + $0x48] sm:$0xff]
      %v2398 = vld [vmem:[#allocation2 + $0x50] sm:$0xff]
      %v2399 = vld [vmem:[#allocation2 + $0x58] sm:$0xff]
      %v2400 = vld [vmem:[#allocation2 + $0x68] sm:$0xff]
      %v2401 = vld [vmem:[#allocation2 + $0x70] sm:$0xff]
      %v2402 = vld [vmem:[#allocation2 + $0x78] sm:$0xff]
      %2415 = vrot.lane.b32.xlu0 %v2391, 94
      %v2416 = vpop.permute.xlu0 %2415
      %2417 = vrot.lane.b32.xlu0 %v2392, 94
      %v2418 = vpop.permute.xlu0 %2417
      %2419 = vrot.lane.b32.xlu0 %v2393, 94
      %v2420 = vpop.permute.xlu0 %2419
      %2421 = vrot.lane.b32.xlu0 %v2394, 94
      %v2422 = vpop.permute.xlu0 %2421
      %2423 = vrot.lane.b32.xlu0 %v2395, 94
      %v2424 = vpop.permute.xlu0 %2423
      %2425 = vrot.lane.b32.xlu0 %v2396, 94
      %v2426 = vpop.permute.xlu0 %2425
      %2427 = vrot.lane.b32.xlu0 %v2397, 94
      %v2428 = vpop.permute.xlu0 %2427
      %2429 = vrot.lane.b32.xlu0 %v2398, 94
      %v2430 = vpop.permute.xlu0 %2429
      %2431 = vrot.lane.b32.xlu0 %v2399, 94
      %v2432 = vpop.permute.xlu0 %2431
      %2433 = vrot.lane.b32.xlu0 %v2400, 94
      %v2434 = vpop.permute.xlu0 %2433
      %2435 = vrot.lane.b32.xlu0 %v2401, 94
      %v2436 = vpop.permute.xlu0 %2435
      %2437 = vrot.lane.b32.xlu0 %v2402, 94
      %v2438 = vpop.permute.xlu0 %2437
      %vm2439 = vcmask 769024
      %v2440 = vsel %vm2439, %v2416, %v2418
      %v2441 = vsel %vm2439, %v2418, %v2420
      %v2442 = vsel %vm2439, %v2422, %v2424
      %v2443 = vsel %vm2439, %v2424, %v2426
      %v2444 = vsel %vm2439, %v2428, %v2430
      %v2445 = vsel %vm2439, %v2430, %v2432
      %v2446 = vsel %vm2439, %v2434, %v2436
      %v2447 = vsel %vm2439, %v2436, %v2438
      %v2456 = vsel %vm2013, %v2440, 0.0
      %v2457 = vsel %vm2014, %v2441, 0.0
      %v2458 = vsel %vm2013, %v2442, 0.0
      %v2459 = vsel %vm2014, %v2443, 0.0
      %v2460 = vsel %vm2013, %v2444, 0.0
      %v2461 = vsel %vm2014, %v2445, 0.0
      %v2462 = vsel %vm2013, %v2446, 0.0
      %v2463 = vsel %vm2014, %v2447, 0.0
      %v2464 = vpack.c.bf16 %v2458, %v2456
      %v2465 = vpack.c.bf16 %v2459, %v2457
      %v2466 = vpack.c.bf16 %v2462, %v2460
      %v2467 = vpack.c.bf16 %v2463, %v2461
      %2468 = vst [vmem:[#allocation3 + $0x100] sm:$0xff] %v2464
      %2469 = vst [vmem:[#allocation3 + $0x108] sm:$0xff] %v2465
      %2470 = vst [vmem:[#allocation3 + $0x110] sm:$0xff] %v2466
      %2471 = vst [vmem:[#allocation3 + $0x118] sm:$0xff] %v2467
      %s2472 = scalar_lea.vmem %s4, 48
      %v2473 = vld [vmem:[%s2472] sm:$0xff]
      %v2474 = vld [vmem:[%s2472 + $0x8] sm:$0xf]
      %v2475 = vld [vmem:[%s2472 + $0xc] sm:$0xff]
      %v2476 = vld [vmem:[%s2472 + $0x14] sm:$0xf]
      %v2477 = vld [vmem:[%s2472 + $0x18] sm:$0xff]
      %v2478 = vld [vmem:[%s2472 + $0x20] sm:$0xf]
      %v2479 = vld [vmem:[%s2472 + $0x24] sm:$0xff]
      %v2480 = vld [vmem:[%s2472 + $0x2c] sm:$0xf]
      %v2481 = vld [vmem:[#allocation3] sm:$0xff]
      %v2482 = vld [vmem:[#allocation3 + $0x8] sm:$0xff]
      %v2483 = vld [vmem:[#allocation3 + $0x10] sm:$0xff]
      %v2484 = vld [vmem:[#allocation3 + $0x18] sm:$0xff]
      %v2485 = vld [vmem:[#allocation3 + $0x20] sm:$0xff]
      %v2486 = vld [vmem:[#allocation3 + $0x28] sm:$0xff]
      %v2487 = vld [vmem:[#allocation3 + $0x30] sm:$0xff]
      %v2488 = vld [vmem:[#allocation3 + $0x38] sm:$0xff]
      %v2489 = vld [vmem:[#allocation3 + $0x40] sm:$0xff]
      %v2490 = vld [vmem:[#allocation3 + $0x48] sm:$0xff]
      %v2491 = vld [vmem:[#allocation3 + $0x50] sm:$0xff]
      %v2492 = vld [vmem:[#allocation3 + $0x58] sm:$0xff]
      %v2493 = vld [vmem:[#allocation3 + $0x60] sm:$0xff]
      %v2494 = vld [vmem:[#allocation3 + $0x68] sm:$0xff]
      %v2495 = vld [vmem:[#allocation3 + $0x70] sm:$0xff]
      %v2496 = vld [vmem:[#allocation3 + $0x78] sm:$0xff]
      %v2497 = vld [vmem:[#allocation3 + $0x80] sm:$0xff]
      %v2498 = vld [vmem:[#allocation3 + $0x88] sm:$0xff]
      %v2499 = vld [vmem:[#allocation3 + $0x90] sm:$0xff]
      %v2500 = vld [vmem:[#allocation3 + $0x98] sm:$0xff]
      %v2501 = vld [vmem:[#allocation3 + $0xa0] sm:$0xff]
      %v2502 = vld [vmem:[#allocation3 + $0xa8] sm:$0xff]
      %v2503 = vld [vmem:[#allocation3 + $0xb0] sm:$0xff]
      %v2504 = vld [vmem:[#allocation3 + $0xb8] sm:$0xff]
      %v2505 = vld [vmem:[#allocation3 + $0xc0] sm:$0xff]
      %v2506 = vld [vmem:[#allocation3 + $0xc8] sm:$0xff]
      %v2507 = vld [vmem:[#allocation3 + $0xd0] sm:$0xff]
      %v2508 = vld [vmem:[#allocation3 + $0xd8] sm:$0xff]
      %v2509 = vld [vmem:[#allocation3 + $0xe0] sm:$0xff]
      %v2510 = vld [vmem:[#allocation3 + $0xe8] sm:$0xff]
      %v2511 = vld [vmem:[#allocation3 + $0xf0] sm:$0xff]
      %v2512 = vld [vmem:[#allocation3 + $0xf8] sm:$0xff]
      %v2513 = vld [vmem:[#allocation3 + $0x100] sm:$0xff]
      %v2514 = vld [vmem:[#allocation3 + $0x108] sm:$0xff]
      %v2515 = vld [vmem:[#allocation3 + $0x110] sm:$0xff]
      %v2516 = vld [vmem:[#allocation3 + $0x118] sm:$0xff]
      %s2517 = scalar_lea.vmem %s5, 32
      %v2518 = vld [vmem:[%s2517] sm:$0xff]
      %v2519 = vld [vmem:[%s2517 + $0x8] sm:$0xff]
      %v2520 = vld [vmem:[%s2517 + $0x10] sm:$0xff]
      %v2521 = vld [vmem:[%s2517 + $0x18] sm:$0xff]
      %2523 = vset.pattern.permute.xlu0 0
      %2524 = vperm.xlu0 %2523, %v2518
      %v2525 = vpop.permute.xlu0 %2524
      %2528 = vset.pattern.permute.xlu0 0
      %2529 = vperm.xlu0 %2528, %v2519
      %v2530 = vpop.permute.xlu0 %2529
      %2533 = vset.pattern.permute.xlu0 0
      %2534 = vperm.xlu0 %2533, %v2520
      %v2535 = vpop.permute.xlu0 %2534
      %2538 = vset.pattern.permute.xlu0 0
      %2539 = vperm.xlu0 %2538, %v2521
      %v2540 = vpop.permute.xlu0 %2539
      %v2550 = vunpack.c.l.b16 %v2473
      %v2551 = vunpack.c.h.b16 %v2473
      %v2552 = vunpack.c.l.b16 %v2474
      %v2553 = vunpack.c.l.b16 %v2475
      %v2554 = vunpack.c.h.b16 %v2475
      %v2555 = vunpack.c.l.b16 %v2476
      %v2556 = vunpack.c.l.b16 %v2477
      %v2557 = vunpack.c.h.b16 %v2477
      %v2558 = vunpack.c.l.b16 %v2478
      %v2559 = vunpack.c.l.b16 %v2479
      %v2560 = vunpack.c.h.b16 %v2479
      %v2561 = vunpack.c.l.b16 %v2480
      %v2562 = vpack.c.b16 %v2553, %v2550
      %v2563 = vpack.c.b16 %v2554, %v2551
      %v2564 = vpack.c.b16 %v2555, %v2552
      %v2565 = vpack.c.b16 %v2559, %v2556
      %v2566 = vpack.c.b16 %v2560, %v2557
      %v2567 = vpack.c.b16 %v2561, %v2558
      %v2573 = vsel %vm374, %v2564, 0
      %v2576 = vsel %vm374, %v2567, 0
      %2578 = vmatprep.subr.bf16.mxu0 %v2482
      %2579 = vmatpush1.bf16.msra.mxu0 %v2481
      %2580 = vmatprep.subr.bf16.mxu0 %v2484
      %2581 = vmatpush1.bf16.msra.mxu0 %v2483
      %2582 = vmatprep.subr.bf16.mxu0 %v2486
      %2583 = vmatpush1.bf16.msra.mxu0 %v2485
      %2584 = vmatprep.subr.bf16.mxu0 %v2488
      %2585 = vmatpush1.bf16.msra.mxu0 %v2487
      %2586 = vmatprep.subr.bf16.mxu0 %v2490
      %2587 = vmatpush1.bf16.msra.mxu0 %v2489
      %2588 = vmatprep.subr.bf16.mxu0 %v2492
      %2589 = vmatpush1.bf16.msra.mxu0 %v2491
      %2590 = vmatprep.subr.bf16.mxu0 %v2494
      %2591 = vmatpush1.bf16.msra.mxu0 %v2493
      %2592 = vmatprep.subr.bf16.mxu0 %v2496
      %2593 = vmatpush1.bf16.msra.mxu0 %v2495
      %2594 = vmatprep.subr.bf16.mxu0 %v2498
      %2595 = vmatpush1.bf16.msra.mxu0 %v2497
      %2596 = vmatprep.subr.bf16.mxu0 %v2500
      %2597 = vmatpush1.bf16.msra.mxu0 %v2499
      %2598 = vmatprep.subr.bf16.mxu0 %v2502
      %2599 = vmatpush1.bf16.msra.mxu0 %v2501
      %2600 = vmatprep.subr.bf16.mxu0 %v2504
      %2601 = vmatpush1.bf16.msra.mxu0 %v2503
      %2602 = vmatprep.subr.bf16.mxu0 %v2506
      %2603 = vmatpush1.bf16.msra.mxu0 %v2505
      %2604 = vmatprep.subr.bf16.mxu0 %v2508
      %2605 = vmatpush1.bf16.msra.mxu0 %v2507
      %2606 = vmatprep.subr.bf16.mxu0 %v2510
      %2607 = vmatpush1.bf16.msra.mxu0 %v2509
      %2608 = vmatprep.subr.bf16.mxu0 %v2512
      %2609 = vmatpush1.bf16.msra.mxu0 %v2511
      %2610 = vmatprep.mubr.bf16.mxu0 %v2563
      %2611 = vmatmul.mubr.bf16.gmra.mrb[0].mxu0 %v2562
      %v2612 = vpop.f32.mrb[0].mxu0
      %v2613 = vadd.f32 %v2525, %v2612
      %v2614 = vpop.f32.mrb[0].mxu0
      %v2615 = vadd.f32 %v2525, %v2614
      %v2616 = vpop.f32.mrb[0].mxu0
      %v2617 = vadd.f32 %v2530, %v2616
      %v2618 = vpop.f32.mrb[0].mxu0
      %v2619 = vadd.f32 %v2530, %v2618
      %2620 = vmatprep.mubr.bf16.mxu0 %v2566
      %2621 = vmatmul.mubr.bf16.gmra.mrb[0].mxu0 %v2565
      %v2622 = vpop.f32.mrb[0].mxu0
      %v2623 = vadd.f32 %v2535, %v2622
      %v2624 = vpop.f32.mrb[0].mxu0
      %v2625 = vadd.f32 %v2535, %v2624
      %v2626 = vpop.f32.mrb[0].mxu0
      %v2627 = vadd.f32 %v2540, %v2626
      %v2628 = vpop.f32.mrb[0].mxu0
      %v2629 = vadd.f32 %v2540, %v2628
      %2630 = vdwg.mxu0
      %2631 = vmatprep.subr.bf16.mxu0 %v2514
      %2632 = vmatpush1.bf16.msra.mxu0 %v2513
      %2633 = vmatprep.subr.bf16.mxu0 %v2516
      %2634 = vmatpush1.bf16.msra.mxu0 %v2515
      %2635 = vmatprep.subr.bf16.mxu0 0
      %2636 = vmatpush1.bf16.msra.mxu0 0
      %2637 = vmatprep.subr.bf16.mxu0 0
      %2638 = vmatpush1.bf16.msra.mxu0 0
      %2639 = vmatprep.subr.bf16.mxu0 0
      %2640 = vmatpush1.bf16.msra.mxu0 0
      %2641 = vmatprep.subr.bf16.mxu0 0
      %2642 = vmatpush1.bf16.msra.mxu0 0
      %2643 = vmatprep.subr.bf16.mxu0 0
      %2644 = vmatpush1.bf16.msra.mxu0 0
      %2645 = vmatprep.subr.bf16.mxu0 0
      %2646 = vmatpush1.bf16.msra.mxu0 0
      %2647 = vmatprep.subr.bf16.mxu0 0
      %2648 = vmatpush1.bf16.msra.mxu0 0
      %2649 = vmatprep.subr.bf16.mxu0 0
      %2650 = vmatpush1.bf16.msra.mxu0 0
      %2651 = vmatprep.subr.bf16.mxu0 0
      %2652 = vmatpush1.bf16.msra.mxu0 0
      %2653 = vmatprep.subr.bf16.mxu0 0
      %2654 = vmatpush1.bf16.msra.mxu0 0
      %2655 = vmatprep.subr.bf16.mxu0 0
      %2656 = vmatpush1.bf16.msra.mxu0 0
      %2657 = vmatprep.subr.bf16.mxu0 0
      %2658 = vmatpush1.bf16.msra.mxu0 0
      %2659 = vmatprep.subr.bf16.mxu0 0
      %2660 = vmatpush1.bf16.msra.mxu0 0
      %2661 = vmatprep.subr.bf16.mxu0 0
      %2662 = vmatpush1.bf16.msra.mxu0 0
      %2663 = vmatprep.mubr.bf16.mxu0 0
      %2664 = vmatmul.mubr.bf16.gmra.mrb[0].mxu0 %v2573
      %v2665 = vpop.f32.mrb[0].mxu0
      %v2666 = vadd.f32 %v2613, %v2665
      %v2667 = vpop.f32.mrb[0].mxu0
      %v2668 = vadd.f32 %v2615, %v2667
      %v2669 = vpop.f32.mrb[0].mxu0
      %v2670 = vadd.f32 %v2617, %v2669
      %v2671 = vpop.f32.mrb[0].mxu0
      %v2672 = vadd.f32 %v2619, %v2671
      %2673 = vmatprep.mubr.bf16.mxu0 0
      %2674 = vmatmul.mubr.bf16.gmra.mrb[0].mxu0 %v2576
      %v2675 = vpop.f32.mrb[0].mxu0
      %v2676 = vadd.f32 %v2623, %v2675
      %v2677 = vpop.f32.mrb[0].mxu0
      %v2678 = vadd.f32 %v2625, %v2677
      %v2679 = vpop.f32.mrb[0].mxu0
      %v2680 = vadd.f32 %v2627, %v2679
      %v2681 = vpop.f32.mrb[0].mxu0
      %v2682 = vadd.f32 %v2629, %v2681
      %2683 = vdwg.mxu0
      %v2684 = vxor.u32 %v2666, 2147483648
      %v2685 = vxor.u32 %v2668, 2147483648
      %v2686 = vxor.u32 %v2670, 2147483648
      %v2687 = vxor.u32 %v2672, 2147483648
      %v2688 = vxor.u32 %v2676, 2147483648
      %v2689 = vxor.u32 %v2678, 2147483648
      %v2690 = vxor.u32 %v2680, 2147483648
      %v2691 = vxor.u32 %v2682, 2147483648
      %v2692 = vmul.f32 %v2684, 1.442695
      %v2693 = vpow.pop %v2692
      %v2694 = vmul.f32 %v2685, 1.442695
      %v2695 = vpow.pop %v2694
      %v2696 = vmul.f32 %v2686, 1.442695
      %v2697 = vpow.pop %v2696
      %v2698 = vmul.f32 %v2687, 1.442695
      %v2699 = vpow.pop %v2698
      %v2700 = vmul.f32 %v2688, 1.442695
      %v2701 = vpow.pop %v2700
      %v2702 = vmul.f32 %v2689, 1.442695
      %v2703 = vpow.pop %v2702
      %v2704 = vmul.f32 %v2690, 1.442695
      %v2705 = vpow.pop %v2704
      %v2706 = vmul.f32 %v2691, 1.442695
      %v2707 = vpow.pop %v2706
      %v2708 = vadd.f32 %v2693, 1.0
      %v2709 = vadd.f32 %v2695, 1.0
      %v2710 = vadd.f32 %v2697, 1.0
      %v2711 = vadd.f32 %v2699, 1.0
      %v2712 = vadd.f32 %v2701, 1.0
      %v2713 = vadd.f32 %v2703, 1.0
      %v2714 = vadd.f32 %v2705, 1.0
      %v2715 = vadd.f32 %v2707, 1.0
      %v2716 = vrcp.pop %v2708
      %v2717 = vmul.f32 1.0, %v2716
      %v2718 = vrcp.pop %v2709
      %v2719 = vmul.f32 1.0, %v2718
      %v2720 = vrcp.pop %v2710
      %v2721 = vmul.f32 1.0, %v2720
      %v2722 = vrcp.pop %v2711
      %v2723 = vmul.f32 1.0, %v2722
      %v2724 = vrcp.pop %v2712
      %v2725 = vmul.f32 1.0, %v2724
      %v2726 = vrcp.pop %v2713
      %v2727 = vmul.f32 1.0, %v2726
      %v2728 = vrcp.pop %v2714
      %v2729 = vmul.f32 1.0, %v2728
      %v2730 = vrcp.pop %v2715
      %v2731 = vmul.f32 1.0, %v2730
      %v2732 = vadd.f32 %v1841, %v2717
      %v2733 = vadd.f32 %v1842, %v2719
      %v2734 = vadd.f32 %v1843, %v2721
      %v2735 = vadd.f32 %v1844, %v2723
      %v2736 = vadd.f32 %v1845, %v2725
      %v2737 = vadd.f32 %v1846, %v2727
      %v2738 = vadd.f32 %v1847, %v2729
      %v2739 = vadd.f32 %v1848, %v2731
      %2740 = vst [vmem:[#allocation2 + $0x8] sm:$0xff] %v2666
      %2741 = vst [vmem:[#allocation2 + $0x10] sm:$0xff] %v2668
      %2742 = vst [vmem:[#allocation2 + $0x28] sm:$0xff] %v2670
      %2743 = vst [vmem:[#allocation2 + $0x30] sm:$0xff] %v2672
      %2744 = vst [vmem:[#allocation2 + $0x48] sm:$0xff] %v2676
      %2745 = vst [vmem:[#allocation2 + $0x50] sm:$0xff] %v2678
      %2746 = vst [vmem:[#allocation2 + $0x68] sm:$0xff] %v2680
      %2747 = vst [vmem:[#allocation2 + $0x70] sm:$0xff] %v2682
      %v2748 = vld [vmem:[#allocation2] sm:$0xff]
      %v2749 = vld [vmem:[#allocation2 + $0x8] sm:$0xff]
      %v2750 = vld [vmem:[#allocation2 + $0x10] sm:$0xff]
      %v2751 = vld [vmem:[#allocation2 + $0x20] sm:$0xff]
      %v2752 = vld [vmem:[#allocation2 + $0x28] sm:$0xff]
      %v2753 = vld [vmem:[#allocation2 + $0x30] sm:$0xff]
      %v2754 = vld [vmem:[#allocation2 + $0x40] sm:$0xff]
      %v2755 = vld [vmem:[#allocation2 + $0x48] sm:$0xff]
      %v2756 = vld [vmem:[#allocation2 + $0x50] sm:$0xff]
      %v2757 = vld [vmem:[#allocation2 + $0x60] sm:$0xff]
      %v2758 = vld [vmem:[#allocation2 + $0x68] sm:$0xff]
      %v2759 = vld [vmem:[#allocation2 + $0x70] sm:$0xff]
      %v2760 = vadd.s32 %v957, 4294967293
      %v2761 = vadd.s32 %v958, 4294967293
      %vm2762 = vcmp.ge.s32.totalorder %v2760, 0
      %vm2763 = vcmp.ge.s32.totalorder %v2761, 0
      %vm2764 = vcmp.lt.s32.totalorder %v2760, 16
      %vm2765 = vcmp.lt.s32.totalorder %v2761, 16
      %vm2766 = vmand %vm2762, %vm2764
      %vm2767 = vmand %vm2763, %vm2765
      %2780 = vrot.lane.b32.xlu0 %v2748, 51
      %v2781 = vpop.permute.xlu0 %2780
      %2782 = vrot.lane.b32.xlu0 %v2749, 51
      %v2783 = vpop.permute.xlu0 %2782
      %2784 = vrot.lane.b32.xlu0 %v2750, 51
      %v2785 = vpop.permute.xlu0 %2784
      %2786 = vrot.lane.b32.xlu0 %v2751, 51
      %v2787 = vpop.permute.xlu0 %2786
      %2788 = vrot.lane.b32.xlu0 %v2752, 51
      %v2789 = vpop.permute.xlu0 %2788
      %2790 = vrot.lane.b32.xlu0 %v2753, 51
      %v2791 = vpop.permute.xlu0 %2790
      %2792 = vrot.lane.b32.xlu0 %v2754, 51
      %v2793 = vpop.permute.xlu0 %2792
      %2794 = vrot.lane.b32.xlu0 %v2755, 51
      %v2795 = vpop.permute.xlu0 %2794
      %2796 = vrot.lane.b32.xlu0 %v2756, 51
      %v2797 = vpop.permute.xlu0 %2796
      %2798 = vrot.lane.b32.xlu0 %v2757, 51
      %v2799 = vpop.permute.xlu0 %2798
      %2800 = vrot.lane.b32.xlu0 %v2758, 51
      %v2801 = vpop.permute.xlu0 %2800
      %2802 = vrot.lane.b32.xlu0 %v2759, 51
      %v2803 = vpop.permute.xlu0 %2802
      %vm2804 = vcmask 416768
      %v2805 = vsel %vm2804, %v2781, %v2783
      %v2806 = vsel %vm2804, %v2783, %v2785
      %v2807 = vsel %vm2804, %v2787, %v2789
      %v2808 = vsel %vm2804, %v2789, %v2791
      %v2809 = vsel %vm2804, %v2793, %v2795
      %v2810 = vsel %vm2804, %v2795, %v2797
      %v2811 = vsel %vm2804, %v2799, %v2801
      %v2812 = vsel %vm2804, %v2801, %v2803
      %v2821 = vsel %vm2766, %v2805, 0.0
      %v2822 = vsel %vm2767, %v2806, 0.0
      %v2823 = vsel %vm2766, %v2807, 0.0
      %v2824 = vsel %vm2767, %v2808, 0.0
      %v2825 = vsel %vm2766, %v2809, 0.0
      %v2826 = vsel %vm2767, %v2810, 0.0
      %v2827 = vsel %vm2766, %v2811, 0.0
      %v2828 = vsel %vm2767, %v2812, 0.0
      %v2829 = vpack.c.bf16 %v2823, %v2821
      %v2830 = vpack.c.bf16 %v2824, %v2822
      %v2831 = vpack.c.bf16 %v2827, %v2825
      %v2832 = vpack.c.bf16 %v2828, %v2826
      %2833 = vst [vmem:[#allocation3] sm:$0xff] %v2829
      %2834 = vst [vmem:[#allocation3 + $0x8] sm:$0xff] %v2830
      %2835 = vst [vmem:[#allocation3 + $0x10] sm:$0xff] %v2831
      %2836 = vst [vmem:[#allocation3 + $0x18] sm:$0xff] %v2832
      %v2837 = vld [vmem:[#allocation2] sm:$0xff]
      %v2838 = vld [vmem:[#allocation2 + $0x8] sm:$0xff]
      %v2839 = vld [vmem:[#allocation2 + $0x10] sm:$0xff]
      %v2840 = vld [vmem:[#allocation2 + $0x20] sm:$0xff]
      %v2841 = vld [vmem:[#allocation2 + $0x28] sm:$0xff]
      %v2842 = vld [vmem:[#allocation2 + $0x30] sm:$0xff]
      %v2843 = vld [vmem:[#allocation2 + $0x40] sm:$0xff]
      %v2844 = vld [vmem:[#allocation2 + $0x48] sm:$0xff]
      %v2845 = vld [vmem:[#allocation2 + $0x50] sm:$0xff]
      %v2846 = vld [vmem:[#allocation2 + $0x60] sm:$0xff]
      %v2847 = vld [vmem:[#allocation2 + $0x68] sm:$0xff]
      %v2848 = vld [vmem:[#allocation2 + $0x70] sm:$0xff]
      %v2849 = vpack.c.bf16 %v2840, %v2837
      %v2850 = vpack.c.bf16 %v2841, %v2838
      %v2851 = vpack.c.bf16 %v2842, %v2839
      %v2852 = vpack.c.bf16 %v2846, %v2843
      %v2853 = vpack.c.bf16 %v2847, %v2844
      %v2854 = vpack.c.bf16 %v2848, %v2845
      %2861 = vrot.lane.b32.xlu0 %v2849, 48
      %v2862 = vpop.permute.xlu0 %2861
      %2863 = vrot.lane.b32.xlu0 %v2850, 48
      %v2864 = vpop.permute.xlu0 %2863
      %2865 = vrot.lane.b32.xlu0 %v2851, 48
      %v2866 = vpop.permute.xlu0 %2865
      %2867 = vrot.lane.b32.xlu0 %v2852, 48
      %v2868 = vpop.permute.xlu0 %2867
      %2869 = vrot.lane.b32.xlu0 %v2853, 48
      %v2870 = vpop.permute.xlu0 %2869
      %2871 = vrot.lane.b32.xlu0 %v2854, 48
      %v2872 = vpop.permute.xlu0 %2871
      %vm2873 = vcmask 392192
      %v2874 = vsel %vm2873, %v2862, %v2864
      %v2875 = vsel %vm2873, %v2864, %v2866
      %v2876 = vsel %vm2873, %v2868, %v2870
      %v2877 = vsel %vm2873, %v2870, %v2872
      %2882 = vst [vmem:[#allocation3 + $0x20] sm:$0xff] %v2874
      %2883 = vst [vmem:[#allocation3 + $0x28] sm:$0xff] %v2875
      %2884 = vst [vmem:[#allocation3 + $0x30] sm:$0xff] %v2876
      %2885 = vst [vmem:[#allocation3 + $0x38] sm:$0xff] %v2877
      %v2886 = vld [vmem:[#allocation2] sm:$0xff]
      %v2887 = vld [vmem:[#allocation2 + $0x8] sm:$0xff]
      %v2888 = vld [vmem:[#allocation2 + $0x10] sm:$0xff]
      %v2889 = vld [vmem:[#allocation2 + $0x20] sm:$0xff]
      %v2890 = vld [vmem:[#allocation2 + $0x28] sm:$0xff]
      %v2891 = vld [vmem:[#allocation2 + $0x30] sm:$0xff]
      %v2892 = vld [vmem:[#allocation2 + $0x40] sm:$0xff]
      %v2893 = vld [vmem:[#allocation2 + $0x48] sm:$0xff]
      %v2894 = vld [vmem:[#allocation2 + $0x50] sm:$0xff]
      %v2895 = vld [vmem:[#allocation2 + $0x60] sm:$0xff]
      %v2896 = vld [vmem:[#allocation2 + $0x68] sm:$0xff]
      %v2897 = vld [vmem:[#allocation2 + $0x70] sm:$0xff]
      %v2898 = vadd.s32 %v957, 3
      %v2899 = vadd.s32 %v958, 3
      %vm2900 = vcmp.ge.s32.totalorder %v2898, 0
      %vm2901 = vcmp.ge.s32.totalorder %v2899, 0
      %vm2902 = vcmp.lt.s32.totalorder %v2898, 16
      %vm2903 = vcmp.lt.s32.totalorder %v2899, 16
      %vm2904 = vmand %vm2900, %vm2902
      %vm2905 = vmand %vm2901, %vm2903
      %2918 = vrot.lane.b32.xlu0 %v2886, 45
      %v2919 = vpop.permute.xlu0 %2918
      %2920 = vrot.lane.b32.xlu0 %v2887, 45
      %v2921 = vpop.permute.xlu0 %2920
      %2922 = vrot.lane.b32.xlu0 %v2888, 45
      %v2923 = vpop.permute.xlu0 %2922
      %2924 = vrot.lane.b32.xlu0 %v2889, 45
      %v2925 = vpop.permute.xlu0 %2924
      %2926 = vrot.lane.b32.xlu0 %v2890, 45
      %v2927 = vpop.permute.xlu0 %2926
      %2928 = vrot.lane.b32.xlu0 %v2891, 45
      %v2929 = vpop.permute.xlu0 %2928
      %2930 = vrot.lane.b32.xlu0 %v2892, 45
      %v2931 = vpop.permute.xlu0 %2930
      %2932 = vrot.lane.b32.xlu0 %v2893, 45
      %v2933 = vpop.permute.xlu0 %2932
      %2934 = vrot.lane.b32.xlu0 %v2894, 45
      %v2935 = vpop.permute.xlu0 %2934
      %2936 = vrot.lane.b32.xlu0 %v2895, 45
      %v2937 = vpop.permute.xlu0 %2936
      %2938 = vrot.lane.b32.xlu0 %v2896, 45
      %v2939 = vpop.permute.xlu0 %2938
      %2940 = vrot.lane.b32.xlu0 %v2897, 45
      %v2941 = vpop.permute.xlu0 %2940
      %vm2942 = vcmask 367616
      %v2943 = vsel %vm2942, %v2919, %v2921
      %v2944 = vsel %vm2942, %v2921, %v2923
      %v2945 = vsel %vm2942, %v2925, %v2927
      %v2946 = vsel %vm2942, %v2927, %v2929
      %v2947 = vsel %vm2942, %v2931, %v2933
      %v2948 = vsel %vm2942, %v2933, %v2935
      %v2949 = vsel %vm2942, %v2937, %v2939
      %v2950 = vsel %vm2942, %v2939, %v2941
      %v2959 = vsel %vm2904, %v2943, 0.0
      %v2960 = vsel %vm2905, %v2944, 0.0
      %v2961 = vsel %vm2904, %v2945, 0.0
      %v2962 = vsel %vm2905, %v2946, 0.0
      %v2963 = vsel %vm2904, %v2947, 0.0
      %v2964 = vsel %vm2905, %v2948, 0.0
      %v2965 = vsel %vm2904, %v2949, 0.0
      %v2966 = vsel %vm2905, %v2950, 0.0
      %v2967 = vpack.c.bf16 %v2961, %v2959
      %v2968 = vpack.c.bf16 %v2962, %v2960
      %v2969 = vpack.c.bf16 %v2965, %v2963
      %v2970 = vpack.c.bf16 %v2966, %v2964
      %2971 = vst [vmem:[#allocation3 + $0x40] sm:$0xff] %v2967
      %2972 = vst [vmem:[#allocation3 + $0x48] sm:$0xff] %v2968
      %2973 = vst [vmem:[#allocation3 + $0x50] sm:$0xff] %v2969
      %2974 = vst [vmem:[#allocation3 + $0x58] sm:$0xff] %v2970
      %v2975 = vld [vmem:[#allocation2] sm:$0xff]
      %v2976 = vld [vmem:[#allocation2 + $0x8] sm:$0xff]
      %v2977 = vld [vmem:[#allocation2 + $0x10] sm:$0xff]
      %v2978 = vld [vmem:[#allocation2 + $0x20] sm:$0xff]
      %v2979 = vld [vmem:[#allocation2 + $0x28] sm:$0xff]
      %v2980 = vld [vmem:[#allocation2 + $0x30] sm:$0xff]
      %v2981 = vld [vmem:[#allocation2 + $0x40] sm:$0xff]
      %v2982 = vld [vmem:[#allocation2 + $0x48] sm:$0xff]
      %v2983 = vld [vmem:[#allocation2 + $0x50] sm:$0xff]
      %v2984 = vld [vmem:[#allocation2 + $0x60] sm:$0xff]
      %v2985 = vld [vmem:[#allocation2 + $0x68] sm:$0xff]
      %v2986 = vld [vmem:[#allocation2 + $0x70] sm:$0xff]
      %2999 = vrot.lane.b32.xlu0 %v2975, 3
      %v3000 = vpop.permute.xlu0 %2999
      %3001 = vrot.lane.b32.xlu0 %v2976, 3
      %v3002 = vpop.permute.xlu0 %3001
      %3003 = vrot.lane.b32.xlu0 %v2977, 3
      %v3004 = vpop.permute.xlu0 %3003
      %3005 = vrot.lane.b32.xlu0 %v2978, 3
      %v3006 = vpop.permute.xlu0 %3005
      %3007 = vrot.lane.b32.xlu0 %v2979, 3
      %v3008 = vpop.permute.xlu0 %3007
      %3009 = vrot.lane.b32.xlu0 %v2980, 3
      %v3010 = vpop.permute.xlu0 %3009
      %3011 = vrot.lane.b32.xlu0 %v2981, 3
      %v3012 = vpop.permute.xlu0 %3011
      %3013 = vrot.lane.b32.xlu0 %v2982, 3
      %v3014 = vpop.permute.xlu0 %3013
      %3015 = vrot.lane.b32.xlu0 %v2983, 3
      %v3016 = vpop.permute.xlu0 %3015
      %3017 = vrot.lane.b32.xlu0 %v2984, 3
      %v3018 = vpop.permute.xlu0 %3017
      %3019 = vrot.lane.b32.xlu0 %v2985, 3
      %v3020 = vpop.permute.xlu0 %3019
      %3021 = vrot.lane.b32.xlu0 %v2986, 3
      %v3022 = vpop.permute.xlu0 %3021
      %vm3023 = vcmask 23552
      %v3024 = vsel %vm3023, %v3000, %v3002
      %v3025 = vsel %vm3023, %v3002, %v3004
      %v3026 = vsel %vm3023, %v3006, %v3008
      %v3027 = vsel %vm3023, %v3008, %v3010
      %v3028 = vsel %vm3023, %v3012, %v3014
      %v3029 = vsel %vm3023, %v3014, %v3016
      %v3030 = vsel %vm3023, %v3018, %v3020
      %v3031 = vsel %vm3023, %v3020, %v3022
      %v3040 = vsel %vm2766, %v3024, 0.0
      %v3041 = vsel %vm2767, %v3025, 0.0
      %v3042 = vsel %vm2766, %v3026, 0.0
      %v3043 = vsel %vm2767, %v3027, 0.0
      %v3044 = vsel %vm2766, %v3028, 0.0
      %v3045 = vsel %vm2767, %v3029, 0.0
      %v3046 = vsel %vm2766, %v3030, 0.0
      %v3047 = vsel %vm2767, %v3031, 0.0
      %v3048 = vpack.c.bf16 %v3042, %v3040
      %v3049 = vpack.c.bf16 %v3043, %v3041
      %v3050 = vpack.c.bf16 %v3046, %v3044
      %v3051 = vpack.c.bf16 %v3047, %v3045
      %3052 = vst [vmem:[#allocation3 + $0x60] sm:$0xff] %v3048
      %3053 = vst [vmem:[#allocation3 + $0x68] sm:$0xff] %v3049
      %3054 = vst [vmem:[#allocation3 + $0x70] sm:$0xff] %v3050
      %3055 = vst [vmem:[#allocation3 + $0x78] sm:$0xff] %v3051
      %v3056 = vld [vmem:[#allocation2 + $0x8] sm:$0xff]
      %v3057 = vld [vmem:[#allocation2 + $0x10] sm:$0xff]
      %v3058 = vld [vmem:[#allocation2 + $0x28] sm:$0xff]
      %v3059 = vld [vmem:[#allocation2 + $0x30] sm:$0xff]
      %v3060 = vld [vmem:[#allocation2 + $0x48] sm:$0xff]
      %v3061 = vld [vmem:[#allocation2 + $0x50] sm:$0xff]
      %v3062 = vld [vmem:[#allocation2 + $0x68] sm:$0xff]
      %v3063 = vld [vmem:[#allocation2 + $0x70] sm:$0xff]
      %v3064 = vpack.c.bf16 %v3058, %v3056
      %v3065 = vpack.c.bf16 %v3059, %v3057
      %v3066 = vpack.c.bf16 %v3062, %v3060
      %v3067 = vpack.c.bf16 %v3063, %v3061
      %3068 = vst [vmem:[#allocation3 + $0x80] sm:$0xff] %v3064
      %3069 = vst [vmem:[#allocation3 + $0x88] sm:$0xff] %v3065
      %3070 = vst [vmem:[#allocation3 + $0x90] sm:$0xff] %v3066
      %3071 = vst [vmem:[#allocation3 + $0x98] sm:$0xff] %v3067
      %v3072 = vld [vmem:[#allocation2 + $0x8] sm:$0xff]
      %v3073 = vld [vmem:[#allocation2 + $0x10] sm:$0xff]
      %v3074 = vld [vmem:[#allocation2 + $0x18] sm:$0xff]
      %v3075 = vld [vmem:[#allocation2 + $0x28] sm:$0xff]
      %v3076 = vld [vmem:[#allocation2 + $0x30] sm:$0xff]
      %v3077 = vld [vmem:[#allocation2 + $0x38] sm:$0xff]
      %v3078 = vld [vmem:[#allocation2 + $0x48] sm:$0xff]
      %v3079 = vld [vmem:[#allocation2 + $0x50] sm:$0xff]
      %v3080 = vld [vmem:[#allocation2 + $0x58] sm:$0xff]
      %v3081 = vld [vmem:[#allocation2 + $0x68] sm:$0xff]
      %v3082 = vld [vmem:[#allocation2 + $0x70] sm:$0xff]
      %v3083 = vld [vmem:[#allocation2 + $0x78] sm:$0xff]
      %3096 = vrot.lane.b32.xlu0 %v3072, 125
      %v3097 = vpop.permute.xlu0 %3096
      %3098 = vrot.lane.b32.xlu0 %v3073, 125
      %v3099 = vpop.permute.xlu0 %3098
      %3100 = vrot.lane.b32.xlu0 %v3074, 125
      %v3101 = vpop.permute.xlu0 %3100
      %3102 = vrot.lane.b32.xlu0 %v3075, 125
      %v3103 = vpop.permute.xlu0 %3102
      %3104 = vrot.lane.b32.xlu0 %v3076, 125
      %v3105 = vpop.permute.xlu0 %3104
      %3106 = vrot.lane.b32.xlu0 %v3077, 125
      %v3107 = vpop.permute.xlu0 %3106
      %3108 = vrot.lane.b32.xlu0 %v3078, 125
      %v3109 = vpop.permute.xlu0 %3108
      %3110 = vrot.lane.b32.xlu0 %v3079, 125
      %v3111 = vpop.permute.xlu0 %3110
      %3112 = vrot.lane.b32.xlu0 %v3080, 125
      %v3113 = vpop.permute.xlu0 %3112
      %3114 = vrot.lane.b32.xlu0 %v3081, 125
      %v3115 = vpop.permute.xlu0 %3114
      %3116 = vrot.lane.b32.xlu0 %v3082, 125
      %v3117 = vpop.permute.xlu0 %3116
      %3118 = vrot.lane.b32.xlu0 %v3083, 125
      %v3119 = vpop.permute.xlu0 %3118
      %vm3120 = vcmask 1022976
      %v3121 = vsel %vm3120, %v3097, %v3099
      %v3122 = vsel %vm3120, %v3099, %v3101
      %v3123 = vsel %vm3120, %v3103, %v3105
      %v3124 = vsel %vm3120, %v3105, %v3107
      %v3125 = vsel %vm3120, %v3109, %v3111
      %v3126 = vsel %vm3120, %v3111, %v3113
      %v3127 = vsel %vm3120, %v3115, %v3117
      %v3128 = vsel %vm3120, %v3117, %v3119
      %v3137 = vsel %vm2904, %v3121, 0.0
      %v3138 = vsel %vm2905, %v3122, 0.0
      %v3139 = vsel %vm2904, %v3123, 0.0
      %v3140 = vsel %vm2905, %v3124, 0.0
      %v3141 = vsel %vm2904, %v3125, 0.0
      %v3142 = vsel %vm2905, %v3126, 0.0
      %v3143 = vsel %vm2904, %v3127, 0.0
      %v3144 = vsel %vm2905, %v3128, 0.0
      %v3145 = vpack.c.bf16 %v3139, %v3137
      %v3146 = vpack.c.bf16 %v3140, %v3138
      %v3147 = vpack.c.bf16 %v3143, %v3141
      %v3148 = vpack.c.bf16 %v3144, %v3142
      %3149 = vst [vmem:[#allocation3 + $0xa0] sm:$0xff] %v3145
      %3150 = vst [vmem:[#allocation3 + $0xa8] sm:$0xff] %v3146
      %3151 = vst [vmem:[#allocation3 + $0xb0] sm:$0xff] %v3147
      %3152 = vst [vmem:[#allocation3 + $0xb8] sm:$0xff] %v3148
      %v3153 = vld [vmem:[#allocation2 + $0x8] sm:$0xff]
      %v3154 = vld [vmem:[#allocation2 + $0x10] sm:$0xff]
      %v3155 = vld [vmem:[#allocation2 + $0x18] sm:$0xff]
      %v3156 = vld [vmem:[#allocation2 + $0x28] sm:$0xff]
      %v3157 = vld [vmem:[#allocation2 + $0x30] sm:$0xff]
      %v3158 = vld [vmem:[#allocation2 + $0x38] sm:$0xff]
      %v3159 = vld [vmem:[#allocation2 + $0x48] sm:$0xff]
      %v3160 = vld [vmem:[#allocation2 + $0x50] sm:$0xff]
      %v3161 = vld [vmem:[#allocation2 + $0x58] sm:$0xff]
      %v3162 = vld [vmem:[#allocation2 + $0x68] sm:$0xff]
      %v3163 = vld [vmem:[#allocation2 + $0x70] sm:$0xff]
      %v3164 = vld [vmem:[#allocation2 + $0x78] sm:$0xff]
      %3177 = vrot.lane.b32.xlu0 %v3153, 83
      %v3178 = vpop.permute.xlu0 %3177
      %3179 = vrot.lane.b32.xlu0 %v3154, 83
      %v3180 = vpop.permute.xlu0 %3179
      %3181 = vrot.lane.b32.xlu0 %v3155, 83
      %v3182 = vpop.permute.xlu0 %3181
      %3183 = vrot.lane.b32.xlu0 %v3156, 83
      %v3184 = vpop.permute.xlu0 %3183
      %3185 = vrot.lane.b32.xlu0 %v3157, 83
      %v3186 = vpop.permute.xlu0 %3185
      %3187 = vrot.lane.b32.xlu0 %v3158, 83
      %v3188 = vpop.permute.xlu0 %3187
      %3189 = vrot.lane.b32.xlu0 %v3159, 83
      %v3190 = vpop.permute.xlu0 %3189
      %3191 = vrot.lane.b32.xlu0 %v3160, 83
      %v3192 = vpop.permute.xlu0 %3191
      %3193 = vrot.lane.b32.xlu0 %v3161, 83
      %v3194 = vpop.permute.xlu0 %3193
      %3195 = vrot.lane.b32.xlu0 %v3162, 83
      %v3196 = vpop.permute.xlu0 %3195
      %3197 = vrot.lane.b32.xlu0 %v3163, 83
      %v3198 = vpop.permute.xlu0 %3197
      %3199 = vrot.lane.b32.xlu0 %v3164, 83
      %v3200 = vpop.permute.xlu0 %3199
      %vm3201 = vcmask 678912
      %v3202 = vsel %vm3201, %v3178, %v3180
      %v3203 = vsel %vm3201, %v3180, %v3182
      %v3204 = vsel %vm3201, %v3184, %v3186
      %v3205 = vsel %vm3201, %v3186, %v3188
      %v3206 = vsel %vm3201, %v3190, %v3192
      %v3207 = vsel %vm3201, %v3192, %v3194
      %v3208 = vsel %vm3201, %v3196, %v3198
      %v3209 = vsel %vm3201, %v3198, %v3200
      %v3218 = vsel %vm2766, %v3202, 0.0
      %v3219 = vsel %vm2767, %v3203, 0.0
      %v3220 = vsel %vm2766, %v3204, 0.0
      %v3221 = vsel %vm2767, %v3205, 0.0
      %v3222 = vsel %vm2766, %v3206, 0.0
      %v3223 = vsel %vm2767, %v3207, 0.0
      %v3224 = vsel %vm2766, %v3208, 0.0
      %v3225 = vsel %vm2767, %v3209, 0.0
      %v3226 = vpack.c.bf16 %v3220, %v3218
      %v3227 = vpack.c.bf16 %v3221, %v3219
      %v3228 = vpack.c.bf16 %v3224, %v3222
      %v3229 = vpack.c.bf16 %v3225, %v3223
      %3230 = vst [vmem:[#allocation3 + $0xc0] sm:$0xff] %v3226
      %3231 = vst [vmem:[#allocation3 + $0xc8] sm:$0xff] %v3227
      %3232 = vst [vmem:[#allocation3 + $0xd0] sm:$0xff] %v3228
      %3233 = vst [vmem:[#allocation3 + $0xd8] sm:$0xff] %v3229
      %v3234 = vld [vmem:[#allocation2 + $0x8] sm:$0xff]
      %v3235 = vld [vmem:[#allocation2 + $0x10] sm:$0xff]
      %v3236 = vld [vmem:[#allocation2 + $0x18] sm:$0xff]
      %v3237 = vld [vmem:[#allocation2 + $0x28] sm:$0xff]
      %v3238 = vld [vmem:[#allocation2 + $0x30] sm:$0xff]
      %v3239 = vld [vmem:[#allocation2 + $0x38] sm:$0xff]
      %v3240 = vld [vmem:[#allocation2 + $0x48] sm:$0xff]
      %v3241 = vld [vmem:[#allocation2 + $0x50] sm:$0xff]
      %v3242 = vld [vmem:[#allocation2 + $0x58] sm:$0xff]
      %v3243 = vld [vmem:[#allocation2 + $0x68] sm:$0xff]
      %v3244 = vld [vmem:[#allocation2 + $0x70] sm:$0xff]
      %v3245 = vld [vmem:[#allocation2 + $0x78] sm:$0xff]
      %v3246 = vpack.c.bf16 %v3237, %v3234
      %v3247 = vpack.c.bf16 %v3238, %v3235
      %v3248 = vpack.c.bf16 %v3239, %v3236
      %v3249 = vpack.c.bf16 %v3243, %v3240
      %v3250 = vpack.c.bf16 %v3244, %v3241
      %v3251 = vpack.c.bf16 %v3245, %v3242
      %3258 = vrot.lane.b32.xlu0 %v3246, 80
      %v3259 = vpop.permute.xlu0 %3258
      %3260 = vrot.lane.b32.xlu0 %v3247, 80
      %v3261 = vpop.permute.xlu0 %3260
      %3262 = vrot.lane.b32.xlu0 %v3248, 80
      %v3263 = vpop.permute.xlu0 %3262
      %3264 = vrot.lane.b32.xlu0 %v3249, 80
      %v3265 = vpop.permute.xlu0 %3264
      %3266 = vrot.lane.b32.xlu0 %v3250, 80
      %v3267 = vpop.permute.xlu0 %3266
      %3268 = vrot.lane.b32.xlu0 %v3251, 80
      %v3269 = vpop.permute.xlu0 %3268
      %vm3270 = vcmask 654336
      %v3271 = vsel %vm3270, %v3259, %v3261
      %v3272 = vsel %vm3270, %v3261, %v3263
      %v3273 = vsel %vm3270, %v3265, %v3267
      %v3274 = vsel %vm3270, %v3267, %v3269
      %3279 = vst [vmem:[#allocation3 + $0xe0] sm:$0xff] %v3271
      %3280 = vst [vmem:[#allocation3 + $0xe8] sm:$0xff] %v3272
      %3281 = vst [vmem:[#allocation3 + $0xf0] sm:$0xff] %v3273
      %3282 = vst [vmem:[#allocation3 + $0xf8] sm:$0xff] %v3274
      %v3283 = vld [vmem:[#allocation2 + $0x8] sm:$0xff]
      %v3284 = vld [vmem:[#allocation2 + $0x10] sm:$0xff]
      %v3285 = vld [vmem:[#allocation2 + $0x18] sm:$0xff]
      %v3286 = vld [vmem:[#allocation2 + $0x28] sm:$0xff]
      %v3287 = vld [vmem:[#allocation2 + $0x30] sm:$0xff]
      %v3288 = vld [vmem:[#allocation2 + $0x38] sm:$0xff]
      %v3289 = vld [vmem:[#allocation2 + $0x48] sm:$0xff]
      %v3290 = vld [vmem:[#allocation2 + $0x50] sm:$0xff]
      %v3291 = vld [vmem:[#allocation2 + $0x58] sm:$0xff]
      %v3292 = vld [vmem:[#allocation2 + $0x68] sm:$0xff]
      %v3293 = vld [vmem:[#allocation2 + $0x70] sm:$0xff]
      %v3294 = vld [vmem:[#allocation2 + $0x78] sm:$0xff]
      %3307 = vrot.lane.b32.xlu0 %v3283, 77
      %v3308 = vpop.permute.xlu0 %3307
      %3309 = vrot.lane.b32.xlu0 %v3284, 77
      %v3310 = vpop.permute.xlu0 %3309
      %3311 = vrot.lane.b32.xlu0 %v3285, 77
      %v3312 = vpop.permute.xlu0 %3311
      %3313 = vrot.lane.b32.xlu0 %v3286, 77
      %v3314 = vpop.permute.xlu0 %3313
      %3315 = vrot.lane.b32.xlu0 %v3287, 77
      %v3316 = vpop.permute.xlu0 %3315
      %3317 = vrot.lane.b32.xlu0 %v3288, 77
      %v3318 = vpop.permute.xlu0 %3317
      %3319 = vrot.lane.b32.xlu0 %v3289, 77
      %v3320 = vpop.permute.xlu0 %3319
      %3321 = vrot.lane.b32.xlu0 %v3290, 77
      %v3322 = vpop.permute.xlu0 %3321
      %3323 = vrot.lane.b32.xlu0 %v3291, 77
      %v3324 = vpop.permute.xlu0 %3323
      %3325 = vrot.lane.b32.xlu0 %v3292, 77
      %v3326 = vpop.permute.xlu0 %3325
      %3327 = vrot.lane.b32.xlu0 %v3293, 77
      %v3328 = vpop.permute.xlu0 %3327
      %3329 = vrot.lane.b32.xlu0 %v3294, 77
      %v3330 = vpop.permute.xlu0 %3329
      %vm3331 = vcmask 629760
      %v3332 = vsel %vm3331, %v3308, %v3310
      %v3333 = vsel %vm3331, %v3310, %v3312
      %v3334 = vsel %vm3331, %v3314, %v3316
      %v3335 = vsel %vm3331, %v3316, %v3318
      %v3336 = vsel %vm3331, %v3320, %v3322
      %v3337 = vsel %vm3331, %v3322, %v3324
      %v3338 = vsel %vm3331, %v3326, %v3328
      %v3339 = vsel %vm3331, %v3328, %v3330
      %v3348 = vsel %vm2904, %v3332, 0.0
      %v3349 = vsel %vm2905, %v3333, 0.0
      %v3350 = vsel %vm2904, %v3334, 0.0
      %v3351 = vsel %vm2905, %v3335, 0.0
      %v3352 = vsel %vm2904, %v3336, 0.0
      %v3353 = vsel %vm2905, %v3337, 0.0
      %v3354 = vsel %vm2904, %v3338, 0.0
      %v3355 = vsel %vm2905, %v3339, 0.0
      %v3356 = vpack.c.bf16 %v3350, %v3348
      %v3357 = vpack.c.bf16 %v3351, %v3349
      %v3358 = vpack.c.bf16 %v3354, %v3352
      %v3359 = vpack.c.bf16 %v3355, %v3353
      %3360 = vst [vmem:[#allocation3 + $0x100] sm:$0xff] %v3356
      %3361 = vst [vmem:[#allocation3 + $0x108] sm:$0xff] %v3357
      %3362 = vst [vmem:[#allocation3 + $0x110] sm:$0xff] %v3358
      %3363 = vst [vmem:[#allocation3 + $0x118] sm:$0xff] %v3359
      %s3364 = scalar_lea.vmem %s4, 96
      %v3365 = vld [vmem:[%s3364] sm:$0xff]
      %v3366 = vld [vmem:[%s3364 + $0x8] sm:$0xf]
      %v3367 = vld [vmem:[%s3364 + $0xc] sm:$0xff]
      %v3368 = vld [vmem:[%s3364 + $0x14] sm:$0xf]
      %v3369 = vld [vmem:[%s3364 + $0x18] sm:$0xff]
      %v3370 = vld [vmem:[%s3364 + $0x20] sm:$0xf]
      %v3371 = vld [vmem:[%s3364 + $0x24] sm:$0xff]
      %v3372 = vld [vmem:[%s3364 + $0x2c] sm:$0xf]
      %v3373 = vld [vmem:[#allocation3] sm:$0xff]
      %v3374 = vld [vmem:[#allocation3 + $0x8] sm:$0xff]
      %v3375 = vld [vmem:[#allocation3 + $0x10] sm:$0xff]
      %v3376 = vld [vmem:[#allocation3 + $0x18] sm:$0xff]
      %v3377 = vld [vmem:[#allocation3 + $0x20] sm:$0xff]
      %v3378 = vld [vmem:[#allocation3 + $0x28] sm:$0xff]
      %v3379 = vld [vmem:[#allocation3 + $0x30] sm:$0xff]
      %v3380 = vld [vmem:[#allocation3 + $0x38] sm:$0xff]
      %v3381 = vld [vmem:[#allocation3 + $0x40] sm:$0xff]
      %v3382 = vld [vmem:[#allocation3 + $0x48] sm:$0xff]
      %v3383 = vld [vmem:[#allocation3 + $0x50] sm:$0xff]
      %v3384 = vld [vmem:[#allocation3 + $0x58] sm:$0xff]
      %v3385 = vld [vmem:[#allocation3 + $0x60] sm:$0xff]
      %v3386 = vld [vmem:[#allocation3 + $0x68] sm:$0xff]
      %v3387 = vld [vmem:[#allocation3 + $0x70] sm:$0xff]
      %v3388 = vld [vmem:[#allocation3 + $0x78] sm:$0xff]
      %v3389 = vld [vmem:[#allocation3 + $0x80] sm:$0xff]
      %v3390 = vld [vmem:[#allocation3 + $0x88] sm:$0xff]
      %v3391 = vld [vmem:[#allocation3 + $0x90] sm:$0xff]
      %v3392 = vld [vmem:[#allocation3 + $0x98] sm:$0xff]
      %v3393 = vld [vmem:[#allocation3 + $0xa0] sm:$0xff]
      %v3394 = vld [vmem:[#allocation3 + $0xa8] sm:$0xff]
      %v3395 = vld [vmem:[#allocation3 + $0xb0] sm:$0xff]
      %v3396 = vld [vmem:[#allocation3 + $0xb8] sm:$0xff]
      %v3397 = vld [vmem:[#allocation3 + $0xc0] sm:$0xff]
      %v3398 = vld [vmem:[#allocation3 + $0xc8] sm:$0xff]
      %v3399 = vld [vmem:[#allocation3 + $0xd0] sm:$0xff]
      %v3400 = vld [vmem:[#allocation3 + $0xd8] sm:$0xff]
      %v3401 = vld [vmem:[#allocation3 + $0xe0] sm:$0xff]
      %v3402 = vld [vmem:[#allocation3 + $0xe8] sm:$0xff]
      %v3403 = vld [vmem:[#allocation3 + $0xf0] sm:$0xff]
      %v3404 = vld [vmem:[#allocation3 + $0xf8] sm:$0xff]
      %v3405 = vld [vmem:[#allocation3 + $0x100] sm:$0xff]
      %v3406 = vld [vmem:[#allocation3 + $0x108] sm:$0xff]
      %v3407 = vld [vmem:[#allocation3 + $0x110] sm:$0xff]
      %v3408 = vld [vmem:[#allocation3 + $0x118] sm:$0xff]
      %s3409 = scalar_lea.vmem %s5, 64
      %v3410 = vld [vmem:[%s3409] sm:$0xff]
      %v3411 = vld [vmem:[%s3409 + $0x8] sm:$0xff]
      %v3412 = vld [vmem:[%s3409 + $0x10] sm:$0xff]
      %v3413 = vld [vmem:[%s3409 + $0x18] sm:$0xff]
      %3415 = vset.pattern.permute.xlu0 0
      %3416 = vperm.xlu0 %3415, %v3410
      %v3417 = vpop.permute.xlu0 %3416
      %3420 = vset.pattern.permute.xlu0 0
      %3421 = vperm.xlu0 %3420, %v3411
      %v3422 = vpop.permute.xlu0 %3421
      %3425 = vset.pattern.permute.xlu0 0
      %3426 = vperm.xlu0 %3425, %v3412
      %v3427 = vpop.permute.xlu0 %3426
      %3430 = vset.pattern.permute.xlu0 0
      %3431 = vperm.xlu0 %3430, %v3413
      %v3432 = vpop.permute.xlu0 %3431
      %v3442 = vunpack.c.l.b16 %v3365
      %v3443 = vunpack.c.h.b16 %v3365
      %v3444 = vunpack.c.l.b16 %v3366
      %v3445 = vunpack.c.l.b16 %v3367
      %v3446 = vunpack.c.h.b16 %v3367
      %v3447 = vunpack.c.l.b16 %v3368
      %v3448 = vunpack.c.l.b16 %v3369
      %v3449 = vunpack.c.h.b16 %v3369
      %v3450 = vunpack.c.l.b16 %v3370
      %v3451 = vunpack.c.l.b16 %v3371
      %v3452 = vunpack.c.h.b16 %v3371
      %v3453 = vunpack.c.l.b16 %v3372
      %v3454 = vpack.c.b16 %v3445, %v3442
      %v3455 = vpack.c.b16 %v3446, %v3443
      %v3456 = vpack.c.b16 %v3447, %v3444
      %v3457 = vpack.c.b16 %v3451, %v3448
      %v3458 = vpack.c.b16 %v3452, %v3449
      %v3459 = vpack.c.b16 %v3453, %v3450
      %v3465 = vsel %vm374, %v3456, 0
      %v3468 = vsel %vm374, %v3459, 0
      %3470 = vmatprep.subr.bf16.mxu0 %v3374
      %3471 = vmatpush1.bf16.msra.mxu0 %v3373
      %3472 = vmatprep.subr.bf16.mxu0 %v3376
      %3473 = vmatpush1.bf16.msra.mxu0 %v3375
      %3474 = vmatprep.subr.bf16.mxu0 %v3378
      %3475 = vmatpush1.bf16.msra.mxu0 %v3377
      %3476 = vmatprep.subr.bf16.mxu0 %v3380
      %3477 = vmatpush1.bf16.msra.mxu0 %v3379
      %3478 = vmatprep.subr.bf16.mxu0 %v3382
      %3479 = vmatpush1.bf16.msra.mxu0 %v3381
      %3480 = vmatprep.subr.bf16.mxu0 %v3384
      %3481 = vmatpush1.bf16.msra.mxu0 %v3383
      %3482 = vmatprep.subr.bf16.mxu0 %v3386
      %3483 = vmatpush1.bf16.msra.mxu0 %v3385
      %3484 = vmatprep.subr.bf16.mxu0 %v3388
      %3485 = vmatpush1.bf16.msra.mxu0 %v3387
      %3486 = vmatprep.subr.bf16.mxu0 %v3390
      %3487 = vmatpush1.bf16.msra.mxu0 %v3389
      %3488 = vmatprep.subr.bf16.mxu0 %v3392
      %3489 = vmatpush1.bf16.msra.mxu0 %v3391
      %3490 = vmatprep.subr.bf16.mxu0 %v3394
      %3491 = vmatpush1.bf16.msra.mxu0 %v3393
      %3492 = vmatprep.subr.bf16.mxu0 %v3396
      %3493 = vmatpush1.bf16.msra.mxu0 %v3395
      %3494 = vmatprep.subr.bf16.mxu0 %v3398
      %3495 = vmatpush1.bf16.msra.mxu0 %v3397
      %3496 = vmatprep.subr.bf16.mxu0 %v3400
      %3497 = vmatpush1.bf16.msra.mxu0 %v3399
      %3498 = vmatprep.subr.bf16.mxu0 %v3402
      %3499 = vmatpush1.bf16.msra.mxu0 %v3401
      %3500 = vmatprep.subr.bf16.mxu0 %v3404
      %3501 = vmatpush1.bf16.msra.mxu0 %v3403
      %3502 = vmatprep.mubr.bf16.mxu0 %v3455
      %3503 = vmatmul.mubr.bf16.gmra.mrb[0].mxu0 %v3454
      %v3504 = vpop.f32.mrb[0].mxu0
      %v3505 = vadd.f32 %v3417, %v3504
      %v3506 = vpop.f32.mrb[0].mxu0
      %v3507 = vadd.f32 %v3417, %v3506
      %v3508 = vpop.f32.mrb[0].mxu0
      %v3509 = vadd.f32 %v3422, %v3508
      %v3510 = vpop.f32.mrb[0].mxu0
      %v3511 = vadd.f32 %v3422, %v3510
      %3512 = vmatprep.mubr.bf16.mxu0 %v3458
      %3513 = vmatmul.mubr.bf16.gmra.mrb[0].mxu0 %v3457
      %v3514 = vpop.f32.mrb[0].mxu0
      %v3515 = vadd.f32 %v3427, %v3514
      %v3516 = vpop.f32.mrb[0].mxu0
      %v3517 = vadd.f32 %v3427, %v3516
      %v3518 = vpop.f32.mrb[0].mxu0
      %v3519 = vadd.f32 %v3432, %v3518
      %v3520 = vpop.f32.mrb[0].mxu0
      %v3521 = vadd.f32 %v3432, %v3520
      %3522 = vdwg.mxu0
      %3523 = vmatprep.subr.bf16.mxu0 %v3406
      %3524 = vmatpush1.bf16.msra.mxu0 %v3405
      %3525 = vmatprep.subr.bf16.mxu0 %v3408
      %3526 = vmatpush1.bf16.msra.mxu0 %v3407
      %3527 = vmatprep.subr.bf16.mxu0 0
      %3528 = vmatpush1.bf16.msra.mxu0 0
      %3529 = vmatprep.subr.bf16.mxu0 0
      %3530 = vmatpush1.bf16.msra.mxu0 0
      %3531 = vmatprep.subr.bf16.mxu0 0
      %3532 = vmatpush1.bf16.msra.mxu0 0
      %3533 = vmatprep.subr.bf16.mxu0 0
      %3534 = vmatpush1.bf16.msra.mxu0 0
      %3535 = vmatprep.subr.bf16.mxu0 0
      %3536 = vmatpush1.bf16.msra.mxu0 0
      %3537 = vmatprep.subr.bf16.mxu0 0
      %3538 = vmatpush1.bf16.msra.mxu0 0
      %3539 = vmatprep.subr.bf16.mxu0 0
      %3540 = vmatpush1.bf16.msra.mxu0 0
      %3541 = vmatprep.subr.bf16.mxu0 0
      %3542 = vmatpush1.bf16.msra.mxu0 0
      %3543 = vmatprep.subr.bf16.mxu0 0
      %3544 = vmatpush1.bf16.msra.mxu0 0
      %3545 = vmatprep.subr.bf16.mxu0 0
      %3546 = vmatpush1.bf16.msra.mxu0 0
      %3547 = vmatprep.subr.bf16.mxu0 0
      %3548 = vmatpush1.bf16.msra.mxu0 0
      %3549 = vmatprep.subr.bf16.mxu0 0
      %3550 = vmatpush1.bf16.msra.mxu0 0
      %3551 = vmatprep.subr.bf16.mxu0 0
      %3552 = vmatpush1.bf16.msra.mxu0 0
      %3553 = vmatprep.subr.bf16.mxu0 0
      %3554 = vmatpush1.bf16.msra.mxu0 0
      %3555 = vmatprep.mubr.bf16.mxu0 0
      %3556 = vmatmul.mubr.bf16.gmra.mrb[0].mxu0 %v3465
      %v3557 = vpop.f32.mrb[0].mxu0
      %v3558 = vadd.f32 %v3505, %v3557
      %v3559 = vpop.f32.mrb[0].mxu0
      %v3560 = vadd.f32 %v3507, %v3559
      %v3561 = vpop.f32.mrb[0].mxu0
      %v3562 = vadd.f32 %v3509, %v3561
      %v3563 = vpop.f32.mrb[0].mxu0
      %v3564 = vadd.f32 %v3511, %v3563
      %3565 = vmatprep.mubr.bf16.mxu0 0
      %3566 = vmatmul.mubr.bf16.gmra.mrb[0].mxu0 %v3468
      %v3567 = vpop.f32.mrb[0].mxu0
      %v3568 = vadd.f32 %v3515, %v3567
      %v3569 = vpop.f32.mrb[0].mxu0
      %v3570 = vadd.f32 %v3517, %v3569
      %v3571 = vpop.f32.mrb[0].mxu0
      %v3572 = vadd.f32 %v3519, %v3571
      %v3573 = vpop.f32.mrb[0].mxu0
      %v3574 = vadd.f32 %v3521, %v3573
      %3575 = vdwg.mxu0
      %v3576 = vxor.u32 %v3558, 2147483648
      %v3577 = vxor.u32 %v3560, 2147483648
      %v3578 = vxor.u32 %v3562, 2147483648
      %v3579 = vxor.u32 %v3564, 2147483648
      %v3580 = vxor.u32 %v3568, 2147483648
      %v3581 = vxor.u32 %v3570, 2147483648
      %v3582 = vxor.u32 %v3572, 2147483648
      %v3583 = vxor.u32 %v3574, 2147483648
      %v3584 = vmul.f32 %v3576, 1.442695
      %v3585 = vpow.pop %v3584
      %v3586 = vmul.f32 %v3577, 1.442695
      %v3587 = vpow.pop %v3586
      %v3588 = vmul.f32 %v3578, 1.442695
      %v3589 = vpow.pop %v3588
      %v3590 = vmul.f32 %v3579, 1.442695
      %v3591 = vpow.pop %v3590
      %v3592 = vmul.f32 %v3580, 1.442695
      %v3593 = vpow.pop %v3592
      %v3594 = vmul.f32 %v3581, 1.442695
      %v3595 = vpow.pop %v3594
      %v3596 = vmul.f32 %v3582, 1.442695
      %v3597 = vpow.pop %v3596
      %v3598 = vmul.f32 %v3583, 1.442695
      %v3599 = vpow.pop %v3598
      %v3600 = vadd.f32 %v3585, 1.0
      %v3601 = vadd.f32 %v3587, 1.0
      %v3602 = vadd.f32 %v3589, 1.0
      %v3603 = vadd.f32 %v3591, 1.0
      %v3604 = vadd.f32 %v3593, 1.0
      %v3605 = vadd.f32 %v3595, 1.0
      %v3606 = vadd.f32 %v3597, 1.0
      %v3607 = vadd.f32 %v3599, 1.0
      %v3608 = vrcp.pop %v3600
      %v3609 = vmul.f32 1.0, %v3608
      %v3610 = vrcp.pop %v3601
      %v3611 = vmul.f32 1.0, %v3610
      %v3612 = vrcp.pop %v3602
      %v3613 = vmul.f32 1.0, %v3612
      %v3614 = vrcp.pop %v3603
      %v3615 = vmul.f32 1.0, %v3614
      %v3616 = vrcp.pop %v3604
      %v3617 = vmul.f32 1.0, %v3616
      %v3618 = vrcp.pop %v3605
      %v3619 = vmul.f32 1.0, %v3618
      %v3620 = vrcp.pop %v3606
      %v3621 = vmul.f32 1.0, %v3620
      %v3622 = vrcp.pop %v3607
      %v3623 = vmul.f32 1.0, %v3622
      %v3624 = vadd.f32 %v2732, %v3609
      %v3625 = vadd.f32 %v2733, %v3611
      %v3626 = vadd.f32 %v2734, %v3613
      %v3627 = vadd.f32 %v2735, %v3615
      %v3628 = vadd.f32 %v2736, %v3617
      %v3629 = vadd.f32 %v2737, %v3619
      %v3630 = vadd.f32 %v2738, %v3621
      %v3631 = vadd.f32 %v2739, %v3623
      %v3632 = vld [vmem:[%s332] sm:$0xff]
      %v3633 = vld [vmem:[%s332 + $0x8] sm:$0xff]
      %v3634 = vld [vmem:[%s332 + $0x10] sm:$0xff]
      %v3635 = vld [vmem:[%s332 + $0x18] sm:$0xff]
      %v3636 = vld [vmem:[%s332 + $0x20] sm:$0xff]
      %v3637 = vld [vmem:[%s332 + $0x28] sm:$0xff]
      %v3638 = vld [vmem:[%s332 + $0x30] sm:$0xff]
      %v3639 = vld [vmem:[%s332 + $0x38] sm:$0xff]
      %v3640 = vadd.f32 %v3624, %v919
      %v3641 = vadd.f32 %v3625, %v919
      %v3642 = vadd.f32 %v3626, %v921
      %v3643 = vadd.f32 %v3627, %v921
      %v3644 = vadd.f32 %v3628, %v923
      %v3645 = vadd.f32 %v3629, %v923
      %v3646 = vadd.f32 %v3630, %v925
      %v3647 = vadd.f32 %v3631, %v925
      %v3648 = vmul.f32 %v684, %v3640
      %v3649 = vmul.f32 %v685, %v3641
      %v3650 = vmul.f32 %v686, %v3642
      %v3651 = vmul.f32 %v687, %v3643
      %v3652 = vmul.f32 %v688, %v3644
      %v3653 = vmul.f32 %v689, %v3645
      %v3654 = vmul.f32 %v690, %v3646
      %v3655 = vmul.f32 %v691, %v3647
      %v3656 = vadd.f32 %v3632, %v3648
      %v3657 = vadd.f32 %v3633, %v3649
      %v3658 = vadd.f32 %v3634, %v3650
      %v3659 = vadd.f32 %v3635, %v3651
      %v3660 = vadd.f32 %v3636, %v3652
      %v3661 = vadd.f32 %v3637, %v3653
      %v3662 = vadd.f32 %v3638, %v3654
      %v3663 = vadd.f32 %v3639, %v3655
      %3664 = vst [vmem:[%s332] sm:$0xff] %v3656
      %3665 = vst [vmem:[%s332 + $0x8] sm:$0xff] %v3657
      %3666 = vst [vmem:[%s332 + $0x10] sm:$0xff] %v3658
      %3667 = vst [vmem:[%s332 + $0x18] sm:$0xff] %v3659
      %3668 = vst [vmem:[%s332 + $0x20] sm:$0xff] %v3660
      %3669 = vst [vmem:[%s332 + $0x28] sm:$0xff] %v3661
      %3670 = vst [vmem:[%s332 + $0x30] sm:$0xff] %v3662
      %3671 = vst [vmem:[%s332 + $0x38] sm:$0xff] %v3663
      %p3672 = scmp.lt.s32.totalorder %s20, 1
      %s3673 = scalar_select %p3672, %s20, 1
      %s3674 = smul.addr %s3673, 8
      %s3675 = smul.addr %s3674, 8
      %s3676 = scalar_lea.vmem %s9, %s3675
      // Predicated region
      $region57: #{multiscale_attention_cspa_forward.1} parent=55 // pred_check
        %p3677 = pneg %p232
      $region58: #{multiscale_attention_cspa_forward.1} parent=55 // pred_check_branch
        %3679 = sbr.rel (%p3677) target = $region60
      $region59: #{multiscale_attention_cspa_forward.1} parent=55 // pred_region
        _
      $region60: #{multiscale_attention_cspa_forward.1} parent=55 // pred_fallthru
        _
    $region56: #{multiscale_attention_cspa_forward.1} parent=5 // pred_fallthru
      _
    %p3680 = scmp.le.s32.totalorder 2, %s15
    // Predicated region
    $region61: #{multiscale_attention_cspa_forward.1} parent=5 // pred_check
      %p3681 = pneg %p3680
    $region62: #{multiscale_attention_cspa_forward.1} parent=5 // pred_check_branch
      %3683 = sbr.rel (%p3681) target = $region64
    $region63: #{multiscale_attention_cspa_forward.1} parent=5 // pred_region
      %s3684 = ssub.s32 %s15, 2
      // Predicated region
      $region65: #{multiscale_attention_cspa_forward.1} parent=63 // pred_check
        %p3685 = pneg %p238
      $region66: #{multiscale_attention_cspa_forward.1} parent=63 // pred_check_branch
        %3687 = sbr.rel (%p3685) target = $region68
      $region67: #{multiscale_attention_cspa_forward.1} parent=63 // pred_region
        %p3688 = scmp.lt.s32.totalorder %s21, 1
        %s3689 = scalar_select %p3688, %s21, 1
        %s3690 = smul.addr %s3689, 8
        %s3691 = smul.addr %s3690, 8
        %s3692 = scalar_lea.vmem %s9, %s3691
      $region68: #{multiscale_attention_cspa_forward.1} parent=63 // pred_fallthru
        _
    $region64: #{multiscale_attention_cspa_forward.1} parent=5 // pred_fallthru
      _
  $region6: #{multiscale_attention_cspa_forward.1} parent=0 // loop_footer
    %s19 = sadd.s32 1, %s15
  $region7: #{multiscale_attention_cspa_forward.1} parent=0 // loop_footer_branch
    %14 = sbr.rel target = $region3
  $region8: #{multiscale_attention_cspa_forward.1} parent=0 // loop_exit
    _

</llo_original>
